<compile_context>
chip_gen: v5e
topology: v5e:2x2
jax: 0.10.0
libtpu: 0.0.40
codegen_flags: <defaults>
</compile_context>

<pallas_src>
import functools

import jax
import jax.numpy as jnp
from jax.experimental import pallas as pl
from jax.experimental.pallas import tpu as pltpu

F32 = jnp.float32
BF16 = jnp.bfloat16
VMEM = pltpu.MemorySpace.VMEM
GATE_TILE = 128  # each GRU gate ([r|z|n]) occupies its own 128-lane tile


# ----------------------------- in-kernel helpers ---------------------------- #
def _dot(a, b):
    # bf16 MXU inputs (native on v5e/v6e/v7x), f32 accumulation. Elementwise
    # math stays f32 everywhere (v5e has no bf16 VPU/EUP).
    return jnp.dot(a.astype(BF16), b.astype(BF16),
                   preferred_element_type=jnp.float32)


def _relu(x):
    return jnp.maximum(x, 0.0)


def _leaky(x, slope=0.01):
    return jnp.where(x > 0, x, slope * x)


def _elu(x):
    # TODO(synk): torch ELU uses expm1; exp(x)-1 keeps the Mosaic lowering
    # trivially supported (precision delta only near x == 0).
    return jnp.where(x > 0, x, jnp.exp(x) - 1.0)


def _sigmoid(x):
    # Exact divide (not approx reciprocal): GRU gate error would otherwise
    # compound over num_layers + num_timesteps updates.
    return 1.0 / (1.0 + jnp.exp(-x))


def _segment_attn_aggregate(alpha, msg, Gdst, GdstT):
    """Destination-grouped softmax fused into the aggregation matmul.

    alpha: (E, 1) f32 edge scores; msg: (E, H) f32 edge messages;
    Gdst: (E, Nd) one-hot destination; GdstT: (Nd, E).
    Returns (Nd, H) = sum_j softmax_dst(alpha)_j * msg_j   (PyG `softmax` + add).

    The per-destination max is taken on the (Nd, E) layout (lane reduce, no
    (E, Nd) masked temp + sublane reduce) and gathered back to edges with a
    width-1 MXU matmul; the softmax denominator rides along as one extra lane
    column of the aggregation matmul (free: H already pads to 128 lanes), so
    the divide happens on Nd rows instead of E rows.
    """
    hdim = msg.shape[-1]
    neg = jnp.float32(-1e30)
    alpha_row = jnp.transpose(alpha)                              # (1, E)
    gmax = jnp.max(jnp.where(GdstT > 0.5, alpha_row, neg),
                   axis=-1, keepdims=True)                        # (Nd, 1)
    mmax = _dot(Gdst, gmax)                                       # (E, 1) gather
    ex = jnp.exp(alpha - mmax)                                    # (E, 1), <= ~1
    agg = _dot(GdstT, jnp.concatenate([msg * ex, ex], axis=-1))   # (Nd, H+1)
    denom = agg[:, hdim:hdim + 1] + 1e-16
    return agg[:, :hdim] * pl.reciprocal(denom, approx=True)


def _gru_relu(x, h, wi, wh, bi, bh, hdim):
    """torch.nn.GRUCell (packed [r|z|n] gates, one 128-lane tile per gate)
    followed by relu. `wi/wh/bi/bh` are arrays (already loaded), not refs."""
    gi = _dot(x, wi) + bi                                         # (rows, 3*128)
    gh = _dot(h, wh) + bh

    def gate(a, k):
        return a[:, k * GATE_TILE:k * GATE_TILE + hdim]           # vreg-aligned

    r = _sigmoid(gate(gi, 0) + gate(gh, 0))
    z = _sigmoid(gate(gi, 1) + gate(gh, 1))
    n = jnp.tanh(gate(gi, 2) + r * gate(gh, 2))
    return _relu((1.0 - z) * n + z * h)


# ------------------------------ fused kernel -------------------------------- #
def _combined_nn_kernel(desc_ref, x_ref, ea_ref, gsrc_ref, gdst_ref, gdstT_ref,
                        gbatch_ref, gbatchT_ref, mlp_ref, gat_ref, gru_ref,
                        o_ref, *, layouts, hidden_dim, num_atom_layers,
                        num_timesteps):
    mlp_l, gat_l, gru_l = layouts
    H = hidden_dim

    def M(name):
        off, r, c = mlp_l[name]
        return mlp_ref[off:off + r, 0:c]

    def G(name):
        off, r, c = gat_l[name]
        return gat_ref[off:off + r, 0:c]

    def R(name):
        off, r, c = gru_l[name]
        return gru_ref[off:off + r, 0:c]

    # Graph-structure one-hot operators (bf16: 0/1 exact, halves DMA bytes).
    gsrc = gsrc_ref[...]
    gdst = gdst_ref[...]
    gdstT = gdstT_ref[...]
    gbatch = gbatch_ref[...]
    gbatchT = gbatchT_ref[...]

    # --- non-graphical branch: GCNLinear (4 x Linear + ReLU) ----------------
    ng = _relu(_dot(desc_ref[...], M("w1")) + M("b1"))
    ng = _relu(_dot(ng, M("w2")) + M("b2"))
    ng = _relu(_dot(ng, M("w3")) + M("b3"))
    ng = _relu(_dot(ng, M("w4")) + M("b4"))                       # (B, C)

    # --- graphical branch: AttentiveFP (eval mode; dropout = identity) ------
    xh = _leaky(_dot(x_ref[...], G("lin1_w")) + G("lin1_b"))      # (N, H)

    # GATEConv (+ fused elu), then GRU + relu.
    xj = _dot(gsrc, xh)                                           # (E, H) x[src]
    t = _leaky(_dot(xj, G("gate_w1x")) + _dot(ea_ref[...], G("gate_w1e")))
    a_i = _dot(xh, G("gate_attr"))                                # (N, 1)
    alpha = _leaky(_dot(t, G("gate_attl")) + _dot(gdst, a_i))     # (E, 1)
    msg = _dot(xj, G("gate_w2"))                                  # (E, H)
    h = _elu(_segment_attn_aggregate(alpha, msg, gdst, gdstT) + G("gate_b"))
    xh = _gru_relu(h, xh, R("gru0_wi"), R("gru0_wh"),
                   R("gru0_bi"), R("gru0_bh"), H)

    # Atom-level GATConv layers (+ fused elu); src == dst share the projection.
    # Loops are trace-time unrolled (num_layers/num_timesteps are tiny here);
    # TODO(synk): switch to lax.fori_loop if they grow beyond ~4.
    for l in range(num_atom_layers):
        cw, c_att, c_b = G(f"atom{l}_w"), G(f"atom{l}_att"), G(f"atom{l}_b")
        wi, wh = R(f"atom{l}_wi"), R(f"atom{l}_wh")
        bi, bh = R(f"atom{l}_bi"), R(f"atom{l}_bh")
        xs = _dot(xh, cw)                                         # (N, H)
        sc = _dot(xs, c_att)                                      # (N, 2) [src|dst]
        alpha = _leaky(_dot(gsrc, sc[:, 0:1]) + _dot(gdst, sc[:, 1:2]))  # (E, 1)
        xj = _dot(gsrc, xs)                                       # (E, H)
        h = _elu(_segment_attn_aggregate(alpha, xj, gdst, gdstT) + c_b)
        xh = _gru_relu(h, xh, wi, wh, bi, bh, H)

    # global_add_pool + relu
    out = _relu(_dot(gbatchT, xh))                                # (B, H)

    # Molecule-level GATConv timesteps; Gsrc_mol == identity, so node-side
    # projection/score are hoisted out of the loop (loop-invariant locals).
    mw, m_att, m_b = G("mol_w"), G("mol_att"), G("mol_b")
    m_wi, m_wh = R("mol_wi"), R("mol_wh")
    m_bi, m_bh = R("mol_bi"), R("mol_bh")
    xs = _dot(xh, mw)                                             # (N, H)
    a_s = _dot(xs, m_att)[:, 0:1]                                 # (N, 1)
    for _ in range(num_timesteps):
        xd = _dot(out, mw)                                        # (B, H)
        a_d = _dot(xd, m_att)[:, 1:2]                             # (B, 1)
        alpha = _leaky(a_s + _dot(gbatch, a_d))                   # (N, 1)
        h = _elu(_segment_attn_aggregate(alpha, xs, gbatch, gbatchT) + m_b)
        out = _gru_relu(h, out, m_wi, m_wh, m_bi, m_bh, H)

    graphical = _dot(out, G("lin2_w")) + G("lin2_b")              # (B, C)

    # fusion fc(concat(ng, graphical)): weight pre-split -> no in-kernel concat
    o_ref[...] = _dot(ng, G("fc_ng")) + _dot(graphical, G("fc_g")) + G("fc_b")


# --------------------------- parameter slab packing ------------------------- #
def _round_up(n, m):
    return ((n + m - 1) // m) * m


class _SlabPacker:
    """Packs many small parameter matrices into one lane-padded f32 slab.

    Every entry starts at a sublane-aligned (multiple-of-8) row offset so the
    in-kernel static slices are cheap; the slab is a single prologue DMA.
    """

    def __init__(self, width):
        self.width = width
        self.rows = 0
        self.entries = []      # (array, row_offset)
        self.layout = {}       # name -> (row_offset, n_rows, n_cols)

    def add(self, name, arr):
        arr = jnp.asarray(arr, F32)
        r, c = arr.shape
        assert c <= self.width, (name, arr.shape, self.width)
        self.layout[name] = (self.rows, r, c)
        self.entries.append((arr, self.rows))
        self.rows += _round_up(r, 8)

    def pack(self):
        slab = jnp.zeros((_round_up(max(self.rows, 8), 8), self.width), F32)
        for arr, off in self.entries:
            slab = slab.at[off:off + arr.shape[0], :arr.shape[1]].set(arr)
        return slab, self.layout


class _KeyGen:
    def __init__(self, key):
        self.key = key

    def __call__(self):
        self.key, sub = jax.random.split(self.key)
        return sub


def _mk(kg, shape, scale=0.1):
    return jax.random.normal(kg(), shape, F32) * scale


def _gate_tiles(kg, rows, h_dim):
    """GRU parameters, gate order [r|z|n]; each gate in its own 128-lane tile."""
    m = jnp.zeros((rows, 3 * GATE_TILE), F32)
    for k in range(3):
        m = m.at[:, k * GATE_TILE:k * GATE_TILE + h_dim].set(_mk(kg, (rows, h_dim)))
    return m


def init_params(key, input_dim, hidden_dim, num_classes, graph_input_dim,
                edge_dim, num_layers):
    """Random params packed into three slabs: (slabs, layouts)."""
    kg = _KeyGen(key)
    H, C = hidden_dim, num_classes

    mlp = _SlabPacker(max(256, H, C))
    mlp.add("w1", _mk(kg, (input_dim, H)));  mlp.add("b1", _mk(kg, (1, H)))
    mlp.add("w2", _mk(kg, (H, 256)));        mlp.add("b2", _mk(kg, (1, 256)))
    mlp.add("w3", _mk(kg, (256, 64)));       mlp.add("b3", _mk(kg, (1, 64)))
    mlp.add("w4", _mk(kg, (64, C)));         mlp.add("b4", _mk(kg, (1, C)))

    gat = _SlabPacker(max(H, C, 2))
    gat.add("lin1_w", _mk(kg, (graph_input_dim, H)))
    gat.add("lin1_b", _mk(kg, (1, H)))
    gat.add("gate_w1x", _mk(kg, (H, H)))
    gat.add("gate_w1e", _mk(kg, (edge_dim, H)))
    gat.add("gate_w2", _mk(kg, (H, H)))
    gat.add("gate_attl", _mk(kg, (H, 1)))     # attention vectors as columns ->
    gat.add("gate_attr", _mk(kg, (H, 1)))     # scores are MXU matmuls, not XLU
    gat.add("gate_b", _mk(kg, (1, H)))
    for l in range(num_layers - 1):
        gat.add(f"atom{l}_w", _mk(kg, (H, H)))
        gat.add(f"atom{l}_att", _mk(kg, (H, 2)))   # [att_src | att_dst]
        gat.add(f"atom{l}_b", _mk(kg, (1, H)))
    gat.add("mol_w", _mk(kg, (H, H)))
    gat.add("mol_att", _mk(kg, (H, 2)))
    gat.add("mol_b", _mk(kg, (1, H)))
    gat.add("lin2_w", _mk(kg, (H, C)))
    gat.add("lin2_b", _mk(kg, (1, C)))
    gat.add("fc_ng", _mk(kg, (C, C)))          # fc weight pre-split: no concat
    gat.add("fc_g", _mk(kg, (C, C)))
    gat.add("fc_b", _mk(kg, (1, C)))

    gru = _SlabPacker(3 * GATE_TILE)

    def add_gru(prefix, in_dim):
        gru.add(prefix + "_wi", _gate_tiles(kg, in_dim, H))
        gru.add(prefix + "_wh", _gate_tiles(kg, H, H))
        gru.add(prefix + "_bi", _gate_tiles(kg, 1, H))
        gru.add(prefix + "_bh", _gate_tiles(kg, 1, H))

    add_gru("gru0", H)
    for l in range(num_layers - 1):
        add_gru(f"atom{l}", H)
    add_gru("mol", H)

    slabs, layouts = [], []
    for packer in (mlp, gat, gru):
        s, lo = packer.pack()
        slabs.append(s)
        layouts.append(lo)
    return tuple(slabs), tuple(layouts)


# ------------------------------- forward pass ------------------------------- #
def build_graph_structure(edge_index, batch, n_nodes, num_graphs):
    """One-hot gather/scatter operators, built once per graph and reused.

    Stored in bf16 (0/1 exact) so the MXU gather/scatter matmuls need no cast
    and the DMA bytes halve.
    """
    src, dst = edge_index[0], edge_index[1]
    Gsrc = jax.nn.one_hot(src, n_nodes, dtype=BF16)               # (E, N)
    Gdst = jax.nn.one_hot(dst, n_nodes, dtype=BF16)               # (E, N)
    Gbatch = jax.nn.one_hot(batch, num_graphs, dtype=BF16)        # (N, B)
    return Gsrc, Gdst, jnp.transpose(Gdst), Gbatch, jnp.transpose(Gbatch)


def combined_nn_forward(slabs, layouts, x, descriptors, edge_attr, graph_struct,
                        hidden_dim, num_layers, num_timesteps=2):
    Gsrc, Gdst, GdstT, Gbatch, GbatchT = graph_struct
    mlp_slab, gat_slab, gru_slab = slabs
    inputs = [descriptors, x, edge_attr, Gsrc, Gdst, GdstT, Gbatch, GbatchT,
              mlp_slab, gat_slab, gru_slab]

    B = descriptors.shape[0]
    C = layouts[1]["fc_b"][2]
    kernel = functools.partial(_combined_nn_kernel,
                               layouts=layouts,
                               hidden_dim=hidden_dim,
                               num_atom_layers=num_layers - 1,
                               num_timesteps=num_timesteps)
    return pl.pallas_call(
        kernel,
        out_shape=jax.ShapeDtypeStruct((B, C), F32),
        in_specs=[pl.BlockSpec(memory_space=VMEM)] * len(inputs),
        out_specs=pl.BlockSpec(memory_space=VMEM),
    )(*inputs)


# ----------------------------------- main ----------------------------------- #
if __name__ == "__main__":
    input_dim, hidden_dim, num_classes = 16, 32, 4
    graph_input_dim, edge_dim, num_layers = 8, 6, 2
    num_timesteps = 2
    num_graphs, nodes_per_graph = 2, 5
    n_nodes = num_graphs * nodes_per_graph

    key = jax.random.PRNGKey(0)
    kparam, kx, kdesc, kedge = jax.random.split(key, 4)

    slabs, layouts = init_params(kparam, input_dim, hidden_dim, num_classes,
                                 graph_input_dim, edge_dim, num_layers)

    x = jax.random.normal(kx, (n_nodes, graph_input_dim), F32)
    descriptors = jax.random.normal(kdesc, (num_graphs, input_dim), F32)

    # Bidirectional ring edges within each graph.
    src, dst = [], []
    for g in range(num_graphs):
        base = g * nodes_per_graph
        for i in range(nodes_per_graph):
            a = base + i
            b = base + (i + 1) % nodes_per_graph
            src += [a, b]
            dst += [b, a]
    edge_index = jnp.array([src, dst], dtype=jnp.int32)            # (2, 20)
    edge_attr = jax.random.normal(kedge, (edge_index.shape[1], edge_dim), F32)
    batch = jnp.array(sum(([g] * nodes_per_graph for g in range(num_graphs)), []),
                      dtype=jnp.int32)

    graph_struct = build_graph_structure(edge_index, batch, n_nodes, num_graphs)

    out = combined_nn_forward(slabs, layouts, x, descriptors, edge_attr,
                              graph_struct, hidden_dim=hidden_dim,
                              num_layers=num_layers,
                              num_timesteps=num_timesteps)
    out = jax.block_until_ready(out)
    assert out.shape == (num_graphs, num_classes)
    assert bool(jnp.all(jnp.isfinite(out)))
    print("KERNEL_OK")
</pallas_src>

<mosaic_0001>
module attributes {stable_mosaic.version = 11 : i64} {
  func.func @_combined_nn_kernel(%arg0: memref<2x16xf32, #tpu.memory_space<vmem>>, %arg1: memref<10x8xf32, #tpu.memory_space<vmem>>, %arg2: memref<20x6xf32, #tpu.memory_space<vmem>>, %arg3: memref<20x10xbf16, #tpu.memory_space<vmem>>, %arg4: memref<20x10xbf16, #tpu.memory_space<vmem>>, %arg5: memref<10x20xbf16, #tpu.memory_space<vmem>>, %arg6: memref<10x2xbf16, #tpu.memory_space<vmem>>, %arg7: memref<2x10xbf16, #tpu.memory_space<vmem>>, %arg8: memref<400x256xf32, #tpu.memory_space<vmem>>, %arg9: memref<368x32xf32, #tpu.memory_space<vmem>>, %arg10: memref<240x384xf32, #tpu.memory_space<vmem>>, %arg11: memref<2x4xf32, #tpu.memory_space<vmem>>) attributes {dimension_semantics = [], scalar_prefetch = 0 : i64, scratch_operands = 0 : i64, tpu.core_type = #tpu.core_type<tc>} {
    %c0 = arith.constant 0 : index
    %c0_0 = arith.constant 0 : index
    %0 = vector.load %arg3[%c0, %c0_0] : memref<20x10xbf16, #tpu.memory_space<vmem>>, vector<20x10xbf16>
    %c0_1 = arith.constant 0 : index
    %c0_2 = arith.constant 0 : index
    %1 = vector.load %arg4[%c0_1, %c0_2] : memref<20x10xbf16, #tpu.memory_space<vmem>>, vector<20x10xbf16>
    %c0_3 = arith.constant 0 : index
    %c0_4 = arith.constant 0 : index
    %2 = vector.load %arg5[%c0_3, %c0_4] : memref<10x20xbf16, #tpu.memory_space<vmem>>, vector<10x20xbf16>
    %c0_5 = arith.constant 0 : index
    %c0_6 = arith.constant 0 : index
    %3 = vector.load %arg6[%c0_5, %c0_6] : memref<10x2xbf16, #tpu.memory_space<vmem>>, vector<10x2xbf16>
    %c0_7 = arith.constant 0 : index
    %c0_8 = arith.constant 0 : index
    %4 = vector.load %arg7[%c0_7, %c0_8] : memref<2x10xbf16, #tpu.memory_space<vmem>>, vector<2x10xbf16>
    %c0_9 = arith.constant 0 : index
    %c0_10 = arith.constant 0 : index
    %5 = vector.load %arg0[%c0_9, %c0_10] : memref<2x16xf32, #tpu.memory_space<vmem>>, vector<2x16xf32>
    %c0_11 = arith.constant 0 : index
    %c0_12 = arith.constant 0 : index
    %6 = vector.load %arg8[%c0_11, %c0_12] : memref<400x256xf32, #tpu.memory_space<vmem>>, vector<16x32xf32>
    %7 = arith.truncf %5 : vector<2x16xf32> to vector<2x16xbf16>
    %8 = arith.truncf %6 : vector<16x32xf32> to vector<16x32xbf16>
    %cst = arith.constant dense<0.000000e+00> : vector<2x32xf32>
    %9 = tpu.matmul %7, %8, %cst {dimension_numbers = #tpu.dot_dimension_numbers<[1], [0], [0], [1], [0, 0, 1, 1], [], []>} : vector<2x16xbf16>, vector<16x32xbf16>, vector<2x32xf32> -> vector<2x32xf32>
    %c16 = arith.constant 16 : index
    %c0_13 = arith.constant 0 : index
    %10 = vector.load %arg8[%c16, %c0_13] : memref<400x256xf32, #tpu.memory_space<vmem>>, vector<1x32xf32>
    %11 = vector.broadcast %10 : vector<1x32xf32> to vector<2x32xf32>
    %12 = arith.addf %9, %11 : vector<2x32xf32>
    %cst_14 = arith.constant 0.000000e+00 : f32
    %13 = vector.broadcast %cst_14 : f32 to vector<2x32xf32>
    %14 = arith.maximumf %12, %13 : vector<2x32xf32>
    %c24 = arith.constant 24 : index
    %c0_15 = arith.constant 0 : index
    %15 = vector.load %arg8[%c24, %c0_15] : memref<400x256xf32, #tpu.memory_space<vmem>>, vector<32x256xf32>
    %16 = arith.truncf %14 : vector<2x32xf32> to vector<2x32xbf16>
    %17 = arith.truncf %15 : vector<32x256xf32> to vector<32x256xbf16>
    %cst_16 = arith.constant dense<0.000000e+00> : vector<2x256xf32>
    %18 = tpu.matmul %16, %17, %cst_16 {dimension_numbers = #tpu.dot_dimension_numbers<[1], [0], [0], [1], [0, 0, 1, 1], [], []>} : vector<2x32xbf16>, vector<32x256xbf16>, vector<2x256xf32> -> vector<2x256xf32>
    %c56 = arith.constant 56 : index
    %c0_17 = arith.constant 0 : index
    %19 = vector.load %arg8[%c56, %c0_17] : memref<400x256xf32, #tpu.memory_space<vmem>>, vector<1x256xf32>
    %20 = vector.broadcast %19 : vector<1x256xf32> to vector<2x256xf32>
    %21 = arith.addf %18, %20 : vector<2x256xf32>
    %cst_18 = arith.constant 0.000000e+00 : f32
    %22 = vector.broadcast %cst_18 : f32 to vector<2x256xf32>
    %23 = arith.maximumf %21, %22 : vector<2x256xf32>
    %c64 = arith.constant 64 : index
    %c0_19 = arith.constant 0 : index
    %24 = vector.load %arg8[%c64, %c0_19] : memref<400x256xf32, #tpu.memory_space<vmem>>, vector<256x64xf32>
    %25 = arith.truncf %23 : vector<2x256xf32> to vector<2x256xbf16>
    %26 = arith.truncf %24 : vector<256x64xf32> to vector<256x64xbf16>
    %cst_20 = arith.constant dense<0.000000e+00> : vector<2x64xf32>
    %27 = tpu.matmul %25, %26, %cst_20 {dimension_numbers = #tpu.dot_dimension_numbers<[1], [0], [0], [1], [0, 0, 1, 1], [], []>} : vector<2x256xbf16>, vector<256x64xbf16>, vector<2x64xf32> -> vector<2x64xf32>
    %c320 = arith.constant 320 : index
    %c0_21 = arith.constant 0 : index
    %28 = vector.load %arg8[%c320, %c0_21] : memref<400x256xf32, #tpu.memory_space<vmem>>, vector<1x64xf32>
    %29 = vector.broadcast %28 : vector<1x64xf32> to vector<2x64xf32>
    %30 = arith.addf %27, %29 : vector<2x64xf32>
    %cst_22 = arith.constant 0.000000e+00 : f32
    %31 = vector.broadcast %cst_22 : f32 to vector<2x64xf32>
    %32 = arith.maximumf %30, %31 : vector<2x64xf32>
    %c328 = arith.constant 328 : index
    %c0_23 = arith.constant 0 : index
    %33 = vector.load %arg8[%c328, %c0_23] : memref<400x256xf32, #tpu.memory_space<vmem>>, vector<64x4xf32>
    %34 = arith.truncf %32 : vector<2x64xf32> to vector<2x64xbf16>
    %35 = arith.truncf %33 : vector<64x4xf32> to vector<64x4xbf16>
    %cst_24 = arith.constant dense<0.000000e+00> : vector<2x4xf32>
    %36 = tpu.matmul %34, %35, %cst_24 {dimension_numbers = #tpu.dot_dimension_numbers<[1], [0], [0], [1], [0, 0, 1, 1], [], []>} : vector<2x64xbf16>, vector<64x4xbf16>, vector<2x4xf32> -> vector<2x4xf32>
    %c392 = arith.constant 392 : index
    %c0_25 = arith.constant 0 : index
    %37 = vector.load %arg8[%c392, %c0_25] : memref<400x256xf32, #tpu.memory_space<vmem>>, vector<1x4xf32>
    %38 = vector.broadcast %37 : vector<1x4xf32> to vector<2x4xf32>
    %39 = arith.addf %36, %38 : vector<2x4xf32>
    %cst_26 = arith.constant 0.000000e+00 : f32
    %40 = vector.broadcast %cst_26 : f32 to vector<2x4xf32>
    %41 = arith.maximumf %39, %40 : vector<2x4xf32>
    %c0_27 = arith.constant 0 : index
    %c0_28 = arith.constant 0 : index
    %42 = vector.load %arg1[%c0_27, %c0_28] : memref<10x8xf32, #tpu.memory_space<vmem>>, vector<10x8xf32>
    %c0_29 = arith.constant 0 : index
    %c0_30 = arith.constant 0 : index
    %43 = vector.load %arg9[%c0_29, %c0_30] : memref<368x32xf32, #tpu.memory_space<vmem>>, vector<8x32xf32>
    %44 = arith.truncf %42 : vector<10x8xf32> to vector<10x8xbf16>
    %45 = arith.truncf %43 : vector<8x32xf32> to vector<8x32xbf16>
    %cst_31 = arith.constant dense<0.000000e+00> : vector<10x32xf32>
    %46 = tpu.matmul %44, %45, %cst_31 {dimension_numbers = #tpu.dot_dimension_numbers<[1], [0], [0], [1], [0, 0, 1, 1], [], []>} : vector<10x8xbf16>, vector<8x32xbf16>, vector<10x32xf32> -> vector<10x32xf32>
    %c8 = arith.constant 8 : index
    %c0_32 = arith.constant 0 : index
    %47 = vector.load %arg9[%c8, %c0_32] : memref<368x32xf32, #tpu.memory_space<vmem>>, vector<1x32xf32>
    %48 = vector.broadcast %47 : vector<1x32xf32> to vector<10x32xf32>
    %49 = arith.addf %46, %48 : vector<10x32xf32>
    %cst_33 = arith.constant 0.000000e+00 : f32
    %50 = vector.broadcast %cst_33 : f32 to vector<10x32xf32>
    %51 = arith.cmpf ogt, %49, %50 : vector<10x32xf32>
    %cst_34 = arith.constant 0.00999999977 : f32
    %52 = vector.broadcast %cst_34 : f32 to vector<10x32xf32>
    %53 = arith.mulf %52, %49 : vector<10x32xf32>
    %54 = arith.select %51, %49, %53 : vector<10x32xi1>, vector<10x32xf32>
    %55 = arith.truncf %54 : vector<10x32xf32> to vector<10x32xbf16>
    %cst_35 = arith.constant dense<0.000000e+00> : vector<20x32xf32>
    %56 = tpu.matmul %0, %55, %cst_35 {dimension_numbers = #tpu.dot_dimension_numbers<[1], [0], [0], [1], [0, 0, 1, 1], [], []>} : vector<20x10xbf16>, vector<10x32xbf16>, vector<20x32xf32> -> vector<20x32xf32>
    %c16_36 = arith.constant 16 : index
    %c0_37 = arith.constant 0 : index
    %57 = vector.load %arg9[%c16_36, %c0_37] : memref<368x32xf32, #tpu.memory_space<vmem>>, vector<32x32xf32>
    %58 = arith.truncf %56 : vector<20x32xf32> to vector<20x32xbf16>
    %59 = arith.truncf %57 : vector<32x32xf32> to vector<32x32xbf16>
    %cst_38 = arith.constant dense<0.000000e+00> : vector<20x32xf32>
    %60 = tpu.matmul %58, %59, %cst_38 {dimension_numbers = #tpu.dot_dimension_numbers<[1], [0], [0], [1], [0, 0, 1, 1], [], []>} : vector<20x32xbf16>, vector<32x32xbf16>, vector<20x32xf32> -> vector<20x32xf32>
    %c0_39 = arith.constant 0 : index
    %c0_40 = arith.constant 0 : index
    %61 = vector.load %arg2[%c0_39, %c0_40] : memref<20x6xf32, #tpu.memory_space<vmem>>, vector<20x6xf32>
    %c48 = arith.constant 48 : index
    %c0_41 = arith.constant 0 : index
    %62 = vector.load %arg9[%c48, %c0_41] : memref<368x32xf32, #tpu.memory_space<vmem>>, vector<6x32xf32>
    %63 = arith.truncf %61 : vector<20x6xf32> to vector<20x6xbf16>
    %64 = arith.truncf %62 : vector<6x32xf32> to vector<6x32xbf16>
    %cst_42 = arith.constant dense<0.000000e+00> : vector<20x32xf32>
    %65 = tpu.matmul %63, %64, %cst_42 {dimension_numbers = #tpu.dot_dimension_numbers<[1], [0], [0], [1], [0, 0, 1, 1], [], []>} : vector<20x6xbf16>, vector<6x32xbf16>, vector<20x32xf32> -> vector<20x32xf32>
    %66 = arith.addf %60, %65 : vector<20x32xf32>
    %cst_43 = arith.constant 0.000000e+00 : f32
    %67 = vector.broadcast %cst_43 : f32 to vector<20x32xf32>
    %68 = arith.cmpf ogt, %66, %67 : vector<20x32xf32>
    %cst_44 = arith.constant 0.00999999977 : f32
    %69 = vector.broadcast %cst_44 : f32 to vector<20x32xf32>
    %70 = arith.mulf %69, %66 : vector<20x32xf32>
    %71 = arith.select %68, %66, %70 : vector<20x32xi1>, vector<20x32xf32>
    %c120 = arith.constant 120 : index
    %c0_45 = arith.constant 0 : index
    %72 = vector.load %arg9[%c120, %c0_45] : memref<368x32xf32, #tpu.memory_space<vmem>>, vector<32x1xf32>
    %73 = arith.truncf %54 : vector<10x32xf32> to vector<10x32xbf16>
    %74 = arith.truncf %72 : vector<32x1xf32> to vector<32x1xbf16>
    %cst_46 = arith.constant dense<0.000000e+00> : vector<10x1xf32>
    %75 = tpu.matmul %73, %74, %cst_46 {dimension_numbers = #tpu.dot_dimension_numbers<[1], [0], [0], [1], [0, 0, 1, 1], [], []>} : vector<10x32xbf16>, vector<32x1xbf16>, vector<10x1xf32> -> vector<10x1xf32>
    %c88 = arith.constant 88 : index
    %c0_47 = arith.constant 0 : index
    %76 = vector.load %arg9[%c88, %c0_47] : memref<368x32xf32, #tpu.memory_space<vmem>>, vector<32x1xf32>
    %77 = arith.truncf %71 : vector<20x32xf32> to vector<20x32xbf16>
    %78 = arith.truncf %76 : vector<32x1xf32> to vector<32x1xbf16>
    %cst_48 = arith.constant dense<0.000000e+00> : vector<20x1xf32>
    %79 = tpu.matmul %77, %78, %cst_48 {dimension_numbers = #tpu.dot_dimension_numbers<[1], [0], [0], [1], [0, 0, 1, 1], [], []>} : vector<20x32xbf16>, vector<32x1xbf16>, vector<20x1xf32> -> vector<20x1xf32>
    %80 = arith.truncf %75 : vector<10x1xf32> to vector<10x1xbf16>
    %cst_49 = arith.constant dense<0.000000e+00> : vector<20x1xf32>
    %81 = tpu.matmul %1, %80, %cst_49 {dimension_numbers = #tpu.dot_dimension_numbers<[1], [0], [0], [1], [0, 0, 1, 1], [], []>} : vector<20x10xbf16>, vector<10x1xbf16>, vector<20x1xf32> -> vector<20x1xf32>
    %82 = arith.addf %79, %81 : vector<20x1xf32>
    %cst_50 = arith.constant 0.000000e+00 : f32
    %83 = vector.broadcast %cst_50 : f32 to vector<20x1xf32>
    %84 = arith.cmpf ogt, %82, %83 : vector<20x1xf32>
    %cst_51 = arith.constant 0.00999999977 : f32
    %85 = vector.broadcast %cst_51 : f32 to vector<20x1xf32>
    %86 = arith.mulf %85, %82 : vector<20x1xf32>
    %87 = arith.select %84, %82, %86 : vector<20x1xi1>, vector<20x1xf32>
    %c56_52 = arith.constant 56 : index
    %c0_53 = arith.constant 0 : index
    %88 = vector.load %arg9[%c56_52, %c0_53] : memref<368x32xf32, #tpu.memory_space<vmem>>, vector<32x32xf32>
    %89 = arith.truncf %56 : vector<20x32xf32> to vector<20x32xbf16>
    %90 = arith.truncf %88 : vector<32x32xf32> to vector<32x32xbf16>
    %cst_54 = arith.constant dense<0.000000e+00> : vector<20x32xf32>
    %91 = tpu.matmul %89, %90, %cst_54 {dimension_numbers = #tpu.dot_dimension_numbers<[1], [0], [0], [1], [0, 0, 1, 1], [], []>} : vector<20x32xbf16>, vector<32x32xbf16>, vector<20x32xf32> -> vector<20x32xf32>
    %92 = tpu.transpose %87, [1, 0] : vector<20x1xf32> -> vector<1x20xf32>
    %cst_55 = arith.constant 5.000000e-01 : bf16
    %93 = vector.broadcast %cst_55 : bf16 to vector<10x20xbf16>
    %94 = arith.cmpf ogt, %2, %93 : vector<10x20xbf16>
    %cst_56 = arith.constant -1.000000e+30 : f32
    %95 = vector.shape_cast %92 : vector<1x20xf32> to vector<1x20xf32>
    %96 = vector.broadcast %95 : vector<1x20xf32> to vector<10x20xf32>
    %97 = vector.broadcast %cst_56 : f32 to vector<10x20xf32>
    %98 = arith.select %94, %96, %97 : vector<10x20xi1>, vector<10x20xf32>
    %cst_57 = arith.constant dense<0xFF800000> : vector<10xf32>
    %99 = vector.multi_reduction <maximumf>, %98, %cst_57 [1] : vector<10x20xf32> to vector<10xf32>
    %100 = vector.shape_cast %99 : vector<10xf32> to vector<10x1xf32>
    %101 = arith.truncf %100 : vector<10x1xf32> to vector<10x1xbf16>
    %cst_58 = arith.constant dense<0.000000e+00> : vector<20x1xf32>
    %102 = tpu.matmul %1, %101, %cst_58 {dimension_numbers = #tpu.dot_dimension_numbers<[1], [0], [0], [1], [0, 0, 1, 1], [], []>} : vector<20x10xbf16>, vector<10x1xbf16>, vector<20x1xf32> -> vector<20x1xf32>
    %103 = arith.subf %87, %102 : vector<20x1xf32>
    %104 = math.exp %103 : vector<20x1xf32>
    %105 = vector.broadcast %104 : vector<20x1xf32> to vector<20x32xf32>
    %106 = arith.mulf %91, %105 : vector<20x32xf32>
    %107 = tpu.concatenate %106, %104 in 1 : vector<20x32xf32>, vector<20x1xf32> -> vector<20x33xf32>
    %108 = arith.truncf %107 : vector<20x33xf32> to vector<20x33xbf16>
    %cst_59 = arith.constant dense<0.000000e+00> : vector<10x33xf32>
    %109 = tpu.matmul %2, %108, %cst_59 {dimension_numbers = #tpu.dot_dimension_numbers<[1], [0], [0], [1], [0, 0, 1, 1], [], []>} : vector<10x20xbf16>, vector<20x33xbf16>, vector<10x33xf32> -> vector<10x33xf32>
    %110 = vector.extract_strided_slice %109 {offsets = [0, 32], sizes = [10, 1], strides = [1, 1]} : vector<10x33xf32> to vector<10x1xf32>
    %cst_60 = arith.constant 1.000000e-16 : f32
    %111 = vector.broadcast %cst_60 : f32 to vector<10x1xf32>
    %112 = arith.addf %110, %111 : vector<10x1xf32>
    %113 = vector.extract_strided_slice %109 {offsets = [0, 0], sizes = [10, 32], strides = [1, 1]} : vector<10x33xf32> to vector<10x32xf32>
    %114 = tpu.reciprocal %112 {approx = true} : vector<10x1xf32> -> vector<10x1xf32>
    %115 = vector.broadcast %114 : vector<10x1xf32> to vector<10x32xf32>
    %116 = arith.mulf %113, %115 : vector<10x32xf32>
    %c152 = arith.constant 152 : index
    %c0_61 = arith.constant 0 : index
    %117 = vector.load %arg9[%c152, %c0_61] : memref<368x32xf32, #tpu.memory_space<vmem>>, vector<1x32xf32>
    %118 = vector.broadcast %117 : vector<1x32xf32> to vector<10x32xf32>
    %119 = arith.addf %116, %118 : vector<10x32xf32>
    %cst_62 = arith.constant 0.000000e+00 : f32
    %120 = vector.broadcast %cst_62 : f32 to vector<10x32xf32>
    %121 = arith.cmpf ogt, %119, %120 : vector<10x32xf32>
    %122 = math.exp %119 : vector<10x32xf32>
    %cst_63 = arith.constant 1.000000e+00 : f32
    %123 = vector.broadcast %cst_63 : f32 to vector<10x32xf32>
    %124 = arith.subf %122, %123 : vector<10x32xf32>
    %125 = arith.select %121, %119, %124 : vector<10x32xi1>, vector<10x32xf32>
    %c0_64 = arith.constant 0 : index
    %c0_65 = arith.constant 0 : index
    %126 = vector.load %arg10[%c0_64, %c0_65] : memref<240x384xf32, #tpu.memory_space<vmem>>, vector<32x384xf32>
    %c32 = arith.constant 32 : index
    %c0_66 = arith.constant 0 : index
    %127 = vector.load %arg10[%c32, %c0_66] : memref<240x384xf32, #tpu.memory_space<vmem>>, vector<32x384xf32>
    %c64_67 = arith.constant 64 : index
    %c0_68 = arith.constant 0 : index
    %128 = vector.load %arg10[%c64_67, %c0_68] : memref<240x384xf32, #tpu.memory_space<vmem>>, vector<1x384xf32>
    %c72 = arith.constant 72 : index
    %c0_69 = arith.constant 0 : index
    %129 = vector.load %arg10[%c72, %c0_69] : memref<240x384xf32, #tpu.memory_space<vmem>>, vector<1x384xf32>
    %130 = arith.truncf %125 : vector<10x32xf32> to vector<10x32xbf16>
    %131 = arith.truncf %126 : vector<32x384xf32> to vector<32x384xbf16>
    %cst_70 = arith.constant dense<0.000000e+00> : vector<10x384xf32>
    %132 = tpu.matmul %130, %131, %cst_70 {dimension_numbers = #tpu.dot_dimension_numbers<[1], [0], [0], [1], [0, 0, 1, 1], [], []>} : vector<10x32xbf16>, vector<32x384xbf16>, vector<10x384xf32> -> vector<10x384xf32>
    %133 = vector.broadcast %128 : vector<1x384xf32> to vector<10x384xf32>
    %134 = arith.addf %132, %133 : vector<10x384xf32>
    %135 = arith.truncf %54 : vector<10x32xf32> to vector<10x32xbf16>
    %136 = arith.truncf %127 : vector<32x384xf32> to vector<32x384xbf16>
    %cst_71 = arith.constant dense<0.000000e+00> : vector<10x384xf32>
    %137 = tpu.matmul %135, %136, %cst_71 {dimension_numbers = #tpu.dot_dimension_numbers<[1], [0], [0], [1], [0, 0, 1, 1], [], []>} : vector<10x32xbf16>, vector<32x384xbf16>, vector<10x384xf32> -> vector<10x384xf32>
    %138 = vector.broadcast %129 : vector<1x384xf32> to vector<10x384xf32>
    %139 = arith.addf %137, %138 : vector<10x384xf32>
    %140 = vector.extract_strided_slice %134 {offsets = [0, 0], sizes = [10, 32], strides = [1, 1]} : vector<10x384xf32> to vector<10x32xf32>
    %141 = vector.extract_strided_slice %139 {offsets = [0, 0], sizes = [10, 32], strides = [1, 1]} : vector<10x384xf32> to vector<10x32xf32>
    %142 = arith.addf %140, %141 : vector<10x32xf32>
    %cst_72 = arith.constant 0.000000e+00 : f32
    %143 = vector.broadcast %cst_72 : f32 to vector<10x32xf32>
    %144 = arith.subf %143, %142 : vector<10x32xf32>
    %145 = math.exp %144 : vector<10x32xf32>
    %cst_73 = arith.constant 1.000000e+00 : f32
    %146 = vector.broadcast %cst_73 : f32 to vector<10x32xf32>
    %147 = arith.addf %146, %145 : vector<10x32xf32>
    %cst_74 = arith.constant 1.000000e+00 : f32
    %148 = vector.broadcast %cst_74 : f32 to vector<10x32xf32>
    %149 = arith.divf %148, %147 : vector<10x32xf32>
    %150 = vector.extract_strided_slice %134 {offsets = [0, 128], sizes = [10, 32], strides = [1, 1]} : vector<10x384xf32> to vector<10x32xf32>
    %151 = vector.extract_strided_slice %139 {offsets = [0, 128], sizes = [10, 32], strides = [1, 1]} : vector<10x384xf32> to vector<10x32xf32>
    %152 = arith.addf %150, %151 : vector<10x32xf32>
    %cst_75 = arith.constant 0.000000e+00 : f32
    %153 = vector.broadcast %cst_75 : f32 to vector<10x32xf32>
    %154 = arith.subf %153, %152 : vector<10x32xf32>
    %155 = math.exp %154 : vector<10x32xf32>
    %cst_76 = arith.constant 1.000000e+00 : f32
    %156 = vector.broadcast %cst_76 : f32 to vector<10x32xf32>
    %157 = arith.addf %156, %155 : vector<10x32xf32>
    %cst_77 = arith.constant 1.000000e+00 : f32
    %158 = vector.broadcast %cst_77 : f32 to vector<10x32xf32>
    %159 = arith.divf %158, %157 : vector<10x32xf32>
    %160 = vector.extract_strided_slice %134 {offsets = [0, 256], sizes = [10, 32], strides = [1, 1]} : vector<10x384xf32> to vector<10x32xf32>
    %161 = vector.extract_strided_slice %139 {offsets = [0, 256], sizes = [10, 32], strides = [1, 1]} : vector<10x384xf32> to vector<10x32xf32>
    %162 = arith.mulf %149, %161 : vector<10x32xf32>
    %163 = arith.addf %160, %162 : vector<10x32xf32>
    %164 = math.tanh %163 : vector<10x32xf32>
    %cst_78 = arith.constant 1.000000e+00 : f32
    %165 = vector.broadcast %cst_78 : f32 to vector<10x32xf32>
    %166 = arith.subf %165, %159 : vector<10x32xf32>
    %167 = arith.mulf %166, %164 : vector<10x32xf32>
    %168 = arith.mulf %159, %54 : vector<10x32xf32>
    %169 = arith.addf %167, %168 : vector<10x32xf32>
    %cst_79 = arith.constant 0.000000e+00 : f32
    %170 = vector.broadcast %cst_79 : f32 to vector<10x32xf32>
    %171 = arith.maximumf %169, %170 : vector<10x32xf32>
    %c160 = arith.constant 160 : index
    %c0_80 = arith.constant 0 : index
    %172 = vector.load %arg9[%c160, %c0_80] : memref<368x32xf32, #tpu.memory_space<vmem>>, vector<32x32xf32>
    %c192 = arith.constant 192 : index
    %c0_81 = arith.constant 0 : index
    %173 = vector.load %arg9[%c192, %c0_81] : memref<368x32xf32, #tpu.memory_space<vmem>>, vector<32x2xf32>
    %c224 = arith.constant 224 : index
    %c0_82 = arith.constant 0 : index
    %174 = vector.load %arg9[%c224, %c0_82] : memref<368x32xf32, #tpu.memory_space<vmem>>, vector<1x32xf32>
    %c80 = arith.constant 80 : index
    %c0_83 = arith.constant 0 : index
    %175 = vector.load %arg10[%c80, %c0_83] : memref<240x384xf32, #tpu.memory_space<vmem>>, vector<32x384xf32>
    %c112 = arith.constant 112 : index
    %c0_84 = arith.constant 0 : index
    %176 = vector.load %arg10[%c112, %c0_84] : memref<240x384xf32, #tpu.memory_space<vmem>>, vector<32x384xf32>
    %c144 = arith.constant 144 : index
    %c0_85 = arith.constant 0 : index
    %177 = vector.load %arg10[%c144, %c0_85] : memref<240x384xf32, #tpu.memory_space<vmem>>, vector<1x384xf32>
    %c152_86 = arith.constant 152 : index
    %c0_87 = arith.constant 0 : index
    %178 = vector.load %arg10[%c152_86, %c0_87] : memref<240x384xf32, #tpu.memory_space<vmem>>, vector<1x384xf32>
    %179 = arith.truncf %171 : vector<10x32xf32> to vector<10x32xbf16>
    %180 = arith.truncf %172 : vector<32x32xf32> to vector<32x32xbf16>
    %cst_88 = arith.constant dense<0.000000e+00> : vector<10x32xf32>
    %181 = tpu.matmul %179, %180, %cst_88 {dimension_numbers = #tpu.dot_dimension_numbers<[1], [0], [0], [1], [0, 0, 1, 1], [], []>} : vector<10x32xbf16>, vector<32x32xbf16>, vector<10x32xf32> -> vector<10x32xf32>
    %182 = arith.truncf %181 : vector<10x32xf32> to vector<10x32xbf16>
    %183 = arith.truncf %173 : vector<32x2xf32> to vector<32x2xbf16>
    %cst_89 = arith.constant dense<0.000000e+00> : vector<10x2xf32>
    %184 = tpu.matmul %182, %183, %cst_89 {dimension_numbers = #tpu.dot_dimension_numbers<[1], [0], [0], [1], [0, 0, 1, 1], [], []>} : vector<10x32xbf16>, vector<32x2xbf16>, vector<10x2xf32> -> vector<10x2xf32>
    %185 = vector.extract_strided_slice %184 {offsets = [0, 0], sizes = [10, 1], strides = [1, 1]} : vector<10x2xf32> to vector<10x1xf32>
    %186 = arith.truncf %185 : vector<10x1xf32> to vector<10x1xbf16>
    %cst_90 = arith.constant dense<0.000000e+00> : vector<20x1xf32>
    %187 = tpu.matmul %0, %186, %cst_90 {dimension_numbers = #tpu.dot_dimension_numbers<[1], [0], [0], [1], [0, 0, 1, 1], [], []>} : vector<20x10xbf16>, vector<10x1xbf16>, vector<20x1xf32> -> vector<20x1xf32>
    %188 = vector.extract_strided_slice %184 {offsets = [0, 1], sizes = [10, 1], strides = [1, 1]} : vector<10x2xf32> to vector<10x1xf32>
    %189 = arith.truncf %188 : vector<10x1xf32> to vector<10x1xbf16>
    %cst_91 = arith.constant dense<0.000000e+00> : vector<20x1xf32>
    %190 = tpu.matmul %1, %189, %cst_91 {dimension_numbers = #tpu.dot_dimension_numbers<[1], [0], [0], [1], [0, 0, 1, 1], [], []>} : vector<20x10xbf16>, vector<10x1xbf16>, vector<20x1xf32> -> vector<20x1xf32>
    %191 = arith.addf %187, %190 : vector<20x1xf32>
    %cst_92 = arith.constant 0.000000e+00 : f32
    %192 = vector.broadcast %cst_92 : f32 to vector<20x1xf32>
    %193 = arith.cmpf ogt, %191, %192 : vector<20x1xf32>
    %cst_93 = arith.constant 0.00999999977 : f32
    %194 = vector.broadcast %cst_93 : f32 to vector<20x1xf32>
    %195 = arith.mulf %194, %191 : vector<20x1xf32>
    %196 = arith.select %193, %191, %195 : vector<20x1xi1>, vector<20x1xf32>
    %197 = arith.truncf %181 : vector<10x32xf32> to vector<10x32xbf16>
    %cst_94 = arith.constant dense<0.000000e+00> : vector<20x32xf32>
    %198 = tpu.matmul %0, %197, %cst_94 {dimension_numbers = #tpu.dot_dimension_numbers<[1], [0], [0], [1], [0, 0, 1, 1], [], []>} : vector<20x10xbf16>, vector<10x32xbf16>, vector<20x32xf32> -> vector<20x32xf32>
    %199 = tpu.transpose %196, [1, 0] : vector<20x1xf32> -> vector<1x20xf32>
    %cst_95 = arith.constant 5.000000e-01 : bf16
    %200 = vector.broadcast %cst_95 : bf16 to vector<10x20xbf16>
    %201 = arith.cmpf ogt, %2, %200 : vector<10x20xbf16>
    %cst_96 = arith.constant -1.000000e+30 : f32
    %202 = vector.shape_cast %199 : vector<1x20xf32> to vector<1x20xf32>
    %203 = vector.broadcast %202 : vector<1x20xf32> to vector<10x20xf32>
    %204 = vector.broadcast %cst_96 : f32 to vector<10x20xf32>
    %205 = arith.select %201, %203, %204 : vector<10x20xi1>, vector<10x20xf32>
    %cst_97 = arith.constant dense<0xFF800000> : vector<10xf32>
    %206 = vector.multi_reduction <maximumf>, %205, %cst_97 [1] : vector<10x20xf32> to vector<10xf32>
    %207 = vector.shape_cast %206 : vector<10xf32> to vector<10x1xf32>
    %208 = arith.truncf %207 : vector<10x1xf32> to vector<10x1xbf16>
    %cst_98 = arith.constant dense<0.000000e+00> : vector<20x1xf32>
    %209 = tpu.matmul %1, %208, %cst_98 {dimension_numbers = #tpu.dot_dimension_numbers<[1], [0], [0], [1], [0, 0, 1, 1], [], []>} : vector<20x10xbf16>, vector<10x1xbf16>, vector<20x1xf32> -> vector<20x1xf32>
    %210 = arith.subf %196, %209 : vector<20x1xf32>
    %211 = math.exp %210 : vector<20x1xf32>
    %212 = vector.broadcast %211 : vector<20x1xf32> to vector<20x32xf32>
    %213 = arith.mulf %198, %212 : vector<20x32xf32>
    %214 = tpu.concatenate %213, %211 in 1 : vector<20x32xf32>, vector<20x1xf32> -> vector<20x33xf32>
    %215 = arith.truncf %214 : vector<20x33xf32> to vector<20x33xbf16>
    %cst_99 = arith.constant dense<0.000000e+00> : vector<10x33xf32>
    %216 = tpu.matmul %2, %215, %cst_99 {dimension_numbers = #tpu.dot_dimension_numbers<[1], [0], [0], [1], [0, 0, 1, 1], [], []>} : vector<10x20xbf16>, vector<20x33xbf16>, vector<10x33xf32> -> vector<10x33xf32>
    %217 = vector.extract_strided_slice %216 {offsets = [0, 32], sizes = [10, 1], strides = [1, 1]} : vector<10x33xf32> to vector<10x1xf32>
    %cst_100 = arith.constant 1.000000e-16 : f32
    %218 = vector.broadcast %cst_100 : f32 to vector<10x1xf32>
    %219 = arith.addf %217, %218 : vector<10x1xf32>
    %220 = vector.extract_strided_slice %216 {offsets = [0, 0], sizes = [10, 32], strides = [1, 1]} : vector<10x33xf32> to vector<10x32xf32>
    %221 = tpu.reciprocal %219 {approx = true} : vector<10x1xf32> -> vector<10x1xf32>
    %222 = vector.broadcast %221 : vector<10x1xf32> to vector<10x32xf32>
    %223 = arith.mulf %220, %222 : vector<10x32xf32>
    %224 = vector.broadcast %174 : vector<1x32xf32> to vector<10x32xf32>
    %225 = arith.addf %223, %224 : vector<10x32xf32>
    %cst_101 = arith.constant 0.000000e+00 : f32
    %226 = vector.broadcast %cst_101 : f32 to vector<10x32xf32>
    %227 = arith.cmpf ogt, %225, %226 : vector<10x32xf32>
    %228 = math.exp %225 : vector<10x32xf32>
    %cst_102 = arith.constant 1.000000e+00 : f32
    %229 = vector.broadcast %cst_102 : f32 to vector<10x32xf32>
    %230 = arith.subf %228, %229 : vector<10x32xf32>
    %231 = arith.select %227, %225, %230 : vector<10x32xi1>, vector<10x32xf32>
    %232 = arith.truncf %231 : vector<10x32xf32> to vector<10x32xbf16>
    %233 = arith.truncf %175 : vector<32x384xf32> to vector<32x384xbf16>
    %cst_103 = arith.constant dense<0.000000e+00> : vector<10x384xf32>
    %234 = tpu.matmul %232, %233, %cst_103 {dimension_numbers = #tpu.dot_dimension_numbers<[1], [0], [0], [1], [0, 0, 1, 1], [], []>} : vector<10x32xbf16>, vector<32x384xbf16>, vector<10x384xf32> -> vector<10x384xf32>
    %235 = vector.broadcast %177 : vector<1x384xf32> to vector<10x384xf32>
    %236 = arith.addf %234, %235 : vector<10x384xf32>
    %237 = arith.truncf %171 : vector<10x32xf32> to vector<10x32xbf16>
    %238 = arith.truncf %176 : vector<32x384xf32> to vector<32x384xbf16>
    %cst_104 = arith.constant dense<0.000000e+00> : vector<10x384xf32>
    %239 = tpu.matmul %237, %238, %cst_104 {dimension_numbers = #tpu.dot_dimension_numbers<[1], [0], [0], [1], [0, 0, 1, 1], [], []>} : vector<10x32xbf16>, vector<32x384xbf16>, vector<10x384xf32> -> vector<10x384xf32>
    %240 = vector.broadcast %178 : vector<1x384xf32> to vector<10x384xf32>
    %241 = arith.addf %239, %240 : vector<10x384xf32>
    %242 = vector.extract_strided_slice %236 {offsets = [0, 0], sizes = [10, 32], strides = [1, 1]} : vector<10x384xf32> to vector<10x32xf32>
    %243 = vector.extract_strided_slice %241 {offsets = [0, 0], sizes = [10, 32], strides = [1, 1]} : vector<10x384xf32> to vector<10x32xf32>
    %244 = arith.addf %242, %243 : vector<10x32xf32>
    %cst_105 = arith.constant 0.000000e+00 : f32
    %245 = vector.broadcast %cst_105 : f32 to vector<10x32xf32>
    %246 = arith.subf %245, %244 : vector<10x32xf32>
    %247 = math.exp %246 : vector<10x32xf32>
    %cst_106 = arith.constant 1.000000e+00 : f32
    %248 = vector.broadcast %cst_106 : f32 to vector<10x32xf32>
    %249 = arith.addf %248, %247 : vector<10x32xf32>
    %cst_107 = arith.constant 1.000000e+00 : f32
    %250 = vector.broadcast %cst_107 : f32 to vector<10x32xf32>
    %251 = arith.divf %250, %249 : vector<10x32xf32>
    %252 = vector.extract_strided_slice %236 {offsets = [0, 128], sizes = [10, 32], strides = [1, 1]} : vector<10x384xf32> to vector<10x32xf32>
    %253 = vector.extract_strided_slice %241 {offsets = [0, 128], sizes = [10, 32], strides = [1, 1]} : vector<10x384xf32> to vector<10x32xf32>
    %254 = arith.addf %252, %253 : vector<10x32xf32>
    %cst_108 = arith.constant 0.000000e+00 : f32
    %255 = vector.broadcast %cst_108 : f32 to vector<10x32xf32>
    %256 = arith.subf %255, %254 : vector<10x32xf32>
    %257 = math.exp %256 : vector<10x32xf32>
    %cst_109 = arith.constant 1.000000e+00 : f32
    %258 = vector.broadcast %cst_109 : f32 to vector<10x32xf32>
    %259 = arith.addf %258, %257 : vector<10x32xf32>
    %cst_110 = arith.constant 1.000000e+00 : f32
    %260 = vector.broadcast %cst_110 : f32 to vector<10x32xf32>
    %261 = arith.divf %260, %259 : vector<10x32xf32>
    %262 = vector.extract_strided_slice %236 {offsets = [0, 256], sizes = [10, 32], strides = [1, 1]} : vector<10x384xf32> to vector<10x32xf32>
    %263 = vector.extract_strided_slice %241 {offsets = [0, 256], sizes = [10, 32], strides = [1, 1]} : vector<10x384xf32> to vector<10x32xf32>
    %264 = arith.mulf %251, %263 : vector<10x32xf32>
    %265 = arith.addf %262, %264 : vector<10x32xf32>
    %266 = math.tanh %265 : vector<10x32xf32>
    %cst_111 = arith.constant 1.000000e+00 : f32
    %267 = vector.broadcast %cst_111 : f32 to vector<10x32xf32>
    %268 = arith.subf %267, %261 : vector<10x32xf32>
    %269 = arith.mulf %268, %266 : vector<10x32xf32>
    %270 = arith.mulf %261, %171 : vector<10x32xf32>
    %271 = arith.addf %269, %270 : vector<10x32xf32>
    %cst_112 = arith.constant 0.000000e+00 : f32
    %272 = vector.broadcast %cst_112 : f32 to vector<10x32xf32>
    %273 = arith.maximumf %271, %272 : vector<10x32xf32>
    %274 = arith.truncf %273 : vector<10x32xf32> to vector<10x32xbf16>
    %cst_113 = arith.constant dense<0.000000e+00> : vector<2x32xf32>
    %275 = tpu.matmul %4, %274, %cst_113 {dimension_numbers = #tpu.dot_dimension_numbers<[1], [0], [0], [1], [0, 0, 1, 1], [], []>} : vector<2x10xbf16>, vector<10x32xbf16>, vector<2x32xf32> -> vector<2x32xf32>
    %cst_114 = arith.constant 0.000000e+00 : f32
    %276 = vector.broadcast %cst_114 : f32 to vector<2x32xf32>
    %277 = arith.maximumf %275, %276 : vector<2x32xf32>
    %c232 = arith.constant 232 : index
    %c0_115 = arith.constant 0 : index
    %278 = vector.load %arg9[%c232, %c0_115] : memref<368x32xf32, #tpu.memory_space<vmem>>, vector<32x32xf32>
    %c264 = arith.constant 264 : index
    %c0_116 = arith.constant 0 : index
    %279 = vector.load %arg9[%c264, %c0_116] : memref<368x32xf32, #tpu.memory_space<vmem>>, vector<32x2xf32>
    %c296 = arith.constant 296 : index
    %c0_117 = arith.constant 0 : index
    %280 = vector.load %arg9[%c296, %c0_117] : memref<368x32xf32, #tpu.memory_space<vmem>>, vector<1x32xf32>
    %c160_118 = arith.constant 160 : index
    %c0_119 = arith.constant 0 : index
    %281 = vector.load %arg10[%c160_118, %c0_119] : memref<240x384xf32, #tpu.memory_space<vmem>>, vector<32x384xf32>
    %c192_120 = arith.constant 192 : index
    %c0_121 = arith.constant 0 : index
    %282 = vector.load %arg10[%c192_120, %c0_121] : memref<240x384xf32, #tpu.memory_space<vmem>>, vector<32x384xf32>
    %c224_122 = arith.constant 224 : index
    %c0_123 = arith.constant 0 : index
    %283 = vector.load %arg10[%c224_122, %c0_123] : memref<240x384xf32, #tpu.memory_space<vmem>>, vector<1x384xf32>
    %c232_124 = arith.constant 232 : index
    %c0_125 = arith.constant 0 : index
    %284 = vector.load %arg10[%c232_124, %c0_125] : memref<240x384xf32, #tpu.memory_space<vmem>>, vector<1x384xf32>
    %285 = arith.truncf %273 : vector<10x32xf32> to vector<10x32xbf16>
    %286 = arith.truncf %278 : vector<32x32xf32> to vector<32x32xbf16>
    %cst_126 = arith.constant dense<0.000000e+00> : vector<10x32xf32>
    %287 = tpu.matmul %285, %286, %cst_126 {dimension_numbers = #tpu.dot_dimension_numbers<[1], [0], [0], [1], [0, 0, 1, 1], [], []>} : vector<10x32xbf16>, vector<32x32xbf16>, vector<10x32xf32> -> vector<10x32xf32>
    %288 = arith.truncf %287 : vector<10x32xf32> to vector<10x32xbf16>
    %289 = arith.truncf %279 : vector<32x2xf32> to vector<32x2xbf16>
    %cst_127 = arith.constant dense<0.000000e+00> : vector<10x2xf32>
    %290 = tpu.matmul %288, %289, %cst_127 {dimension_numbers = #tpu.dot_dimension_numbers<[1], [0], [0], [1], [0, 0, 1, 1], [], []>} : vector<10x32xbf16>, vector<32x2xbf16>, vector<10x2xf32> -> vector<10x2xf32>
    %291 = vector.extract_strided_slice %290 {offsets = [0, 0], sizes = [10, 1], strides = [1, 1]} : vector<10x2xf32> to vector<10x1xf32>
    %292 = arith.truncf %277 : vector<2x32xf32> to vector<2x32xbf16>
    %293 = arith.truncf %278 : vector<32x32xf32> to vector<32x32xbf16>
    %cst_128 = arith.constant dense<0.000000e+00> : vector<2x32xf32>
    %294 = tpu.matmul %292, %293, %cst_128 {dimension_numbers = #tpu.dot_dimension_numbers<[1], [0], [0], [1], [0, 0, 1, 1], [], []>} : vector<2x32xbf16>, vector<32x32xbf16>, vector<2x32xf32> -> vector<2x32xf32>
    %295 = arith.truncf %294 : vector<2x32xf32> to vector<2x32xbf16>
    %296 = arith.truncf %279 : vector<32x2xf32> to vector<32x2xbf16>
    %cst_129 = arith.constant dense<0.000000e+00> : vector<2x2xf32>
    %297 = tpu.matmul %295, %296, %cst_129 {dimension_numbers = #tpu.dot_dimension_numbers<[1], [0], [0], [1], [0, 0, 1, 1], [], []>} : vector<2x32xbf16>, vector<32x2xbf16>, vector<2x2xf32> -> vector<2x2xf32>
    %298 = vector.extract_strided_slice %297 {offsets = [0, 1], sizes = [2, 1], strides = [1, 1]} : vector<2x2xf32> to vector<2x1xf32>
    %299 = arith.truncf %298 : vector<2x1xf32> to vector<2x1xbf16>
    %cst_130 = arith.constant dense<0.000000e+00> : vector<10x1xf32>
    %300 = tpu.matmul %3, %299, %cst_130 {dimension_numbers = #tpu.dot_dimension_numbers<[1], [0], [0], [1], [0, 0, 1, 1], [], []>} : vector<10x2xbf16>, vector<2x1xbf16>, vector<10x1xf32> -> vector<10x1xf32>
    %301 = arith.addf %291, %300 : vector<10x1xf32>
    %cst_131 = arith.constant 0.000000e+00 : f32
    %302 = vector.broadcast %cst_131 : f32 to vector<10x1xf32>
    %303 = arith.cmpf ogt, %301, %302 : vector<10x1xf32>
    %cst_132 = arith.constant 0.00999999977 : f32
    %304 = vector.broadcast %cst_132 : f32 to vector<10x1xf32>
    %305 = arith.mulf %304, %301 : vector<10x1xf32>
    %306 = arith.select %303, %301, %305 : vector<10x1xi1>, vector<10x1xf32>
    %307 = tpu.transpose %306, [1, 0] : vector<10x1xf32> -> vector<1x10xf32>
    %cst_133 = arith.constant 5.000000e-01 : bf16
    %308 = vector.broadcast %cst_133 : bf16 to vector<2x10xbf16>
    %309 = arith.cmpf ogt, %4, %308 : vector<2x10xbf16>
    %cst_134 = arith.constant -1.000000e+30 : f32
    %310 = vector.shape_cast %307 : vector<1x10xf32> to vector<1x10xf32>
    %311 = vector.broadcast %310 : vector<1x10xf32> to vector<2x10xf32>
    %312 = vector.broadcast %cst_134 : f32 to vector<2x10xf32>
    %313 = arith.select %309, %311, %312 : vector<2x10xi1>, vector<2x10xf32>
    %cst_135 = arith.constant dense<0xFF800000> : vector<2xf32>
    %314 = vector.multi_reduction <maximumf>, %313, %cst_135 [1] : vector<2x10xf32> to vector<2xf32>
    %315 = vector.shape_cast %314 : vector<2xf32> to vector<2x1xf32>
    %316 = arith.truncf %315 : vector<2x1xf32> to vector<2x1xbf16>
    %cst_136 = arith.constant dense<0.000000e+00> : vector<10x1xf32>
    %317 = tpu.matmul %3, %316, %cst_136 {dimension_numbers = #tpu.dot_dimension_numbers<[1], [0], [0], [1], [0, 0, 1, 1], [], []>} : vector<10x2xbf16>, vector<2x1xbf16>, vector<10x1xf32> -> vector<10x1xf32>
    %318 = arith.subf %306, %317 : vector<10x1xf32>
    %319 = math.exp %318 : vector<10x1xf32>
    %320 = vector.broadcast %319 : vector<10x1xf32> to vector<10x32xf32>
    %321 = arith.mulf %287, %320 : vector<10x32xf32>
    %322 = tpu.concatenate %321, %319 in 1 : vector<10x32xf32>, vector<10x1xf32> -> vector<10x33xf32>
    %323 = arith.truncf %322 : vector<10x33xf32> to vector<10x33xbf16>
    %cst_137 = arith.constant dense<0.000000e+00> : vector<2x33xf32>
    %324 = tpu.matmul %4, %323, %cst_137 {dimension_numbers = #tpu.dot_dimension_numbers<[1], [0], [0], [1], [0, 0, 1, 1], [], []>} : vector<2x10xbf16>, vector<10x33xbf16>, vector<2x33xf32> -> vector<2x33xf32>
    %325 = vector.extract_strided_slice %324 {offsets = [0, 32], sizes = [2, 1], strides = [1, 1]} : vector<2x33xf32> to vector<2x1xf32>
    %cst_138 = arith.constant 1.000000e-16 : f32
    %326 = vector.broadcast %cst_138 : f32 to vector<2x1xf32>
    %327 = arith.addf %325, %326 : vector<2x1xf32>
    %328 = vector.extract_strided_slice %324 {offsets = [0, 0], sizes = [2, 32], strides = [1, 1]} : vector<2x33xf32> to vector<2x32xf32>
    %329 = tpu.reciprocal %327 {approx = true} : vector<2x1xf32> -> vector<2x1xf32>
    %330 = vector.broadcast %329 : vector<2x1xf32> to vector<2x32xf32>
    %331 = arith.mulf %328, %330 : vector<2x32xf32>
    %332 = vector.broadcast %280 : vector<1x32xf32> to vector<2x32xf32>
    %333 = arith.addf %331, %332 : vector<2x32xf32>
    %cst_139 = arith.constant 0.000000e+00 : f32
    %334 = vector.broadcast %cst_139 : f32 to vector<2x32xf32>
    %335 = arith.cmpf ogt, %333, %334 : vector<2x32xf32>
    %336 = math.exp %333 : vector<2x32xf32>
    %cst_140 = arith.constant 1.000000e+00 : f32
    %337 = vector.broadcast %cst_140 : f32 to vector<2x32xf32>
    %338 = arith.subf %336, %337 : vector<2x32xf32>
    %339 = arith.select %335, %333, %338 : vector<2x32xi1>, vector<2x32xf32>
    %340 = arith.truncf %339 : vector<2x32xf32> to vector<2x32xbf16>
    %341 = arith.truncf %281 : vector<32x384xf32> to vector<32x384xbf16>
    %cst_141 = arith.constant dense<0.000000e+00> : vector<2x384xf32>
    %342 = tpu.matmul %340, %341, %cst_141 {dimension_numbers = #tpu.dot_dimension_numbers<[1], [0], [0], [1], [0, 0, 1, 1], [], []>} : vector<2x32xbf16>, vector<32x384xbf16>, vector<2x384xf32> -> vector<2x384xf32>
    %343 = vector.broadcast %283 : vector<1x384xf32> to vector<2x384xf32>
    %344 = arith.addf %342, %343 : vector<2x384xf32>
    %345 = arith.truncf %277 : vector<2x32xf32> to vector<2x32xbf16>
    %346 = arith.truncf %282 : vector<32x384xf32> to vector<32x384xbf16>
    %cst_142 = arith.constant dense<0.000000e+00> : vector<2x384xf32>
    %347 = tpu.matmul %345, %346, %cst_142 {dimension_numbers = #tpu.dot_dimension_numbers<[1], [0], [0], [1], [0, 0, 1, 1], [], []>} : vector<2x32xbf16>, vector<32x384xbf16>, vector<2x384xf32> -> vector<2x384xf32>
    %348 = vector.broadcast %284 : vector<1x384xf32> to vector<2x384xf32>
    %349 = arith.addf %347, %348 : vector<2x384xf32>
    %350 = vector.extract_strided_slice %344 {offsets = [0, 0], sizes = [2, 32], strides = [1, 1]} : vector<2x384xf32> to vector<2x32xf32>
    %351 = vector.extract_strided_slice %349 {offsets = [0, 0], sizes = [2, 32], strides = [1, 1]} : vector<2x384xf32> to vector<2x32xf32>
    %352 = arith.addf %350, %351 : vector<2x32xf32>
    %cst_143 = arith.constant 0.000000e+00 : f32
    %353 = vector.broadcast %cst_143 : f32 to vector<2x32xf32>
    %354 = arith.subf %353, %352 : vector<2x32xf32>
    %355 = math.exp %354 : vector<2x32xf32>
    %cst_144 = arith.constant 1.000000e+00 : f32
    %356 = vector.broadcast %cst_144 : f32 to vector<2x32xf32>
    %357 = arith.addf %356, %355 : vector<2x32xf32>
    %cst_145 = arith.constant 1.000000e+00 : f32
    %358 = vector.broadcast %cst_145 : f32 to vector<2x32xf32>
    %359 = arith.divf %358, %357 : vector<2x32xf32>
    %360 = vector.extract_strided_slice %344 {offsets = [0, 128], sizes = [2, 32], strides = [1, 1]} : vector<2x384xf32> to vector<2x32xf32>
    %361 = vector.extract_strided_slice %349 {offsets = [0, 128], sizes = [2, 32], strides = [1, 1]} : vector<2x384xf32> to vector<2x32xf32>
    %362 = arith.addf %360, %361 : vector<2x32xf32>
    %cst_146 = arith.constant 0.000000e+00 : f32
    %363 = vector.broadcast %cst_146 : f32 to vector<2x32xf32>
    %364 = arith.subf %363, %362 : vector<2x32xf32>
    %365 = math.exp %364 : vector<2x32xf32>
    %cst_147 = arith.constant 1.000000e+00 : f32
    %366 = vector.broadcast %cst_147 : f32 to vector<2x32xf32>
    %367 = arith.addf %366, %365 : vector<2x32xf32>
    %cst_148 = arith.constant 1.000000e+00 : f32
    %368 = vector.broadcast %cst_148 : f32 to vector<2x32xf32>
    %369 = arith.divf %368, %367 : vector<2x32xf32>
    %370 = vector.extract_strided_slice %344 {offsets = [0, 256], sizes = [2, 32], strides = [1, 1]} : vector<2x384xf32> to vector<2x32xf32>
    %371 = vector.extract_strided_slice %349 {offsets = [0, 256], sizes = [2, 32], strides = [1, 1]} : vector<2x384xf32> to vector<2x32xf32>
    %372 = arith.mulf %359, %371 : vector<2x32xf32>
    %373 = arith.addf %370, %372 : vector<2x32xf32>
    %374 = math.tanh %373 : vector<2x32xf32>
    %cst_149 = arith.constant 1.000000e+00 : f32
    %375 = vector.broadcast %cst_149 : f32 to vector<2x32xf32>
    %376 = arith.subf %375, %369 : vector<2x32xf32>
    %377 = arith.mulf %376, %374 : vector<2x32xf32>
    %378 = arith.mulf %369, %277 : vector<2x32xf32>
    %379 = arith.addf %377, %378 : vector<2x32xf32>
    %cst_150 = arith.constant 0.000000e+00 : f32
    %380 = vector.broadcast %cst_150 : f32 to vector<2x32xf32>
    %381 = arith.maximumf %379, %380 : vector<2x32xf32>
    %382 = arith.truncf %381 : vector<2x32xf32> to vector<2x32xbf16>
    %383 = arith.truncf %278 : vector<32x32xf32> to vector<32x32xbf16>
    %cst_151 = arith.constant dense<0.000000e+00> : vector<2x32xf32>
    %384 = tpu.matmul %382, %383, %cst_151 {dimension_numbers = #tpu.dot_dimension_numbers<[1], [0], [0], [1], [0, 0, 1, 1], [], []>} : vector<2x32xbf16>, vector<32x32xbf16>, vector<2x32xf32> -> vector<2x32xf32>
    %385 = arith.truncf %384 : vector<2x32xf32> to vector<2x32xbf16>
    %386 = arith.truncf %279 : vector<32x2xf32> to vector<32x2xbf16>
    %cst_152 = arith.constant dense<0.000000e+00> : vector<2x2xf32>
    %387 = tpu.matmul %385, %386, %cst_152 {dimension_numbers = #tpu.dot_dimension_numbers<[1], [0], [0], [1], [0, 0, 1, 1], [], []>} : vector<2x32xbf16>, vector<32x2xbf16>, vector<2x2xf32> -> vector<2x2xf32>
    %388 = vector.extract_strided_slice %387 {offsets = [0, 1], sizes = [2, 1], strides = [1, 1]} : vector<2x2xf32> to vector<2x1xf32>
    %389 = arith.truncf %388 : vector<2x1xf32> to vector<2x1xbf16>
    %cst_153 = arith.constant dense<0.000000e+00> : vector<10x1xf32>
    %390 = tpu.matmul %3, %389, %cst_153 {dimension_numbers = #tpu.dot_dimension_numbers<[1], [0], [0], [1], [0, 0, 1, 1], [], []>} : vector<10x2xbf16>, vector<2x1xbf16>, vector<10x1xf32> -> vector<10x1xf32>
    %391 = arith.addf %291, %390 : vector<10x1xf32>
    %cst_154 = arith.constant 0.000000e+00 : f32
    %392 = vector.broadcast %cst_154 : f32 to vector<10x1xf32>
    %393 = arith.cmpf ogt, %391, %392 : vector<10x1xf32>
    %cst_155 = arith.constant 0.00999999977 : f32
    %394 = vector.broadcast %cst_155 : f32 to vector<10x1xf32>
    %395 = arith.mulf %394, %391 : vector<10x1xf32>
    %396 = arith.select %393, %391, %395 : vector<10x1xi1>, vector<10x1xf32>
    %397 = tpu.transpose %396, [1, 0] : vector<10x1xf32> -> vector<1x10xf32>
    %cst_156 = arith.constant 5.000000e-01 : bf16
    %398 = vector.broadcast %cst_156 : bf16 to vector<2x10xbf16>
    %399 = arith.cmpf ogt, %4, %398 : vector<2x10xbf16>
    %cst_157 = arith.constant -1.000000e+30 : f32
    %400 = vector.shape_cast %397 : vector<1x10xf32> to vector<1x10xf32>
    %401 = vector.broadcast %400 : vector<1x10xf32> to vector<2x10xf32>
    %402 = vector.broadcast %cst_157 : f32 to vector<2x10xf32>
    %403 = arith.select %399, %401, %402 : vector<2x10xi1>, vector<2x10xf32>
    %cst_158 = arith.constant dense<0xFF800000> : vector<2xf32>
    %404 = vector.multi_reduction <maximumf>, %403, %cst_158 [1] : vector<2x10xf32> to vector<2xf32>
    %405 = vector.shape_cast %404 : vector<2xf32> to vector<2x1xf32>
    %406 = arith.truncf %405 : vector<2x1xf32> to vector<2x1xbf16>
    %cst_159 = arith.constant dense<0.000000e+00> : vector<10x1xf32>
    %407 = tpu.matmul %3, %406, %cst_159 {dimension_numbers = #tpu.dot_dimension_numbers<[1], [0], [0], [1], [0, 0, 1, 1], [], []>} : vector<10x2xbf16>, vector<2x1xbf16>, vector<10x1xf32> -> vector<10x1xf32>
    %408 = arith.subf %396, %407 : vector<10x1xf32>
    %409 = math.exp %408 : vector<10x1xf32>
    %410 = vector.broadcast %409 : vector<10x1xf32> to vector<10x32xf32>
    %411 = arith.mulf %287, %410 : vector<10x32xf32>
    %412 = tpu.concatenate %411, %409 in 1 : vector<10x32xf32>, vector<10x1xf32> -> vector<10x33xf32>
    %413 = arith.truncf %412 : vector<10x33xf32> to vector<10x33xbf16>
    %cst_160 = arith.constant dense<0.000000e+00> : vector<2x33xf32>
    %414 = tpu.matmul %4, %413, %cst_160 {dimension_numbers = #tpu.dot_dimension_numbers<[1], [0], [0], [1], [0, 0, 1, 1], [], []>} : vector<2x10xbf16>, vector<10x33xbf16>, vector<2x33xf32> -> vector<2x33xf32>
    %415 = vector.extract_strided_slice %414 {offsets = [0, 32], sizes = [2, 1], strides = [1, 1]} : vector<2x33xf32> to vector<2x1xf32>
    %cst_161 = arith.constant 1.000000e-16 : f32
    %416 = vector.broadcast %cst_161 : f32 to vector<2x1xf32>
    %417 = arith.addf %415, %416 : vector<2x1xf32>
    %418 = vector.extract_strided_slice %414 {offsets = [0, 0], sizes = [2, 32], strides = [1, 1]} : vector<2x33xf32> to vector<2x32xf32>
    %419 = tpu.reciprocal %417 {approx = true} : vector<2x1xf32> -> vector<2x1xf32>
    %420 = vector.broadcast %419 : vector<2x1xf32> to vector<2x32xf32>
    %421 = arith.mulf %418, %420 : vector<2x32xf32>
    %422 = vector.broadcast %280 : vector<1x32xf32> to vector<2x32xf32>
    %423 = arith.addf %421, %422 : vector<2x32xf32>
    %cst_162 = arith.constant 0.000000e+00 : f32
    %424 = vector.broadcast %cst_162 : f32 to vector<2x32xf32>
    %425 = arith.cmpf ogt, %423, %424 : vector<2x32xf32>
    %426 = math.exp %423 : vector<2x32xf32>
    %cst_163 = arith.constant 1.000000e+00 : f32
    %427 = vector.broadcast %cst_163 : f32 to vector<2x32xf32>
    %428 = arith.subf %426, %427 : vector<2x32xf32>
    %429 = arith.select %425, %423, %428 : vector<2x32xi1>, vector<2x32xf32>
    %430 = arith.truncf %429 : vector<2x32xf32> to vector<2x32xbf16>
    %431 = arith.truncf %281 : vector<32x384xf32> to vector<32x384xbf16>
    %cst_164 = arith.constant dense<0.000000e+00> : vector<2x384xf32>
    %432 = tpu.matmul %430, %431, %cst_164 {dimension_numbers = #tpu.dot_dimension_numbers<[1], [0], [0], [1], [0, 0, 1, 1], [], []>} : vector<2x32xbf16>, vector<32x384xbf16>, vector<2x384xf32> -> vector<2x384xf32>
    %433 = vector.broadcast %283 : vector<1x384xf32> to vector<2x384xf32>
    %434 = arith.addf %432, %433 : vector<2x384xf32>
    %435 = arith.truncf %381 : vector<2x32xf32> to vector<2x32xbf16>
    %436 = arith.truncf %282 : vector<32x384xf32> to vector<32x384xbf16>
    %cst_165 = arith.constant dense<0.000000e+00> : vector<2x384xf32>
    %437 = tpu.matmul %435, %436, %cst_165 {dimension_numbers = #tpu.dot_dimension_numbers<[1], [0], [0], [1], [0, 0, 1, 1], [], []>} : vector<2x32xbf16>, vector<32x384xbf16>, vector<2x384xf32> -> vector<2x384xf32>
    %438 = vector.broadcast %284 : vector<1x384xf32> to vector<2x384xf32>
    %439 = arith.addf %437, %438 : vector<2x384xf32>
    %440 = vector.extract_strided_slice %434 {offsets = [0, 0], sizes = [2, 32], strides = [1, 1]} : vector<2x384xf32> to vector<2x32xf32>
    %441 = vector.extract_strided_slice %439 {offsets = [0, 0], sizes = [2, 32], strides = [1, 1]} : vector<2x384xf32> to vector<2x32xf32>
    %442 = arith.addf %440, %441 : vector<2x32xf32>
    %cst_166 = arith.constant 0.000000e+00 : f32
    %443 = vector.broadcast %cst_166 : f32 to vector<2x32xf32>
    %444 = arith.subf %443, %442 : vector<2x32xf32>
    %445 = math.exp %444 : vector<2x32xf32>
    %cst_167 = arith.constant 1.000000e+00 : f32
    %446 = vector.broadcast %cst_167 : f32 to vector<2x32xf32>
    %447 = arith.addf %446, %445 : vector<2x32xf32>
    %cst_168 = arith.constant 1.000000e+00 : f32
    %448 = vector.broadcast %cst_168 : f32 to vector<2x32xf32>
    %449 = arith.divf %448, %447 : vector<2x32xf32>
    %450 = vector.extract_strided_slice %434 {offsets = [0, 128], sizes = [2, 32], strides = [1, 1]} : vector<2x384xf32> to vector<2x32xf32>
    %451 = vector.extract_strided_slice %439 {offsets = [0, 128], sizes = [2, 32], strides = [1, 1]} : vector<2x384xf32> to vector<2x32xf32>
    %452 = arith.addf %450, %451 : vector<2x32xf32>
    %cst_169 = arith.constant 0.000000e+00 : f32
    %453 = vector.broadcast %cst_169 : f32 to vector<2x32xf32>
    %454 = arith.subf %453, %452 : vector<2x32xf32>
    %455 = math.exp %454 : vector<2x32xf32>
    %cst_170 = arith.constant 1.000000e+00 : f32
    %456 = vector.broadcast %cst_170 : f32 to vector<2x32xf32>
    %457 = arith.addf %456, %455 : vector<2x32xf32>
    %cst_171 = arith.constant 1.000000e+00 : f32
    %458 = vector.broadcast %cst_171 : f32 to vector<2x32xf32>
    %459 = arith.divf %458, %457 : vector<2x32xf32>
    %460 = vector.extract_strided_slice %434 {offsets = [0, 256], sizes = [2, 32], strides = [1, 1]} : vector<2x384xf32> to vector<2x32xf32>
    %461 = vector.extract_strided_slice %439 {offsets = [0, 256], sizes = [2, 32], strides = [1, 1]} : vector<2x384xf32> to vector<2x32xf32>
    %462 = arith.mulf %449, %461 : vector<2x32xf32>
    %463 = arith.addf %460, %462 : vector<2x32xf32>
    %464 = math.tanh %463 : vector<2x32xf32>
    %cst_172 = arith.constant 1.000000e+00 : f32
    %465 = vector.broadcast %cst_172 : f32 to vector<2x32xf32>
    %466 = arith.subf %465, %459 : vector<2x32xf32>
    %467 = arith.mulf %466, %464 : vector<2x32xf32>
    %468 = arith.mulf %459, %381 : vector<2x32xf32>
    %469 = arith.addf %467, %468 : vector<2x32xf32>
    %cst_173 = arith.constant 0.000000e+00 : f32
    %470 = vector.broadcast %cst_173 : f32 to vector<2x32xf32>
    %471 = arith.maximumf %469, %470 : vector<2x32xf32>
    %c304 = arith.constant 304 : index
    %c0_174 = arith.constant 0 : index
    %472 = vector.load %arg9[%c304, %c0_174] : memref<368x32xf32, #tpu.memory_space<vmem>>, vector<32x4xf32>
    %473 = arith.truncf %471 : vector<2x32xf32> to vector<2x32xbf16>
    %474 = arith.truncf %472 : vector<32x4xf32> to vector<32x4xbf16>
    %cst_175 = arith.constant dense<0.000000e+00> : vector<2x4xf32>
    %475 = tpu.matmul %473, %474, %cst_175 {dimension_numbers = #tpu.dot_dimension_numbers<[1], [0], [0], [1], [0, 0, 1, 1], [], []>} : vector<2x32xbf16>, vector<32x4xbf16>, vector<2x4xf32> -> vector<2x4xf32>
    %c336 = arith.constant 336 : index
    %c0_176 = arith.constant 0 : index
    %476 = vector.load %arg9[%c336, %c0_176] : memref<368x32xf32, #tpu.memory_space<vmem>>, vector<1x4xf32>
    %477 = vector.broadcast %476 : vector<1x4xf32> to vector<2x4xf32>
    %478 = arith.addf %475, %477 : vector<2x4xf32>
    %c344 = arith.constant 344 : index
    %c0_177 = arith.constant 0 : index
    %479 = vector.load %arg9[%c344, %c0_177] : memref<368x32xf32, #tpu.memory_space<vmem>>, vector<4x4xf32>
    %480 = arith.truncf %41 : vector<2x4xf32> to vector<2x4xbf16>
    %481 = arith.truncf %479 : vector<4x4xf32> to vector<4x4xbf16>
    %cst_178 = arith.constant dense<0.000000e+00> : vector<2x4xf32>
    %482 = tpu.matmul %480, %481, %cst_178 {dimension_numbers = #tpu.dot_dimension_numbers<[1], [0], [0], [1], [0, 0, 1, 1], [], []>} : vector<2x4xbf16>, vector<4x4xbf16>, vector<2x4xf32> -> vector<2x4xf32>
    %c352 = arith.constant 352 : index
    %c0_179 = arith.constant 0 : index
    %483 = vector.load %arg9[%c352, %c0_179] : memref<368x32xf32, #tpu.memory_space<vmem>>, vector<4x4xf32>
    %484 = arith.truncf %478 : vector<2x4xf32> to vector<2x4xbf16>
    %485 = arith.truncf %483 : vector<4x4xf32> to vector<4x4xbf16>
    %cst_180 = arith.constant dense<0.000000e+00> : vector<2x4xf32>
    %486 = tpu.matmul %484, %485, %cst_180 {dimension_numbers = #tpu.dot_dimension_numbers<[1], [0], [0], [1], [0, 0, 1, 1], [], []>} : vector<2x4xbf16>, vector<4x4xbf16>, vector<2x4xf32> -> vector<2x4xf32>
    %487 = arith.addf %482, %486 : vector<2x4xf32>
    %c360 = arith.constant 360 : index
    %c0_181 = arith.constant 0 : index
    %488 = vector.load %arg9[%c360, %c0_181] : memref<368x32xf32, #tpu.memory_space<vmem>>, vector<1x4xf32>
    %489 = vector.broadcast %488 : vector<1x4xf32> to vector<2x4xf32>
    %490 = arith.addf %487, %489 : vector<2x4xf32>
    %c0_182 = arith.constant 0 : index
    %c0_183 = arith.constant 0 : index
    %491 = vector.load %arg11[%c0_182, %c0_183] : memref<2x4xf32, #tpu.memory_space<vmem>>, vector<2x4xf32>
    tpu.vector_store %arg11[%c0_182, %c0_183], %490 {strides = array<i32>} : memref<2x4xf32, #tpu.memory_space<vmem>>, vector<2x4xf32>,
    return
  }
}

</mosaic_0001>

<llo_original>
// kernel: tpu_custom_call.1
$region0: #{tpu_custom_call.1}
  #allocation0 [shape = 'u32[]', space=smem, size = 0x4, offset = 0x4, fixed_abs, tag = 'smem constant byte address 0x4 - core index']
  #allocation1 [shape = 'u32[72,128]{1,0:T(1,128)}', space=vmem, size = 0x9000, scoped, tag = 'internal scratch']
  %s0 = inlined_call_operand.vmem [shape: f32[2,16], index: 0, kind: input, shape index: {}]
  %s1 = inlined_call_operand.vmem [shape: f32[10,8], index: 1, kind: input, shape index: {}]
  %s2 = inlined_call_operand.vmem [shape: f32[20,6], index: 2, kind: input, shape index: {}]
  %s3 = inlined_call_operand.vmem [shape: bf16[20,10], index: 3, kind: input, shape index: {}]
  %s4 = inlined_call_operand.vmem [shape: bf16[20,10], index: 4, kind: input, shape index: {}]
  %s5 = inlined_call_operand.vmem [shape: bf16[10,20], index: 5, kind: input, shape index: {}]
  %s6 = inlined_call_operand.vmem [shape: bf16[10,2], index: 6, kind: input, shape index: {}]
  %s7 = inlined_call_operand.vmem [shape: bf16[2,10], index: 7, kind: input, shape index: {}]
  %s8 = inlined_call_operand.hbm [shape: f32[400,256], index: 8, kind: input, shape index: {}]
  %s9 = inlined_call_operand.vmem [shape: f32[368,32], index: 9, kind: input, shape index: {}]
  %s10 = inlined_call_operand.hbm [shape: f32[240,384], index: 10, kind: input, shape index: {}]
  %s11 = inlined_call_operand.hbm [shape: f32[2,4], index: 11, kind: output, shape index: {}]
  %s12 = sld [smem:[#allocation0]]
  $region62: #{tpu_custom_call.1} parent=0
    _
  %s14 = ssub.s32 1, %s12
  %s15 = scalar_select 0, %s14, %s12
  $region1: #{tpu_custom_call.1} parent=0
    #allocation2 [shape = 'u8[409600]{0}', space=vmem, size = 0x64000, scoped, tag = 'input window, operand 8, single buffered']
    #allocation3 [shape = 's32[1]{0}', space=sflag, size = 0x4, scoped, tag = 'scoped memory for tpu_custom_call.1']
    #allocation4 [shape = 's32[1]{0}', space=sflag, size = 0x4, scoped, tag = 'scoped memory for tpu_custom_call.1']
    #allocation5 [shape = 'u8[368640]{0}', space=vmem, size = 0x5a000, scoped, tag = 'input window, operand 10, single buffered']
    #allocation6 [shape = 's32[1]{0}', space=sflag, size = 0x4, scoped, tag = 'scoped memory for tpu_custom_call.1']
    #allocation7 [shape = 'u8[1024]{0}', space=vmem, size = 0x400, scoped, tag = 'output window, operand 0, single buffered']
    %16 = vsyncpa [#allocation3], 0
    %17 = vsyncpa [#allocation6], 0
    %18 = vsyncpa [#allocation4], 0
    // Predicated region
    $region2: #{tpu_custom_call.1} parent=1 // pred_check
      _
    $region3: #{tpu_custom_call.1} parent=1 // pred_check_branch
      %20 = sbr.rel (0) target = $region5
    $region4: #{tpu_custom_call.1} parent=1 // pred_region
      _
    $region5: #{tpu_custom_call.1} parent=1 // pred_fallthru
      _
    // Predicated region
    $region6: #{tpu_custom_call.1} parent=1 // pred_check
      _
    $region7: #{tpu_custom_call.1} parent=1 // pred_check_branch
      %22 = sbr.rel (0) target = $region9
    $region8: #{tpu_custom_call.1} parent=1 // pred_region
      _
    $region9: #{tpu_custom_call.1} parent=1 // pred_fallthru
      _
    // Predicated region
    $region10: #{tpu_custom_call.1} parent=1 // pred_check
      _
    $region11: #{tpu_custom_call.1} parent=1 // pred_check_branch
      %24 = sbr.rel (0) target = $region13
    $region12: #{tpu_custom_call.1} parent=1 // pred_region
      _
    $region13: #{tpu_custom_call.1} parent=1 // pred_fallthru
      _
    // Predicated region
    $region14: #{tpu_custom_call.1} parent=1 // pred_check
      _
    $region15: #{tpu_custom_call.1} parent=1 // pred_check_branch
      %26 = sbr.rel (0) target = $region17
    $region16: #{tpu_custom_call.1} parent=1 // pred_region
      _
    $region17: #{tpu_custom_call.1} parent=1 // pred_fallthru
      _
    // Predicated region
    $region18: #{tpu_custom_call.1} parent=1 // pred_check
      _
    $region19: #{tpu_custom_call.1} parent=1 // pred_check_branch
      %28 = sbr.rel (0) target = $region21
    $region20: #{tpu_custom_call.1} parent=1 // pred_region
      _
    $region21: #{tpu_custom_call.1} parent=1 // pred_fallthru
      _
    // Predicated region
    $region22: #{tpu_custom_call.1} parent=1 // pred_check
      _
    $region23: #{tpu_custom_call.1} parent=1 // pred_check_branch
      %30 = sbr.rel (0) target = $region25
    $region24: #{tpu_custom_call.1} parent=1 // pred_region
      _
    $region25: #{tpu_custom_call.1} parent=1 // pred_fallthru
      _
    // Predicated region
    $region26: #{tpu_custom_call.1} parent=1 // pred_check
      _
    $region27: #{tpu_custom_call.1} parent=1 // pred_check_branch
      %32 = sbr.rel (0) target = $region29
    $region28: #{tpu_custom_call.1} parent=1 // pred_region
      _
    $region29: #{tpu_custom_call.1} parent=1 // pred_fallthru
      _
    // Predicated region
    $region30: #{tpu_custom_call.1} parent=1 // pred_check
      _
    $region31: #{tpu_custom_call.1} parent=1 // pred_check_branch
      %34 = sbr.rel (0) target = $region33
    $region32: #{tpu_custom_call.1} parent=1 // pred_region
      _
    $region33: #{tpu_custom_call.1} parent=1 // pred_fallthru
      _
    // Predicated region
    $region34: #{tpu_custom_call.1} parent=1 // pred_check
      _
    $region35: #{tpu_custom_call.1} parent=1 // pred_check_branch
      %36 = sbr.rel (0) target = $region37
    $region36: #{tpu_custom_call.1} parent=1 // pred_region
      %38 = vsyncadd [#allocation3], 0
      %s39 = sshll.u32 %s8, 4
      %s40 = int_to_ptr.hbm [resolvable:$true] %s39
      %s41 = sshll.u32 [#allocation2], 4
      %s42 = int_to_ptr.vmem [resolvable:$true] %s41
      %47 = dma.hbm_to_vmem [thread:$0]  %s40, 12800, %s42, [#allocation3], 256, 256, 16
    $region37: #{tpu_custom_call.1} parent=1 // pred_fallthru
      _
    // Predicated region
    $region38: #{tpu_custom_call.1} parent=1 // pred_check
      _
    $region39: #{tpu_custom_call.1} parent=1 // pred_check_branch
      %49 = sbr.rel (0) target = $region41
    $region40: #{tpu_custom_call.1} parent=1 // pred_region
      _
    $region41: #{tpu_custom_call.1} parent=1 // pred_fallthru
      _
    // Predicated region
    $region42: #{tpu_custom_call.1} parent=1 // pred_check
      _
    $region43: #{tpu_custom_call.1} parent=1 // pred_check_branch
      %51 = sbr.rel (0) target = $region45
    $region44: #{tpu_custom_call.1} parent=1 // pred_region
      %53 = vsyncadd [#allocation6], 0
      %s54 = sshll.u32 %s10, 4
      %s55 = int_to_ptr.hbm [resolvable:$true] %s54
      %s56 = sshll.u32 [#allocation5], 4
      %s57 = int_to_ptr.vmem [resolvable:$true] %s56
      %62 = dma.hbm_to_vmem [thread:$0]  %s55, 11520, %s57, [#allocation6], 384, 384, 24
    $region45: #{tpu_custom_call.1} parent=1 // pred_fallthru
      _
    // Predicated region
    $region46: #{tpu_custom_call.1} parent=1 // pred_check
      _
    $region47: #{tpu_custom_call.1} parent=1 // pred_check_branch
      %64 = sbr.rel (0) target = $region49
    $region48: #{tpu_custom_call.1} parent=1 // pred_region
      %66 = dma.done [#allocation3], 12800
    $region49: #{tpu_custom_call.1} parent=1 // pred_fallthru
      _
    // Predicated region
    $region50: #{tpu_custom_call.1} parent=1 // pred_check
      _
    $region51: #{tpu_custom_call.1} parent=1 // pred_check_branch
      %68 = sbr.rel (0) target = $region53
    $region52: #{tpu_custom_call.1} parent=1 // pred_region
      %70 = dma.done [#allocation6], 11520
    $region53: #{tpu_custom_call.1} parent=1 // pred_fallthru
      _
    %v72 = vld [vmem:[%s3] sm:$0xf]
    %v73 = vld [vmem:[%s3 + $0x4] sm:$0xf]
    %v74 = vld [vmem:[%s3 + $0x8] sm:$0x3]
    %v75 = vld [vmem:[%s4] sm:$0xf]
    %v76 = vld [vmem:[%s4 + $0x4] sm:$0xf]
    %v77 = vld [vmem:[%s4 + $0x8] sm:$0x3]
    %v78 = vld [vmem:[%s5] sm:$0xf]
    %v79 = vld [vmem:[%s5 + $0x4] sm:$0x1]
    %v80 = vld [vmem:[%s6] sm:$0xf]
    %v81 = vld [vmem:[%s6 + $0x4] sm:$0x1]
    %v82 = vld [vmem:[%s7] sm:$0x1]
    %v83 = vld [vmem:[%s0] sm:$0x3]
    %v84 = vld [vmem:[#allocation2] sm:$0xff]
    %v85 = vld [vmem:[#allocation2 + $0x10] sm:$0xff]
    %v86 = vpack.c.bf16 %v83, %v83
    %v87 = vpack.c.bf16 %v85, %v84
    %v88 = vld [vmem:[#allocation2 + $0x20] ss:$0 sm:$0xff]
    %vm89 = vcmask 130048
    %v91 = vsel %vm89, %v86, 0
    %93 = vmatpush.bf16.msra.mxu0 0
    %94 = vmatpush.bf16.msra.mxu0 0
    %95 = vmatpush.bf16.msra.mxu0 0
    %96 = vmatpush.bf16.msra.mxu0 0
    %97 = vmatpush.bf16.msra.mxu0 0
    %98 = vmatpush.bf16.msra.mxu0 0
    %99 = vmatpush.bf16.msra.mxu0 0
    %100 = vmatpush.bf16.msra.mxu0 %v87
    %101 = vmatmul.bf16.gmra.mxu0 %v91
    %v102 = vpop.f32.mrf.mxu0
    %v103 = vadd.f32 %v88, %v102
    %v104 = vpop.f32.mrf.mxu0
    %105 = vdwg.mxu0
    %v106 = vmax.f32 %v103, 0.0
    %v107 = vld [vmem:[#allocation2 + $0x30] sm:$0xff]
    %v108 = vld [vmem:[#allocation2 + $0x38] sm:$0xff]
    %v109 = vld [vmem:[#allocation2 + $0x40] sm:$0xff]
    %v110 = vld [vmem:[#allocation2 + $0x48] sm:$0xff]
    %v111 = vld [vmem:[#allocation2 + $0x50] sm:$0xff]
    %v112 = vld [vmem:[#allocation2 + $0x58] sm:$0xff]
    %v113 = vld [vmem:[#allocation2 + $0x60] sm:$0xff]
    %v114 = vld [vmem:[#allocation2 + $0x68] sm:$0xff]
    %v115 = vpack.c.bf16 %v106, %v106
    %v116 = vpack.c.bf16 %v109, %v107
    %v117 = vpack.c.bf16 %v110, %v108
    %v118 = vpack.c.bf16 %v113, %v111
    %v119 = vpack.c.bf16 %v114, %v112
    %s120 = scalar_lea.vmem [#allocation2], 112
    %v121 = vld [vmem:[%s120] ss:$8 sm:$0x3]
    %v123 = vperm.slane %v121, 0
    %v124 = vperm.slane %v121, 1
    %vm127 = vcmask 261120
    %v129 = vsel %vm127, %v115, 0
    %131 = vmatpush.bf16.msra.mxu0 0
    %132 = vmatpush.bf16.msra.mxu0 0
    %133 = vmatpush.bf16.msra.mxu0 0
    %134 = vmatpush.bf16.msra.mxu0 0
    %135 = vmatpush.bf16.msra.mxu0 0
    %136 = vmatpush.bf16.msra.mxu0 0
    %137 = vmatpush.bf16.msra.mxu0 %v118
    %138 = vmatpush.bf16.msra.mxu0 %v116
    %139 = vmatmul.bf16.gmra.mxu0 %v129
    %v140 = vpop.f32.mrf.mxu0
    %v141 = vadd.f32 %v123, %v140
    %v142 = vpop.f32.mrf.mxu0
    %143 = vdwg.mxu0
    %144 = vmatpush.bf16.msra.mxu0 0
    %145 = vmatpush.bf16.msra.mxu0 0
    %146 = vmatpush.bf16.msra.mxu0 0
    %147 = vmatpush.bf16.msra.mxu0 0
    %148 = vmatpush.bf16.msra.mxu0 0
    %149 = vmatpush.bf16.msra.mxu0 0
    %150 = vmatpush.bf16.msra.mxu0 %v119
    %151 = vmatpush.bf16.msra.mxu0 %v117
    %152 = vmatmul.bf16.gmra.mxu0 %v129
    %v153 = vpop.f32.mrf.mxu0
    %v154 = vadd.f32 %v124, %v153
    %v155 = vpop.f32.mrf.mxu0
    %156 = vdwg.mxu0
    %v157 = vmax.f32 %v141, 0.0
    %v158 = vmax.f32 %v154, 0.0
    %v159 = vld [vmem:[#allocation2 + $0x80] sm:$0xff]
    %v160 = vld [vmem:[#allocation2 + $0x90] sm:$0xff]
    %v161 = vld [vmem:[#allocation2 + $0xa0] sm:$0xff]
    %v162 = vld [vmem:[#allocation2 + $0xb0] sm:$0xff]
    %v163 = vld [vmem:[#allocation2 + $0xc0] sm:$0xff]
    %v164 = vld [vmem:[#allocation2 + $0xd0] sm:$0xff]
    %v165 = vld [vmem:[#allocation2 + $0xe0] sm:$0xff]
    %v166 = vld [vmem:[#allocation2 + $0xf0] sm:$0xff]
    %v167 = vld [vmem:[#allocation2 + $0x100] sm:$0xff]
    %v168 = vld [vmem:[#allocation2 + $0x110] sm:$0xff]
    %v169 = vld [vmem:[#allocation2 + $0x120] sm:$0xff]
    %v170 = vld [vmem:[#allocation2 + $0x130] sm:$0xff]
    %v171 = vld [vmem:[#allocation2 + $0x140] sm:$0xff]
    %v172 = vld [vmem:[#allocation2 + $0x150] sm:$0xff]
    %v173 = vld [vmem:[#allocation2 + $0x160] sm:$0xff]
    %v174 = vld [vmem:[#allocation2 + $0x170] sm:$0xff]
    %v175 = vld [vmem:[#allocation2 + $0x180] sm:$0xff]
    %v176 = vld [vmem:[#allocation2 + $0x190] sm:$0xff]
    %v177 = vld [vmem:[#allocation2 + $0x1a0] sm:$0xff]
    %v178 = vld [vmem:[#allocation2 + $0x1b0] sm:$0xff]
    %v179 = vld [vmem:[#allocation2 + $0x1c0] sm:$0xff]
    %v180 = vld [vmem:[#allocation2 + $0x1d0] sm:$0xff]
    %v181 = vld [vmem:[#allocation2 + $0x1e0] sm:$0xff]
    %v182 = vld [vmem:[#allocation2 + $0x1f0] sm:$0xff]
    %v183 = vld [vmem:[#allocation2 + $0x200] sm:$0xff]
    %v184 = vld [vmem:[#allocation2 + $0x210] sm:$0xff]
    %v185 = vld [vmem:[#allocation2 + $0x220] sm:$0xff]
    %v186 = vld [vmem:[#allocation2 + $0x230] sm:$0xff]
    %v187 = vld [vmem:[#allocation2 + $0x240] sm:$0xff]
    %v188 = vld [vmem:[#allocation2 + $0x250] sm:$0xff]
    %v189 = vld [vmem:[#allocation2 + $0x260] sm:$0xff]
    %v190 = vld [vmem:[#allocation2 + $0x270] sm:$0xff]
    %v191 = vpack.c.bf16 %v157, %v157
    %v192 = vpack.c.bf16 %v158, %v158
    %v193 = vpack.c.bf16 %v160, %v159
    %v194 = vpack.c.bf16 %v162, %v161
    %v195 = vpack.c.bf16 %v164, %v163
    %v196 = vpack.c.bf16 %v166, %v165
    %v197 = vpack.c.bf16 %v168, %v167
    %v198 = vpack.c.bf16 %v170, %v169
    %v199 = vpack.c.bf16 %v172, %v171
    %v200 = vpack.c.bf16 %v174, %v173
    %v201 = vpack.c.bf16 %v176, %v175
    %v202 = vpack.c.bf16 %v178, %v177
    %v203 = vpack.c.bf16 %v180, %v179
    %v204 = vpack.c.bf16 %v182, %v181
    %v205 = vpack.c.bf16 %v184, %v183
    %v206 = vpack.c.bf16 %v186, %v185
    %v207 = vpack.c.bf16 %v188, %v187
    %v208 = vpack.c.bf16 %v190, %v189
    %v209 = vld [vmem:[#allocation2 + $0x280] ss:$0 sm:$0xff]
    %210 = vmatpush.bf16.msra.mxu0 %v200
    %211 = vmatpush.bf16.msra.mxu0 %v199
    %212 = vmatpush.bf16.msra.mxu0 %v198
    %213 = vmatpush.bf16.msra.mxu0 %v197
    %214 = vmatpush.bf16.msra.mxu0 %v196
    %215 = vmatpush.bf16.msra.mxu0 %v195
    %216 = vmatpush.bf16.msra.mxu0 %v194
    %217 = vmatpush.bf16.msra.mxu0 %v193
    %218 = vmatmul.bf16.gmra.mxu0 %v191
    %v219 = vpop.f32.mrf.mxu0
    %v220 = vadd.f32 %v209, %v219
    %v221 = vpop.f32.mrf.mxu0
    %222 = vdwg.mxu0
    %223 = vmatpush.bf16.msra.mxu0 %v208
    %224 = vmatpush.bf16.msra.mxu0 %v207
    %225 = vmatpush.bf16.msra.mxu0 %v206
    %226 = vmatpush.bf16.msra.mxu0 %v205
    %227 = vmatpush.bf16.msra.mxu0 %v204
    %228 = vmatpush.bf16.msra.mxu0 %v203
    %229 = vmatpush.bf16.msra.mxu0 %v202
    %230 = vmatpush.bf16.msra.mxu0 %v201
    %231 = vmatmul.bf16.gmra.mxu0 %v192
    %v232 = vpop.f32.mrf.mxu0
    %v233 = vadd.f32 %v220, %v232
    %v234 = vpop.f32.mrf.mxu0
    %235 = vdwg.mxu0
    %v236 = vmax.f32 %v233, 0.0
    %v237 = vld [vmem:[#allocation2 + $0x290] sm:$0xff]
    %v238 = vld [vmem:[#allocation2 + $0x2a0] sm:$0xff]
    %v239 = vld [vmem:[#allocation2 + $0x2b0] sm:$0xff]
    %v240 = vld [vmem:[#allocation2 + $0x2c0] sm:$0xff]
    %v241 = vld [vmem:[#allocation2 + $0x2d0] sm:$0xff]
    %v242 = vld [vmem:[#allocation2 + $0x2e0] sm:$0xff]
    %v243 = vld [vmem:[#allocation2 + $0x2f0] sm:$0xff]
    %v244 = vld [vmem:[#allocation2 + $0x300] sm:$0xff]
    %v245 = vpack.c.bf16 %v236, %v236
    %v246 = vpack.c.bf16 %v238, %v237
    %v247 = vpack.c.bf16 %v240, %v239
    %v248 = vpack.c.bf16 %v242, %v241
    %v249 = vpack.c.bf16 %v244, %v243
    %v250 = vld [vmem:[#allocation2 + $0x310] ss:$0 sm:$0xff]
    %vm251 = vcmask 523264
    %v253 = vsel %vm251, %v245, 0
    %255 = vmatpush.bf16.msra.mxu0 0
    %256 = vmatpush.bf16.msra.mxu0 0
    %257 = vmatpush.bf16.msra.mxu0 0
    %258 = vmatpush.bf16.msra.mxu0 0
    %259 = vmatpush.bf16.msra.mxu0 %v249
    %260 = vmatpush.bf16.msra.mxu0 %v248
    %261 = vmatpush.bf16.msra.mxu0 %v247
    %262 = vmatpush.bf16.msra.mxu0 %v246
    %263 = vmatmul.bf16.gmra.mxu0 %v253
    %v264 = vpop.f32.mrf.mxu0
    %v265 = vadd.f32 %v250, %v264
    %v266 = vpop.f32.mrf.mxu0
    %267 = vdwg.mxu0
    %v268 = vmax.f32 %v265, 0.0
    %v269 = vld [vmem:[%s1] sm:$0xff]
    %v270 = vld [vmem:[%s1 + $0x8] sm:$0x3]
    %v271 = vld [vmem:[%s9] sm:$0xff]
    %v272 = vpack.c.bf16 %v270, %v269
    %v273 = vpack.c.bf16 %v271, %v271
    %v274 = vld [vmem:[%s9 + $0x8] sm:$0x1]
    %v275 = vperm.slane %v274, 0
    %vm276 = vcmask 64512
    %v278 = vsel %vm276, %v272, 0
    %vm280 = vcmask 1043456
    %v282 = vsel %vm280, %v273, 0
    %284 = vmatpush.bf16.msra.mxu0 0
    %285 = vmatpush.bf16.msra.mxu0 0
    %286 = vmatpush.bf16.msra.mxu0 0
    %287 = vmatpush.bf16.msra.mxu0 0
    %288 = vmatpush.bf16.msra.mxu0 0
    %289 = vmatpush.bf16.msra.mxu0 0
    %290 = vmatpush.bf16.msra.mxu0 0
    %291 = vmatpush.bf16.msra.mxu0 %v282
    %292 = vmatmul.bf16.gmra.mxu0 %v278
    %v293 = vpop.f32.mrf.mxu0
    %v294 = vadd.f32 %v275, %v293
    %v295 = vpop.f32.mrf.mxu0
    %v296 = vadd.f32 %v275, %v295
    %297 = vdwg.mxu0
    %vm298 = vcmp.gt.f32.partialorder %v294, 0.0
    %vm299 = vcmp.gt.f32.partialorder %v296, 0.0
    %v300 = vmul.f32 %v294, 0.01
    %v301 = vmul.f32 %v296, 0.01
    %v302 = vsel %vm298, %v294, %v300
    %v303 = vsel %vm299, %v296, %v301
    %v304 = vpack.c.bf16 %v303, %v302
    %v308 = vunpack.c.l.b16 %v72
    %v309 = vunpack.c.l.b16 %v73
    %v310 = vunpack.c.l.b16 %v74
    %v311 = vpack.c.b16 %v309, %v308
    %v312 = vpack.c.b16 %v310, %v310
    %vm313 = vcmask 80896
    %v315 = vsel %vm313, %v311, 0
    %v318 = vsel %vm313, %v312, 0
    %vm320 = vcmask 1044480
    %v322 = vsel %vm320, %v304, 0
    %324 = vmatpush.bf16.msra.mxu0 0
    %325 = vmatpush.bf16.msra.mxu0 0
    %326 = vmatpush.bf16.msra.mxu0 0
    %327 = vmatpush.bf16.msra.mxu0 0
    %328 = vmatpush.bf16.msra.mxu0 0
    %329 = vmatpush.bf16.msra.mxu0 0
    %330 = vmatpush.bf16.msra.mxu0 0
    %331 = vmatpush.bf16.msra.mxu0 %v322
    %332 = vmatmul.bf16.gmra.mxu0 %v315
    %v333 = vpop.f32.mrf.mxu0
    %v334 = vadd.f32 0.0, %v333
    %v335 = vpop.f32.mrf.mxu0
    %v336 = vadd.f32 0.0, %v335
    %337 = vmatmul.bf16.gmra.mxu0 %v318
    %v338 = vpop.f32.mrf.mxu0
    %v339 = vadd.f32 0.0, %v338
    %v340 = vpop.f32.mrf.mxu0
    %341 = vdwg.mxu0
    %v342 = vld [vmem:[%s9 + $0x10] sm:$0xff]
    %v343 = vld [vmem:[%s9 + $0x18] sm:$0xff]
    %v344 = vld [vmem:[%s9 + $0x20] sm:$0xff]
    %v345 = vld [vmem:[%s9 + $0x28] sm:$0xff]
    %v346 = vpack.c.bf16 %v336, %v334
    %v347 = vpack.c.bf16 %v339, %v339
    %v348 = vpack.c.bf16 %v343, %v342
    %v349 = vpack.c.bf16 %v345, %v344
    %v350 = vld [vmem:[%s2] sm:$0xff]
    %v351 = vld [vmem:[%s2 + $0x8] sm:$0xff]
    %v352 = vld [vmem:[%s2 + $0x10] sm:$0xf]
    %v353 = vld [vmem:[%s9 + $0x30] sm:$0x3f]
    %v354 = vpack.c.bf16 %v351, %v350
    %v355 = vpack.c.bf16 %v352, %v352
    %v356 = vpack.c.bf16 %v353, %v353
    %vm357 = vcmask 48128
    %v359 = vsel %vm357, %v354, 0
    %v362 = vsel %vm357, %v355, 0
    %vm364 = vcmask 1042432
    %v366 = vsel %vm364, %v356, 0
    %368 = vmatpush.bf16.msra.mxu0 0
    %369 = vmatpush.bf16.msra.mxu0 0
    %370 = vmatpush.bf16.msra.mxu0 0
    %371 = vmatpush.bf16.msra.mxu0 0
    %372 = vmatpush.bf16.msra.mxu0 0
    %373 = vmatpush.bf16.msra.mxu0 0
    %374 = vmatpush.bf16.msra.mxu0 0
    %375 = vmatpush.bf16.msra.mxu0 %v366
    %376 = vmatmul.bf16.gmra.mxu0 %v359
    %v377 = vpop.f32.mrf.mxu0
    %v378 = vadd.f32 0.0, %v377
    %v379 = vpop.f32.mrf.mxu0
    %v380 = vadd.f32 0.0, %v379
    %381 = vmatmul.bf16.gmra.mxu0 %v362
    %v382 = vpop.f32.mrf.mxu0
    %v383 = vadd.f32 0.0, %v382
    %v384 = vpop.f32.mrf.mxu0
    %385 = vdwg.mxu0
    %v387 = vsel %vm127, %v346, 0
    %v390 = vsel %vm127, %v347, 0
    %392 = vmatpush.bf16.msra.mxu0 0
    %393 = vmatpush.bf16.msra.mxu0 0
    %394 = vmatpush.bf16.msra.mxu0 0
    %395 = vmatpush.bf16.msra.mxu0 0
    %396 = vmatpush.bf16.msra.mxu0 0
    %397 = vmatpush.bf16.msra.mxu0 0
    %398 = vmatpush.bf16.msra.mxu0 %v349
    %399 = vmatpush.bf16.msra.mxu0 %v348
    %400 = vmatmul.bf16.gmra.mxu0 %v387
    %v401 = vpop.f32.mrf.mxu0
    %v402 = vadd.f32 %v378, %v401
    %v403 = vpop.f32.mrf.mxu0
    %v404 = vadd.f32 %v380, %v403
    %405 = vmatmul.bf16.gmra.mxu0 %v390
    %v406 = vpop.f32.mrf.mxu0
    %v407 = vadd.f32 %v383, %v406
    %v408 = vpop.f32.mrf.mxu0
    %409 = vdwg.mxu0
    %vm410 = vcmp.gt.f32.partialorder %v402, 0.0
    %vm411 = vcmp.gt.f32.partialorder %v404, 0.0
    %vm412 = vcmp.gt.f32.partialorder %v407, 0.0
    %v413 = vmul.f32 %v402, 0.01
    %v414 = vmul.f32 %v404, 0.01
    %v415 = vmul.f32 %v407, 0.01
    %v416 = vsel %vm410, %v402, %v413
    %v417 = vsel %vm411, %v404, %v414
    %v418 = vsel %vm412, %v407, %v415
    %v419 = vld [vmem:[%s9 + $0x78] sm:$0xff]
    %v420 = vld [vmem:[%s9 + $0x80] sm:$0xff]
    %v421 = vld [vmem:[%s9 + $0x88] sm:$0xff]
    %v422 = vld [vmem:[%s9 + $0x90] sm:$0xff]
    %v423 = vpack.c.bf16 %v420, %v419
    %v424 = vpack.c.bf16 %v422, %v421
    %v425 = vsel %vm127, %v304, 0
    %427 = vmatpush.bf16.msra.mxu0 0
    %428 = vmatpush.bf16.msra.mxu0 0
    %429 = vmatpush.bf16.msra.mxu0 0
    %430 = vmatpush.bf16.msra.mxu0 0
    %431 = vmatpush.bf16.msra.mxu0 0
    %432 = vmatpush.bf16.msra.mxu0 0
    %433 = vmatpush.bf16.msra.mxu0 %v424
    %434 = vmatpush.bf16.msra.mxu0 %v423
    %435 = vmatmul.bf16.gmra.mxu0 %v425
    %v436 = vpop.f32.mrf.mxu0
    %v437 = vadd.f32 0.0, %v436
    %v438 = vpop.f32.mrf.mxu0
    %v439 = vadd.f32 0.0, %v438
    %440 = vdwg.mxu0
    %v441 = vld [vmem:[%s9 + $0x58] sm:$0xff]
    %v442 = vld [vmem:[%s9 + $0x60] sm:$0xff]
    %v443 = vld [vmem:[%s9 + $0x68] sm:$0xff]
    %v444 = vld [vmem:[%s9 + $0x70] sm:$0xff]
    %v445 = vpack.c.bf16 %v417, %v416
    %v446 = vpack.c.bf16 %v418, %v418
    %v447 = vpack.c.bf16 %v442, %v441
    %v448 = vpack.c.bf16 %v444, %v443
    %v449 = vpack.c.bf16 %v439, %v437
    %v453 = vunpack.c.l.b16 %v75
    %v454 = vunpack.c.l.b16 %v76
    %v455 = vunpack.c.l.b16 %v77
    %v456 = vpack.c.b16 %v454, %v453
    %v457 = vpack.c.b16 %v455, %v455
    %v459 = vsel %vm313, %v456, 0
    %v462 = vsel %vm313, %v457, 0
    %v465 = vsel %vm320, %v449, 0
    %467 = vmatpush.bf16.msra.mxu0 0
    %468 = vmatpush.bf16.msra.mxu0 0
    %469 = vmatpush.bf16.msra.mxu0 0
    %470 = vmatpush.bf16.msra.mxu0 0
    %471 = vmatpush.bf16.msra.mxu0 0
    %472 = vmatpush.bf16.msra.mxu0 0
    %473 = vmatpush.bf16.msra.mxu0 0
    %474 = vmatpush.bf16.msra.mxu0 %v465
    %475 = vmatmul.bf16.gmra.mxu0 %v459
    %v476 = vpop.f32.mrf.mxu0
    %v477 = vadd.f32 0.0, %v476
    %v478 = vpop.f32.mrf.mxu0
    %v479 = vadd.f32 0.0, %v478
    %480 = vmatmul.bf16.gmra.mxu0 %v462
    %v481 = vpop.f32.mrf.mxu0
    %v482 = vadd.f32 0.0, %v481
    %v483 = vpop.f32.mrf.mxu0
    %484 = vdwg.mxu0
    %v486 = vsel %vm127, %v445, 0
    %v489 = vsel %vm127, %v446, 0
    %491 = vmatpush.bf16.msra.mxu0 0
    %492 = vmatpush.bf16.msra.mxu0 0
    %493 = vmatpush.bf16.msra.mxu0 0
    %494 = vmatpush.bf16.msra.mxu0 0
    %495 = vmatpush.bf16.msra.mxu0 0
    %496 = vmatpush.bf16.msra.mxu0 0
    %497 = vmatpush.bf16.msra.mxu0 %v448
    %498 = vmatpush.bf16.msra.mxu0 %v447
    %499 = vmatmul.bf16.gmra.mxu0 %v486
    %v500 = vpop.f32.mrf.mxu0
    %v501 = vadd.f32 %v477, %v500
    %v502 = vpop.f32.mrf.mxu0
    %v503 = vadd.f32 %v479, %v502
    %504 = vmatmul.bf16.gmra.mxu0 %v489
    %v505 = vpop.f32.mrf.mxu0
    %v506 = vadd.f32 %v482, %v505
    %v507 = vpop.f32.mrf.mxu0
    %508 = vdwg.mxu0
    %vm509 = vcmp.gt.f32.partialorder %v501, 0.0
    %vm510 = vcmp.gt.f32.partialorder %v503, 0.0
    %vm511 = vcmp.gt.f32.partialorder %v506, 0.0
    %v512 = vmul.f32 %v501, 0.01
    %v513 = vmul.f32 %v503, 0.01
    %v514 = vmul.f32 %v506, 0.01
    %v515 = vsel %vm509, %v501, %v512
    %v516 = vsel %vm510, %v503, %v513
    %v517 = vsel %vm511, %v506, %v514
    %v518 = vld [vmem:[%s9 + $0x38] sm:$0xff]
    %v519 = vld [vmem:[%s9 + $0x40] sm:$0xff]
    %v520 = vld [vmem:[%s9 + $0x48] sm:$0xff]
    %v521 = vld [vmem:[%s9 + $0x50] sm:$0xff]
    %v522 = vpack.c.bf16 %v519, %v518
    %v523 = vpack.c.bf16 %v521, %v520
    %524 = vmatpush.bf16.msra.mxu0 0
    %525 = vmatpush.bf16.msra.mxu0 0
    %526 = vmatpush.bf16.msra.mxu0 0
    %527 = vmatpush.bf16.msra.mxu0 0
    %528 = vmatpush.bf16.msra.mxu0 0
    %529 = vmatpush.bf16.msra.mxu0 0
    %530 = vmatpush.bf16.msra.mxu0 %v523
    %531 = vmatpush.bf16.msra.mxu0 %v522
    %532 = vmatmul.bf16.gmra.mxu0 %v387
    %v533 = vpop.f32.mrf.mxu0
    %v534 = vadd.f32 0.0, %v533
    %v535 = vpop.f32.mrf.mxu0
    %v536 = vadd.f32 0.0, %v535
    %537 = vmatmul.bf16.gmra.mxu0 %v390
    %v538 = vpop.f32.mrf.mxu0
    %v539 = vadd.f32 0.0, %v538
    %v540 = vpop.f32.mrf.mxu0
    %541 = vdwg.mxu0
    %542 = vxpose.xlu0.b32.start [1/16] %v515, 128
    %543 = vxpose.xlu0.b32.cont [2/16] %v516, 128
    %544 = vxpose.xlu0.b32.cont [3/16] %v517, 128
    %545 = vxpose.xlu0.b32.cont [4/16] 0.0, 128
    %546 = vxpose.xlu0.b32.cont [5/16] 0.0, 128
    %547 = vxpose.xlu0.b32.cont [6/16] 0.0, 128
    %548 = vxpose.xlu0.b32.cont [7/16] 0.0, 128
    %549 = vxpose.xlu0.b32.cont [8/16] 0.0, 128
    %550 = vxpose.xlu0.b32.cont [9/16] 0.0, 128
    %551 = vxpose.xlu0.b32.cont [10/16] 0.0, 128
    %552 = vxpose.xlu0.b32.cont [11/16] 0.0, 128
    %553 = vxpose.xlu0.b32.cont [12/16] 0.0, 128
    %554 = vxpose.xlu0.b32.cont [13/16] 0.0, 128
    %555 = vxpose.xlu0.b32.cont [14/16] 0.0, 128
    %556 = vxpose.xlu0.b32.cont [15/16] 0.0, 128
    %557 = vxpose.xlu0.b32.end [16/16] 0.0, 128
    %v558 = vpop.trf.xlu0
    %v559 = vpop.trf.xlu0
    %v560 = vpop.trf.xlu0
    %v561 = vpop.trf.xlu0
    %v562 = vpop.trf.xlu0
    %v563 = vpop.trf.xlu0
    %v564 = vpop.trf.xlu0
    %v565 = vpop.trf.xlu0
    %v566 = vpop.trf.xlu0
    %v567 = vpop.trf.xlu0
    %v568 = vpop.trf.xlu0
    %v569 = vpop.trf.xlu0
    %v570 = vpop.trf.xlu0
    %v571 = vpop.trf.xlu0
    %v572 = vpop.trf.xlu0
    %v573 = vpop.trf.xlu0
    %v574 = vunpack.c.l.bf16 %v78
    %v575 = vunpack.c.l.bf16 %v79
    %vm576 = vcmp.gt.f32.partialorder %v574, 0.5
    %vm577 = vcmp.gt.f32.partialorder %v575, 0.5
    %v578 = vperm.slane %v558, 0
    %v579 = vsel %vm576, %v578, -1e+30
    %v580 = vsel %vm577, %v578, -1e+30
    %vm581 = vcmask 162816
    %v582 = vsel %vm581, %v579, -inf
    %583 = vmax.xlane.f32.xlu0 %v582
    %v584 = vpop.xlane.xlu0 %583
    %vm585 = vcmask 156672
    %v586 = vsel %vm585, %v580, -inf
    %587 = vmax.xlane.f32.xlu0 %v586
    %v588 = vpop.xlane.xlu0 %587
    %v589 = vpack.c.bf16 %v588, %v584
    %v591 = vsel %vm320, %v589, 0
    %593 = vmatpush.bf16.msra.mxu0 0
    %594 = vmatpush.bf16.msra.mxu0 0
    %595 = vmatpush.bf16.msra.mxu0 0
    %596 = vmatpush.bf16.msra.mxu0 0
    %597 = vmatpush.bf16.msra.mxu0 0
    %598 = vmatpush.bf16.msra.mxu0 0
    %599 = vmatpush.bf16.msra.mxu0 0
    %600 = vmatpush.bf16.msra.mxu0 %v591
    %601 = vmatmul.bf16.gmra.mxu0 %v459
    %v602 = vpop.f32.mrf.mxu0
    %v603 = vadd.f32 0.0, %v602
    %v604 = vpop.f32.mrf.mxu0
    %v605 = vadd.f32 0.0, %v604
    %606 = vmatmul.bf16.gmra.mxu0 %v462
    %v607 = vpop.f32.mrf.mxu0
    %v608 = vadd.f32 0.0, %v607
    %v609 = vpop.f32.mrf.mxu0
    %610 = vdwg.mxu0
    %v611 = vsub.f32 %v515, %v603
    %v612 = vsub.f32 %v516, %v605
    %v613 = vsub.f32 %v517, %v608
    %v614 = vmul.f32 %v611, 1.442695
    %v615 = vpow.pop %v614
    %v616 = vmul.f32 %v612, 1.442695
    %v617 = vpow.pop %v616
    %v618 = vmul.f32 %v613, 1.442695
    %v619 = vpow.pop %v618
    %621 = vset.pattern.permute.xlu0 0
    %622 = vperm.xlu0 %621, %v615
    %v623 = vpop.permute.xlu0 %622
    %626 = vset.pattern.permute.xlu0 0
    %627 = vperm.xlu0 %626, %v617
    %v628 = vpop.permute.xlu0 %627
    %631 = vset.pattern.permute.xlu0 0
    %632 = vperm.xlu0 %631, %v619
    %v633 = vpop.permute.xlu0 %632
    %v635 = vmul.f32 %v534, %v623
    %v636 = vmul.f32 %v536, %v628
    %v637 = vmul.f32 %v539, %v633
    %638 = vrot.lane.b32.xlu0 %v615, 32
    %v639 = vpop.permute.xlu0 %638
    %640 = vrot.lane.b32.xlu0 %v617, 32
    %v641 = vpop.permute.xlu0 %640
    %642 = vrot.lane.b32.xlu0 %v619, 32
    %v643 = vpop.permute.xlu0 %642
    %v647 = vsel %vm127, %v635, %v639
    %v648 = vsel %vm127, %v636, %v641
    %v649 = vsel %vm127, %v637, %v643
    %v650 = vpack.c.bf16 %v648, %v647
    %v651 = vpack.c.bf16 %v649, %v649
    %v654 = vunpack.c.l.b16 %v78
    %v655 = vunpack.c.l.b16 %v79
    %v656 = vpack.c.b16 %v655, %v654
    %v658 = vsel %vm581, %v656, 0
    %vm660 = vcmask 1041408
    %v662 = vsel %vm660, %v651, 0
    %664 = vmatpush.bf16.msra.mxu0 0
    %665 = vmatpush.bf16.msra.mxu0 0
    %666 = vmatpush.bf16.msra.mxu0 0
    %667 = vmatpush.bf16.msra.mxu0 0
    %668 = vmatpush.bf16.msra.mxu0 0
    %669 = vmatpush.bf16.msra.mxu0 0
    %670 = vmatpush.bf16.msra.mxu0 %v662
    %671 = vmatpush.bf16.msra.mxu0 %v650
    %672 = vmatmul.bf16.gmra.mxu0 %v658
    %v673 = vpop.f32.mrf.mxu0
    %v674 = vadd.f32 0.0, %v673
    %v675 = vpop.f32.mrf.mxu0
    %v676 = vadd.f32 0.0, %v675
    %677 = vdwg.mxu0
    %v678 = vadd.f32 %v674, 1e-16
    %v679 = vadd.f32 %v676, 1e-16
    %v680 = vrcp.pop %v678
    %v681 = vrcp.pop %v679
    %683 = vset.pattern.permute.xlu0 32
    %684 = vperm.xlu0 %683, %v680
    %v685 = vpop.permute.xlu0 %684
    %688 = vset.pattern.permute.xlu0 32
    %689 = vperm.xlu0 %688, %v681
    %v690 = vpop.permute.xlu0 %689
    %v692 = vmul.f32 %v674, %v685
    %v693 = vmul.f32 %v676, %v690
    %v694 = vld [vmem:[%s9 + $0x98] sm:$0x1]
    %v695 = vperm.slane %v694, 0
    %v696 = vadd.f32 %v692, %v695
    %v697 = vadd.f32 %v693, %v695
    %vm698 = vcmp.gt.f32.partialorder %v696, 0.0
    %vm699 = vcmp.gt.f32.partialorder %v697, 0.0
    %v700 = vmul.f32 %v696, 1.442695
    %v701 = vpow.pop %v700
    %v702 = vmul.f32 %v697, 1.442695
    %v703 = vpow.pop %v702
    %v704 = vsub.f32 %v701, 1.0
    %v705 = vsub.f32 %v703, 1.0
    %v706 = vsel %vm698, %v696, %v704
    %v707 = vsel %vm699, %v697, %v705
    %v708 = vld [vmem:[#allocation5] sm:$0xff]
    %v709 = vld [vmem:[#allocation5 + $0x8] sm:$0xff]
    %v710 = vld [vmem:[#allocation5 + $0x10] sm:$0xff]
    %v711 = vld [vmem:[#allocation5 + $0x18] sm:$0xff]
    %v712 = vld [vmem:[#allocation5 + $0x20] sm:$0xff]
    %v713 = vld [vmem:[#allocation5 + $0x28] sm:$0xff]
    %v714 = vld [vmem:[#allocation5 + $0x30] sm:$0xff]
    %v715 = vld [vmem:[#allocation5 + $0x38] sm:$0xff]
    %v716 = vld [vmem:[#allocation5 + $0x40] sm:$0xff]
    %v717 = vld [vmem:[#allocation5 + $0x48] sm:$0xff]
    %v718 = vld [vmem:[#allocation5 + $0x50] sm:$0xff]
    %v719 = vld [vmem:[#allocation5 + $0x58] sm:$0xff]
    %v720 = vld [vmem:[#allocation5 + $0x60] sm:$0xff]
    %v721 = vld [vmem:[#allocation5 + $0x68] sm:$0xff]
    %v722 = vld [vmem:[#allocation5 + $0x70] sm:$0xff]
    %v723 = vld [vmem:[#allocation5 + $0x78] sm:$0xff]
    %v724 = vld [vmem:[#allocation5 + $0x80] sm:$0xff]
    %v725 = vld [vmem:[#allocation5 + $0x88] sm:$0xff]
    %v726 = vld [vmem:[#allocation5 + $0x90] sm:$0xff]
    %v727 = vld [vmem:[#allocation5 + $0x98] sm:$0xff]
    %v728 = vld [vmem:[#allocation5 + $0xa0] sm:$0xff]
    %v729 = vld [vmem:[#allocation5 + $0xa8] sm:$0xff]
    %v730 = vld [vmem:[#allocation5 + $0xb0] sm:$0xff]
    %v731 = vld [vmem:[#allocation5 + $0xb8] sm:$0xff]
    %s732 = scalar_lea.vmem [#allocation5], 192
    %v733 = vld [vmem:[%s732] ss:$8 sm:$0x7]
    %s734 = scalar_lea.vmem [#allocation5], 216
    %v735 = vld [vmem:[%s734] ss:$8 sm:$0x7]
    %v736 = vpack.c.bf16 %v707, %v706
    %v737 = vpack.c.bf16 %v711, %v708
    %v738 = vpack.c.bf16 %v712, %v709
    %v739 = vpack.c.bf16 %v713, %v710
    %v740 = vpack.c.bf16 %v717, %v714
    %v741 = vpack.c.bf16 %v718, %v715
    %v742 = vpack.c.bf16 %v719, %v716
    %v744 = vperm.slane %v733, 0
    %v745 = vperm.slane %v733, 1
    %v746 = vperm.slane %v733, 2
    %v751 = vsel %vm127, %v736, 0
    %753 = vmatpush.bf16.msra.mxu0 0
    %754 = vmatpush.bf16.msra.mxu0 0
    %755 = vmatpush.bf16.msra.mxu0 0
    %756 = vmatpush.bf16.msra.mxu0 0
    %757 = vmatpush.bf16.msra.mxu0 0
    %758 = vmatpush.bf16.msra.mxu0 0
    %759 = vmatpush.bf16.msra.mxu0 %v740
    %760 = vmatpush.bf16.msra.mxu0 %v737
    %761 = vmatmul.bf16.gmra.mxu0 %v751
    %v762 = vpop.f32.mrf.mxu0
    %v763 = vadd.f32 %v744, %v762
    %v764 = vpop.f32.mrf.mxu0
    %v765 = vadd.f32 %v744, %v764
    %766 = vdwg.mxu0
    %767 = vmatpush.bf16.msra.mxu0 0
    %768 = vmatpush.bf16.msra.mxu0 0
    %769 = vmatpush.bf16.msra.mxu0 0
    %770 = vmatpush.bf16.msra.mxu0 0
    %771 = vmatpush.bf16.msra.mxu0 0
    %772 = vmatpush.bf16.msra.mxu0 0
    %773 = vmatpush.bf16.msra.mxu0 %v741
    %774 = vmatpush.bf16.msra.mxu0 %v738
    %775 = vmatmul.bf16.gmra.mxu0 %v751
    %v776 = vpop.f32.mrf.mxu0
    %v777 = vadd.f32 %v745, %v776
    %v778 = vpop.f32.mrf.mxu0
    %v779 = vadd.f32 %v745, %v778
    %780 = vdwg.mxu0
    %781 = vmatpush.bf16.msra.mxu0 0
    %782 = vmatpush.bf16.msra.mxu0 0
    %783 = vmatpush.bf16.msra.mxu0 0
    %784 = vmatpush.bf16.msra.mxu0 0
    %785 = vmatpush.bf16.msra.mxu0 0
    %786 = vmatpush.bf16.msra.mxu0 0
    %787 = vmatpush.bf16.msra.mxu0 %v742
    %788 = vmatpush.bf16.msra.mxu0 %v739
    %789 = vmatmul.bf16.gmra.mxu0 %v751
    %v790 = vpop.f32.mrf.mxu0
    %v791 = vadd.f32 %v746, %v790
    %v792 = vpop.f32.mrf.mxu0
    %v793 = vadd.f32 %v746, %v792
    %794 = vdwg.mxu0
    %v795 = vpack.c.bf16 %v723, %v720
    %v796 = vpack.c.bf16 %v724, %v721
    %v797 = vpack.c.bf16 %v725, %v722
    %v798 = vpack.c.bf16 %v729, %v726
    %v799 = vpack.c.bf16 %v730, %v727
    %v800 = vpack.c.bf16 %v731, %v728
    %v802 = vperm.slane %v735, 0
    %v803 = vperm.slane %v735, 1
    %v804 = vperm.slane %v735, 2
    %808 = vmatpush.bf16.msra.mxu0 0
    %809 = vmatpush.bf16.msra.mxu0 0
    %810 = vmatpush.bf16.msra.mxu0 0
    %811 = vmatpush.bf16.msra.mxu0 0
    %812 = vmatpush.bf16.msra.mxu0 0
    %813 = vmatpush.bf16.msra.mxu0 0
    %814 = vmatpush.bf16.msra.mxu0 %v798
    %815 = vmatpush.bf16.msra.mxu0 %v795
    %816 = vmatmul.bf16.gmra.mxu0 %v425
    %v817 = vpop.f32.mrf.mxu0
    %v818 = vadd.f32 %v802, %v817
    %v819 = vpop.f32.mrf.mxu0
    %v820 = vadd.f32 %v802, %v819
    %821 = vdwg.mxu0
    %822 = vmatpush.bf16.msra.mxu0 0
    %823 = vmatpush.bf16.msra.mxu0 0
    %824 = vmatpush.bf16.msra.mxu0 0
    %825 = vmatpush.bf16.msra.mxu0 0
    %826 = vmatpush.bf16.msra.mxu0 0
    %827 = vmatpush.bf16.msra.mxu0 0
    %828 = vmatpush.bf16.msra.mxu0 %v799
    %829 = vmatpush.bf16.msra.mxu0 %v796
    %830 = vmatmul.bf16.gmra.mxu0 %v425
    %v831 = vpop.f32.mrf.mxu0
    %v832 = vadd.f32 %v803, %v831
    %v833 = vpop.f32.mrf.mxu0
    %v834 = vadd.f32 %v803, %v833
    %835 = vdwg.mxu0
    %836 = vmatpush.bf16.msra.mxu0 0
    %837 = vmatpush.bf16.msra.mxu0 0
    %838 = vmatpush.bf16.msra.mxu0 0
    %839 = vmatpush.bf16.msra.mxu0 0
    %840 = vmatpush.bf16.msra.mxu0 0
    %841 = vmatpush.bf16.msra.mxu0 0
    %842 = vmatpush.bf16.msra.mxu0 %v800
    %843 = vmatpush.bf16.msra.mxu0 %v797
    %844 = vmatmul.bf16.gmra.mxu0 %v425
    %v845 = vpop.f32.mrf.mxu0
    %v846 = vadd.f32 %v804, %v845
    %v847 = vpop.f32.mrf.mxu0
    %v848 = vadd.f32 %v804, %v847
    %849 = vdwg.mxu0
    %v850 = vadd.f32 %v763, %v818
    %v851 = vadd.f32 %v765, %v820
    %v852 = vsub.f32 0.0, %v850
    %v853 = vsub.f32 0.0, %v851
    %v854 = vmul.f32 %v852, 1.442695
    %v855 = vpow.pop %v854
    %v856 = vmul.f32 %v853, 1.442695
    %v857 = vpow.pop %v856
    %v858 = vadd.f32 %v855, 1.0
    %v859 = vadd.f32 %v857, 1.0
    %v860 = vrcp.pop %v858
    %v861 = vmul.f32 %v858, %v860
    %v862 = vsub.f32 1.0, %v861
    %v863 = vmul.f32 %v860, %v862
    %v864 = vadd.f32 %v860, %v863
    %vm865 = vweird.f32 %v858
    %vm866 = vweird.f32 %v860
    %vm867 = vmor %vm865, %vm866
    %v868 = vsel %vm867, %v860, %v864
    %v869 = vand.u32 2147483647, %v858
    %vm870 = vcmp.eq.f32.partialorder %v869, 8.507059e+37
    %v871 = vand.u32 %v858, 2147483648
    %v872 = vor.u32 1.1754944e-38, %v871
    %v873 = vsel %vm870, %v872, %v868
    %v874 = vmul.f32 1.0, %v873
    %v875 = vrcp.pop %v859
    %v876 = vmul.f32 %v859, %v875
    %v877 = vsub.f32 1.0, %v876
    %v878 = vmul.f32 %v875, %v877
    %v879 = vadd.f32 %v875, %v878
    %vm880 = vweird.f32 %v859
    %vm881 = vweird.f32 %v875
    %vm882 = vmor %vm880, %vm881
    %v883 = vsel %vm882, %v875, %v879
    %v884 = vand.u32 2147483647, %v859
    %vm885 = vcmp.eq.f32.partialorder %v884, 8.507059e+37
    %v886 = vand.u32 %v859, 2147483648
    %v887 = vor.u32 1.1754944e-38, %v886
    %v888 = vsel %vm885, %v887, %v883
    %v889 = vmul.f32 1.0, %v888
    %v890 = vadd.f32 %v777, %v832
    %v891 = vadd.f32 %v779, %v834
    %v892 = vsub.f32 0.0, %v890
    %v893 = vsub.f32 0.0, %v891
    %v894 = vmul.f32 %v892, 1.442695
    %v895 = vpow.pop %v894
    %v896 = vmul.f32 %v893, 1.442695
    %v897 = vpow.pop %v896
    %v898 = vadd.f32 %v895, 1.0
    %v899 = vadd.f32 %v897, 1.0
    %v900 = vrcp.pop %v898
    %v901 = vmul.f32 %v898, %v900
    %v902 = vsub.f32 1.0, %v901
    %v903 = vmul.f32 %v900, %v902
    %v904 = vadd.f32 %v900, %v903
    %vm905 = vweird.f32 %v898
    %vm906 = vweird.f32 %v900
    %vm907 = vmor %vm905, %vm906
    %v908 = vsel %vm907, %v900, %v904
    %v909 = vand.u32 2147483647, %v898
    %vm910 = vcmp.eq.f32.partialorder %v909, 8.507059e+37
    %v911 = vand.u32 %v898, 2147483648
    %v912 = vor.u32 1.1754944e-38, %v911
    %v913 = vsel %vm910, %v912, %v908
    %v914 = vmul.f32 1.0, %v913
    %v915 = vrcp.pop %v899
    %v916 = vmul.f32 %v899, %v915
    %v917 = vsub.f32 1.0, %v916
    %v918 = vmul.f32 %v915, %v917
    %v919 = vadd.f32 %v915, %v918
    %vm920 = vweird.f32 %v899
    %vm921 = vweird.f32 %v915
    %vm922 = vmor %vm920, %vm921
    %v923 = vsel %vm922, %v915, %v919
    %v924 = vand.u32 2147483647, %v899
    %vm925 = vcmp.eq.f32.partialorder %v924, 8.507059e+37
    %v926 = vand.u32 %v899, 2147483648
    %v927 = vor.u32 1.1754944e-38, %v926
    %v928 = vsel %vm925, %v927, %v923
    %v929 = vmul.f32 1.0, %v928
    %v930 = vmul.f32 %v874, %v846
    %v931 = vmul.f32 %v889, %v848
    %v932 = vadd.f32 %v791, %v930
    %v933 = vadd.f32 %v793, %v931
    %v934 = vtanh.pop %v932
    %v935 = vtanh.pop %v933
    %v936 = vsub.f32 1.0, %v914
    %v937 = vsub.f32 1.0, %v929
    %v938 = vmul.f32 %v936, %v934
    %v939 = vmul.f32 %v937, %v935
    %v940 = vmul.f32 %v914, %v302
    %v941 = vmul.f32 %v929, %v303
    %v942 = vadd.f32 %v938, %v940
    %v943 = vadd.f32 %v939, %v941
    %v944 = vmax.f32 %v942, 0.0
    %v945 = vmax.f32 %v943, 0.0
    %v946 = vld [vmem:[%s9 + $0xa0] sm:$0xff]
    %v947 = vld [vmem:[%s9 + $0xa8] sm:$0xff]
    %v948 = vld [vmem:[%s9 + $0xb0] sm:$0xff]
    %v949 = vld [vmem:[%s9 + $0xb8] sm:$0xff]
    %v950 = vld [vmem:[%s9 + $0xc0] sm:$0xff]
    %v951 = vld [vmem:[%s9 + $0xc8] sm:$0xff]
    %v952 = vld [vmem:[%s9 + $0xd0] sm:$0xff]
    %v953 = vld [vmem:[%s9 + $0xd8] sm:$0xff]
    %v954 = vld [vmem:[%s9 + $0xe0] sm:$0x1]
    %v955 = vld [vmem:[#allocation5 + $0xf0] sm:$0xff]
    %v956 = vld [vmem:[#allocation5 + $0xf8] sm:$0xff]
    %v957 = vld [vmem:[#allocation5 + $0x100] sm:$0xff]
    %v958 = vld [vmem:[#allocation5 + $0x108] sm:$0xff]
    %v959 = vld [vmem:[#allocation5 + $0x110] sm:$0xff]
    %v960 = vld [vmem:[#allocation5 + $0x118] sm:$0xff]
    %v961 = vld [vmem:[#allocation5 + $0x120] sm:$0xff]
    %v962 = vld [vmem:[#allocation5 + $0x128] sm:$0xff]
    %v963 = vld [vmem:[#allocation5 + $0x130] sm:$0xff]
    %v964 = vld [vmem:[#allocation5 + $0x138] sm:$0xff]
    %v965 = vld [vmem:[#allocation5 + $0x140] sm:$0xff]
    %v966 = vld [vmem:[#allocation5 + $0x148] sm:$0xff]
    %v967 = vld [vmem:[#allocation5 + $0x150] sm:$0xff]
    %v968 = vld [vmem:[#allocation5 + $0x158] sm:$0xff]
    %v969 = vld [vmem:[#allocation5 + $0x160] sm:$0xff]
    %v970 = vld [vmem:[#allocation5 + $0x168] sm:$0xff]
    %v971 = vld [vmem:[#allocation5 + $0x170] sm:$0xff]
    %v972 = vld [vmem:[#allocation5 + $0x178] sm:$0xff]
    %v973 = vld [vmem:[#allocation5 + $0x180] sm:$0xff]
    %v974 = vld [vmem:[#allocation5 + $0x188] sm:$0xff]
    %v975 = vld [vmem:[#allocation5 + $0x190] sm:$0xff]
    %v976 = vld [vmem:[#allocation5 + $0x198] sm:$0xff]
    %v977 = vld [vmem:[#allocation5 + $0x1a0] sm:$0xff]
    %v978 = vld [vmem:[#allocation5 + $0x1a8] sm:$0xff]
    %s979 = scalar_lea.vmem [#allocation5], 432
    %v980 = vld [vmem:[%s979] ss:$8 sm:$0x7]
    %s981 = scalar_lea.vmem [#allocation5], 456
    %v982 = vld [vmem:[%s981] ss:$8 sm:$0x7]
    %v983 = vpack.c.bf16 %v945, %v944
    %v984 = vpack.c.bf16 %v947, %v946
    %v985 = vpack.c.bf16 %v949, %v948
    %v987 = vsel %vm127, %v983, 0
    %989 = vmatpush.bf16.msra.mxu0 0
    %990 = vmatpush.bf16.msra.mxu0 0
    %991 = vmatpush.bf16.msra.mxu0 0
    %992 = vmatpush.bf16.msra.mxu0 0
    %993 = vmatpush.bf16.msra.mxu0 0
    %994 = vmatpush.bf16.msra.mxu0 0
    %995 = vmatpush.bf16.msra.mxu0 %v985
    %996 = vmatpush.bf16.msra.mxu0 %v984
    %997 = vmatmul.bf16.gmra.mxu0 %v987
    %v998 = vpop.f32.mrf.mxu0
    %v999 = vadd.f32 0.0, %v998
    %v1000 = vpop.f32.mrf.mxu0
    %v1001 = vadd.f32 0.0, %v1000
    %1002 = vdwg.mxu0
    %v1003 = vpack.c.bf16 %v1001, %v999
    %v1004 = vpack.c.bf16 %v951, %v950
    %v1005 = vpack.c.bf16 %v953, %v952
    %v1007 = vsel %vm127, %v1003, 0
    %1009 = vmatpush.bf16.msra.mxu0 0
    %1010 = vmatpush.bf16.msra.mxu0 0
    %1011 = vmatpush.bf16.msra.mxu0 0
    %1012 = vmatpush.bf16.msra.mxu0 0
    %1013 = vmatpush.bf16.msra.mxu0 0
    %1014 = vmatpush.bf16.msra.mxu0 0
    %1015 = vmatpush.bf16.msra.mxu0 %v1005
    %1016 = vmatpush.bf16.msra.mxu0 %v1004
    %1017 = vmatmul.bf16.gmra.mxu0 %v1007
    %v1018 = vpop.f32.mrf.mxu0
    %v1019 = vadd.f32 0.0, %v1018
    %v1020 = vpop.f32.mrf.mxu0
    %v1021 = vadd.f32 0.0, %v1020
    %1022 = vdwg.mxu0
    %v1023 = vpack.c.bf16 %v1021, %v1019
    %1025 = vrot.lane.b32.xlu0 %v1023, 127
    %v1026 = vpop.permute.xlu0 %1025
    %v1028 = vsel %vm320, %v1026, 0
    %1030 = vmatpush.bf16.msra.mxu0 0
    %1031 = vmatpush.bf16.msra.mxu0 0
    %1032 = vmatpush.bf16.msra.mxu0 0
    %1033 = vmatpush.bf16.msra.mxu0 0
    %1034 = vmatpush.bf16.msra.mxu0 0
    %1035 = vmatpush.bf16.msra.mxu0 0
    %1036 = vmatpush.bf16.msra.mxu0 0
    %1037 = vmatpush.bf16.msra.mxu0 %v1028
    %1038 = vmatmul.bf16.gmra.mxu0 %v459
    %v1039 = vpop.f32.mrf.mxu0
    %v1040 = vadd.f32 0.0, %v1039
    %v1041 = vpop.f32.mrf.mxu0
    %v1042 = vadd.f32 0.0, %v1041
    %1043 = vmatmul.bf16.gmra.mxu0 %v462
    %v1044 = vpop.f32.mrf.mxu0
    %v1045 = vadd.f32 0.0, %v1044
    %v1046 = vpop.f32.mrf.mxu0
    %1047 = vdwg.mxu0
    %v1049 = vsel %vm320, %v1023, 0
    %1051 = vmatpush.bf16.msra.mxu0 0
    %1052 = vmatpush.bf16.msra.mxu0 0
    %1053 = vmatpush.bf16.msra.mxu0 0
    %1054 = vmatpush.bf16.msra.mxu0 0
    %1055 = vmatpush.bf16.msra.mxu0 0
    %1056 = vmatpush.bf16.msra.mxu0 0
    %1057 = vmatpush.bf16.msra.mxu0 0
    %1058 = vmatpush.bf16.msra.mxu0 %v1049
    %1059 = vmatmul.bf16.gmra.mxu0 %v315
    %v1060 = vpop.f32.mrf.mxu0
    %v1061 = vadd.f32 %v1040, %v1060
    %v1062 = vpop.f32.mrf.mxu0
    %v1063 = vadd.f32 %v1042, %v1062
    %1064 = vmatmul.bf16.gmra.mxu0 %v318
    %v1065 = vpop.f32.mrf.mxu0
    %v1066 = vadd.f32 %v1045, %v1065
    %v1067 = vpop.f32.mrf.mxu0
    %1068 = vdwg.mxu0
    %vm1069 = vcmp.gt.f32.partialorder %v1061, 0.0
    %vm1070 = vcmp.gt.f32.partialorder %v1063, 0.0
    %vm1071 = vcmp.gt.f32.partialorder %v1066, 0.0
    %v1072 = vmul.f32 %v1061, 0.01
    %v1073 = vmul.f32 %v1063, 0.01
    %v1074 = vmul.f32 %v1066, 0.01
    %v1075 = vsel %vm1069, %v1061, %v1072
    %v1076 = vsel %vm1070, %v1063, %v1073
    %v1077 = vsel %vm1071, %v1066, %v1074
    %v1078 = vsel %vm320, %v1003, 0
    %1080 = vmatpush.bf16.msra.mxu0 0
    %1081 = vmatpush.bf16.msra.mxu0 0
    %1082 = vmatpush.bf16.msra.mxu0 0
    %1083 = vmatpush.bf16.msra.mxu0 0
    %1084 = vmatpush.bf16.msra.mxu0 0
    %1085 = vmatpush.bf16.msra.mxu0 0
    %1086 = vmatpush.bf16.msra.mxu0 0
    %1087 = vmatpush.bf16.msra.mxu0 %v1078
    %1088 = vmatmul.bf16.gmra.mxu0 %v315
    %v1089 = vpop.f32.mrf.mxu0
    %v1090 = vadd.f32 0.0, %v1089
    %v1091 = vpop.f32.mrf.mxu0
    %v1092 = vadd.f32 0.0, %v1091
    %1093 = vmatmul.bf16.gmra.mxu0 %v318
    %v1094 = vpop.f32.mrf.mxu0
    %v1095 = vadd.f32 0.0, %v1094
    %v1096 = vpop.f32.mrf.mxu0
    %1097 = vdwg.mxu0
    %1098 = vxpose.xlu0.b32.start [1/16] %v1075, 128
    %1099 = vxpose.xlu0.b32.cont [2/16] %v1076, 128
    %1100 = vxpose.xlu0.b32.cont [3/16] %v1077, 128
    %1101 = vxpose.xlu0.b32.cont [4/16] 0.0, 128
    %1102 = vxpose.xlu0.b32.cont [5/16] 0.0, 128
    %1103 = vxpose.xlu0.b32.cont [6/16] 0.0, 128
    %1104 = vxpose.xlu0.b32.cont [7/16] 0.0, 128
    %1105 = vxpose.xlu0.b32.cont [8/16] 0.0, 128
    %1106 = vxpose.xlu0.b32.cont [9/16] 0.0, 128
    %1107 = vxpose.xlu0.b32.cont [10/16] 0.0, 128
    %1108 = vxpose.xlu0.b32.cont [11/16] 0.0, 128
    %1109 = vxpose.xlu0.b32.cont [12/16] 0.0, 128
    %1110 = vxpose.xlu0.b32.cont [13/16] 0.0, 128
    %1111 = vxpose.xlu0.b32.cont [14/16] 0.0, 128
    %1112 = vxpose.xlu0.b32.cont [15/16] 0.0, 128
    %1113 = vxpose.xlu0.b32.end [16/16] 0.0, 128
    %v1114 = vpop.trf.xlu0
    %v1115 = vpop.trf.xlu0
    %v1116 = vpop.trf.xlu0
    %v1117 = vpop.trf.xlu0
    %v1118 = vpop.trf.xlu0
    %v1119 = vpop.trf.xlu0
    %v1120 = vpop.trf.xlu0
    %v1121 = vpop.trf.xlu0
    %v1122 = vpop.trf.xlu0
    %v1123 = vpop.trf.xlu0
    %v1124 = vpop.trf.xlu0
    %v1125 = vpop.trf.xlu0
    %v1126 = vpop.trf.xlu0
    %v1127 = vpop.trf.xlu0
    %v1128 = vpop.trf.xlu0
    %v1129 = vpop.trf.xlu0
    %v1130 = vperm.slane %v1114, 0
    %v1131 = vsel %vm576, %v1130, -1e+30
    %v1132 = vsel %vm577, %v1130, -1e+30
    %v1133 = vsel %vm581, %v1131, -inf
    %1134 = vmax.xlane.f32.xlu0 %v1133
    %v1135 = vpop.xlane.xlu0 %1134
    %v1136 = vsel %vm585, %v1132, -inf
    %1137 = vmax.xlane.f32.xlu0 %v1136
    %v1138 = vpop.xlane.xlu0 %1137
    %v1139 = vpack.c.bf16 %v1138, %v1135
    %v1141 = vsel %vm320, %v1139, 0
    %1143 = vmatpush.bf16.msra.mxu0 0
    %1144 = vmatpush.bf16.msra.mxu0 0
    %1145 = vmatpush.bf16.msra.mxu0 0
    %1146 = vmatpush.bf16.msra.mxu0 0
    %1147 = vmatpush.bf16.msra.mxu0 0
    %1148 = vmatpush.bf16.msra.mxu0 0
    %1149 = vmatpush.bf16.msra.mxu0 0
    %1150 = vmatpush.bf16.msra.mxu0 %v1141
    %1151 = vmatmul.bf16.gmra.mxu0 %v459
    %v1152 = vpop.f32.mrf.mxu0
    %v1153 = vadd.f32 0.0, %v1152
    %v1154 = vpop.f32.mrf.mxu0
    %v1155 = vadd.f32 0.0, %v1154
    %1156 = vmatmul.bf16.gmra.mxu0 %v462
    %v1157 = vpop.f32.mrf.mxu0
    %v1158 = vadd.f32 0.0, %v1157
    %v1159 = vpop.f32.mrf.mxu0
    %1160 = vdwg.mxu0
    %v1161 = vsub.f32 %v1075, %v1153
    %v1162 = vsub.f32 %v1076, %v1155
    %v1163 = vsub.f32 %v1077, %v1158
    %v1164 = vmul.f32 %v1161, 1.442695
    %v1165 = vpow.pop %v1164
    %v1166 = vmul.f32 %v1162, 1.442695
    %v1167 = vpow.pop %v1166
    %v1168 = vmul.f32 %v1163, 1.442695
    %v1169 = vpow.pop %v1168
    %1171 = vset.pattern.permute.xlu0 0
    %1172 = vperm.xlu0 %1171, %v1165
    %v1173 = vpop.permute.xlu0 %1172
    %1176 = vset.pattern.permute.xlu0 0
    %1177 = vperm.xlu0 %1176, %v1167
    %v1178 = vpop.permute.xlu0 %1177
    %1181 = vset.pattern.permute.xlu0 0
    %1182 = vperm.xlu0 %1181, %v1169
    %v1183 = vpop.permute.xlu0 %1182
    %v1185 = vmul.f32 %v1090, %v1173
    %v1186 = vmul.f32 %v1092, %v1178
    %v1187 = vmul.f32 %v1095, %v1183
    %1188 = vrot.lane.b32.xlu0 %v1165, 32
    %v1189 = vpop.permute.xlu0 %1188
    %1190 = vrot.lane.b32.xlu0 %v1167, 32
    %v1191 = vpop.permute.xlu0 %1190
    %1192 = vrot.lane.b32.xlu0 %v1169, 32
    %v1193 = vpop.permute.xlu0 %1192
    %v1197 = vsel %vm127, %v1185, %v1189
    %v1198 = vsel %vm127, %v1186, %v1191
    %v1199 = vsel %vm127, %v1187, %v1193
    %v1200 = vpack.c.bf16 %v1198, %v1197
    %v1201 = vpack.c.bf16 %v1199, %v1199
    %v1203 = vsel %vm660, %v1201, 0
    %1205 = vmatpush.bf16.msra.mxu0 0
    %1206 = vmatpush.bf16.msra.mxu0 0
    %1207 = vmatpush.bf16.msra.mxu0 0
    %1208 = vmatpush.bf16.msra.mxu0 0
    %1209 = vmatpush.bf16.msra.mxu0 0
    %1210 = vmatpush.bf16.msra.mxu0 0
    %1211 = vmatpush.bf16.msra.mxu0 %v1203
    %1212 = vmatpush.bf16.msra.mxu0 %v1200
    %1213 = vmatmul.bf16.gmra.mxu0 %v658
    %v1214 = vpop.f32.mrf.mxu0
    %v1215 = vadd.f32 0.0, %v1214
    %v1216 = vpop.f32.mrf.mxu0
    %v1217 = vadd.f32 0.0, %v1216
    %1218 = vdwg.mxu0
    %v1219 = vadd.f32 %v1215, 1e-16
    %v1220 = vadd.f32 %v1217, 1e-16
    %v1221 = vrcp.pop %v1219
    %v1222 = vrcp.pop %v1220
    %1224 = vset.pattern.permute.xlu0 32
    %1225 = vperm.xlu0 %1224, %v1221
    %v1226 = vpop.permute.xlu0 %1225
    %1229 = vset.pattern.permute.xlu0 32
    %1230 = vperm.xlu0 %1229, %v1222
    %v1231 = vpop.permute.xlu0 %1230
    %v1233 = vmul.f32 %v1215, %v1226
    %v1234 = vmul.f32 %v1217, %v1231
    %v1235 = vperm.slane %v954, 0
    %v1236 = vadd.f32 %v1233, %v1235
    %v1237 = vadd.f32 %v1234, %v1235
    %vm1238 = vcmp.gt.f32.partialorder %v1236, 0.0
    %vm1239 = vcmp.gt.f32.partialorder %v1237, 0.0
    %v1240 = vmul.f32 %v1236, 1.442695
    %v1241 = vpow.pop %v1240
    %v1242 = vmul.f32 %v1237, 1.442695
    %v1243 = vpow.pop %v1242
    %v1244 = vsub.f32 %v1241, 1.0
    %v1245 = vsub.f32 %v1243, 1.0
    %v1246 = vsel %vm1238, %v1236, %v1244
    %v1247 = vsel %vm1239, %v1237, %v1245
    %v1248 = vpack.c.bf16 %v1247, %v1246
    %v1249 = vpack.c.bf16 %v958, %v955
    %v1250 = vpack.c.bf16 %v959, %v956
    %v1251 = vpack.c.bf16 %v960, %v957
    %v1252 = vpack.c.bf16 %v964, %v961
    %v1253 = vpack.c.bf16 %v965, %v962
    %v1254 = vpack.c.bf16 %v966, %v963
    %v1256 = vperm.slane %v980, 0
    %v1257 = vperm.slane %v980, 1
    %v1258 = vperm.slane %v980, 2
    %v1263 = vsel %vm127, %v1248, 0
    %1265 = vmatpush.bf16.msra.mxu0 0
    %1266 = vmatpush.bf16.msra.mxu0 0
    %1267 = vmatpush.bf16.msra.mxu0 0
    %1268 = vmatpush.bf16.msra.mxu0 0
    %1269 = vmatpush.bf16.msra.mxu0 0
    %1270 = vmatpush.bf16.msra.mxu0 0
    %1271 = vmatpush.bf16.msra.mxu0 %v1252
    %1272 = vmatpush.bf16.msra.mxu0 %v1249
    %1273 = vmatmul.bf16.gmra.mxu0 %v1263
    %v1274 = vpop.f32.mrf.mxu0
    %v1275 = vadd.f32 %v1256, %v1274
    %v1276 = vpop.f32.mrf.mxu0
    %v1277 = vadd.f32 %v1256, %v1276
    %1278 = vdwg.mxu0
    %1279 = vmatpush.bf16.msra.mxu0 0
    %1280 = vmatpush.bf16.msra.mxu0 0
    %1281 = vmatpush.bf16.msra.mxu0 0
    %1282 = vmatpush.bf16.msra.mxu0 0
    %1283 = vmatpush.bf16.msra.mxu0 0
    %1284 = vmatpush.bf16.msra.mxu0 0
    %1285 = vmatpush.bf16.msra.mxu0 %v1253
    %1286 = vmatpush.bf16.msra.mxu0 %v1250
    %1287 = vmatmul.bf16.gmra.mxu0 %v1263
    %v1288 = vpop.f32.mrf.mxu0
    %v1289 = vadd.f32 %v1257, %v1288
    %v1290 = vpop.f32.mrf.mxu0
    %v1291 = vadd.f32 %v1257, %v1290
    %1292 = vdwg.mxu0
    %1293 = vmatpush.bf16.msra.mxu0 0
    %1294 = vmatpush.bf16.msra.mxu0 0
    %1295 = vmatpush.bf16.msra.mxu0 0
    %1296 = vmatpush.bf16.msra.mxu0 0
    %1297 = vmatpush.bf16.msra.mxu0 0
    %1298 = vmatpush.bf16.msra.mxu0 0
    %1299 = vmatpush.bf16.msra.mxu0 %v1254
    %1300 = vmatpush.bf16.msra.mxu0 %v1251
    %1301 = vmatmul.bf16.gmra.mxu0 %v1263
    %v1302 = vpop.f32.mrf.mxu0
    %v1303 = vadd.f32 %v1258, %v1302
    %v1304 = vpop.f32.mrf.mxu0
    %v1305 = vadd.f32 %v1258, %v1304
    %1306 = vdwg.mxu0
    %v1307 = vpack.c.bf16 %v970, %v967
    %v1308 = vpack.c.bf16 %v971, %v968
    %v1309 = vpack.c.bf16 %v972, %v969
    %v1310 = vpack.c.bf16 %v976, %v973
    %v1311 = vpack.c.bf16 %v977, %v974
    %v1312 = vpack.c.bf16 %v978, %v975
    %v1314 = vperm.slane %v982, 0
    %v1315 = vperm.slane %v982, 1
    %v1316 = vperm.slane %v982, 2
    %1320 = vmatpush.bf16.msra.mxu0 0
    %1321 = vmatpush.bf16.msra.mxu0 0
    %1322 = vmatpush.bf16.msra.mxu0 0
    %1323 = vmatpush.bf16.msra.mxu0 0
    %1324 = vmatpush.bf16.msra.mxu0 0
    %1325 = vmatpush.bf16.msra.mxu0 0
    %1326 = vmatpush.bf16.msra.mxu0 %v1310
    %1327 = vmatpush.bf16.msra.mxu0 %v1307
    %1328 = vmatmul.bf16.gmra.mxu0 %v987
    %v1329 = vpop.f32.mrf.mxu0
    %v1330 = vadd.f32 %v1314, %v1329
    %v1331 = vpop.f32.mrf.mxu0
    %v1332 = vadd.f32 %v1314, %v1331
    %1333 = vdwg.mxu0
    %1334 = vmatpush.bf16.msra.mxu0 0
    %1335 = vmatpush.bf16.msra.mxu0 0
    %1336 = vmatpush.bf16.msra.mxu0 0
    %1337 = vmatpush.bf16.msra.mxu0 0
    %1338 = vmatpush.bf16.msra.mxu0 0
    %1339 = vmatpush.bf16.msra.mxu0 0
    %1340 = vmatpush.bf16.msra.mxu0 %v1311
    %1341 = vmatpush.bf16.msra.mxu0 %v1308
    %1342 = vmatmul.bf16.gmra.mxu0 %v987
    %v1343 = vpop.f32.mrf.mxu0
    %v1344 = vadd.f32 %v1315, %v1343
    %v1345 = vpop.f32.mrf.mxu0
    %v1346 = vadd.f32 %v1315, %v1345
    %1347 = vdwg.mxu0
    %1348 = vmatpush.bf16.msra.mxu0 0
    %1349 = vmatpush.bf16.msra.mxu0 0
    %1350 = vmatpush.bf16.msra.mxu0 0
    %1351 = vmatpush.bf16.msra.mxu0 0
    %1352 = vmatpush.bf16.msra.mxu0 0
    %1353 = vmatpush.bf16.msra.mxu0 0
    %1354 = vmatpush.bf16.msra.mxu0 %v1312
    %1355 = vmatpush.bf16.msra.mxu0 %v1309
    %1356 = vmatmul.bf16.gmra.mxu0 %v987
    %v1357 = vpop.f32.mrf.mxu0
    %v1358 = vadd.f32 %v1316, %v1357
    %v1359 = vpop.f32.mrf.mxu0
    %v1360 = vadd.f32 %v1316, %v1359
    %1361 = vdwg.mxu0
    %v1362 = vadd.f32 %v1275, %v1330
    %v1363 = vadd.f32 %v1277, %v1332
    %v1364 = vsub.f32 0.0, %v1362
    %v1365 = vsub.f32 0.0, %v1363
    %v1366 = vmul.f32 %v1364, 1.442695
    %v1367 = vpow.pop %v1366
    %v1368 = vmul.f32 %v1365, 1.442695
    %v1369 = vpow.pop %v1368
    %v1370 = vadd.f32 %v1367, 1.0
    %v1371 = vadd.f32 %v1369, 1.0
    %v1372 = vrcp.pop %v1370
    %v1373 = vmul.f32 %v1370, %v1372
    %v1374 = vsub.f32 1.0, %v1373
    %v1375 = vmul.f32 %v1372, %v1374
    %v1376 = vadd.f32 %v1372, %v1375
    %vm1377 = vweird.f32 %v1370
    %vm1378 = vweird.f32 %v1372
    %vm1379 = vmor %vm1377, %vm1378
    %v1380 = vsel %vm1379, %v1372, %v1376
    %v1381 = vand.u32 2147483647, %v1370
    %vm1382 = vcmp.eq.f32.partialorder %v1381, 8.507059e+37
    %v1383 = vand.u32 %v1370, 2147483648
    %v1384 = vor.u32 1.1754944e-38, %v1383
    %v1385 = vsel %vm1382, %v1384, %v1380
    %v1386 = vmul.f32 1.0, %v1385
    %v1387 = vrcp.pop %v1371
    %v1388 = vmul.f32 %v1371, %v1387
    %v1389 = vsub.f32 1.0, %v1388
    %v1390 = vmul.f32 %v1387, %v1389
    %v1391 = vadd.f32 %v1387, %v1390
    %vm1392 = vweird.f32 %v1371
    %vm1393 = vweird.f32 %v1387
    %vm1394 = vmor %vm1392, %vm1393
    %v1395 = vsel %vm1394, %v1387, %v1391
    %v1396 = vand.u32 2147483647, %v1371
    %vm1397 = vcmp.eq.f32.partialorder %v1396, 8.507059e+37
    %v1398 = vand.u32 %v1371, 2147483648
    %v1399 = vor.u32 1.1754944e-38, %v1398
    %v1400 = vsel %vm1397, %v1399, %v1395
    %v1401 = vmul.f32 1.0, %v1400
    %v1402 = vadd.f32 %v1289, %v1344
    %v1403 = vadd.f32 %v1291, %v1346
    %v1404 = vsub.f32 0.0, %v1402
    %v1405 = vsub.f32 0.0, %v1403
    %v1406 = vmul.f32 %v1404, 1.442695
    %v1407 = vpow.pop %v1406
    %v1408 = vmul.f32 %v1405, 1.442695
    %v1409 = vpow.pop %v1408
    %v1410 = vadd.f32 %v1407, 1.0
    %v1411 = vadd.f32 %v1409, 1.0
    %v1412 = vrcp.pop %v1410
    %v1413 = vmul.f32 %v1410, %v1412
    %v1414 = vsub.f32 1.0, %v1413
    %v1415 = vmul.f32 %v1412, %v1414
    %v1416 = vadd.f32 %v1412, %v1415
    %vm1417 = vweird.f32 %v1410
    %vm1418 = vweird.f32 %v1412
    %vm1419 = vmor %vm1417, %vm1418
    %v1420 = vsel %vm1419, %v1412, %v1416
    %v1421 = vand.u32 2147483647, %v1410
    %vm1422 = vcmp.eq.f32.partialorder %v1421, 8.507059e+37
    %v1423 = vand.u32 %v1410, 2147483648
    %v1424 = vor.u32 1.1754944e-38, %v1423
    %v1425 = vsel %vm1422, %v1424, %v1420
    %v1426 = vmul.f32 1.0, %v1425
    %v1427 = vrcp.pop %v1411
    %v1428 = vmul.f32 %v1411, %v1427
    %v1429 = vsub.f32 1.0, %v1428
    %v1430 = vmul.f32 %v1427, %v1429
    %v1431 = vadd.f32 %v1427, %v1430
    %vm1432 = vweird.f32 %v1411
    %vm1433 = vweird.f32 %v1427
    %vm1434 = vmor %vm1432, %vm1433
    %v1435 = vsel %vm1434, %v1427, %v1431
    %v1436 = vand.u32 2147483647, %v1411
    %vm1437 = vcmp.eq.f32.partialorder %v1436, 8.507059e+37
    %v1438 = vand.u32 %v1411, 2147483648
    %v1439 = vor.u32 1.1754944e-38, %v1438
    %v1440 = vsel %vm1437, %v1439, %v1435
    %v1441 = vmul.f32 1.0, %v1440
    %v1442 = vmul.f32 %v1386, %v1358
    %v1443 = vmul.f32 %v1401, %v1360
    %v1444 = vadd.f32 %v1303, %v1442
    %v1445 = vadd.f32 %v1305, %v1443
    %v1446 = vtanh.pop %v1444
    %v1447 = vtanh.pop %v1445
    %v1448 = vsub.f32 1.0, %v1426
    %v1449 = vsub.f32 1.0, %v1441
    %v1450 = vmul.f32 %v1448, %v1446
    %v1451 = vmul.f32 %v1449, %v1447
    %v1452 = vmul.f32 %v1426, %v944
    %v1453 = vmul.f32 %v1441, %v945
    %v1454 = vadd.f32 %v1450, %v1452
    %v1455 = vadd.f32 %v1451, %v1453
    %v1456 = vmax.f32 %v1454, 0.0
    %v1457 = vmax.f32 %v1455, 0.0
    %v1458 = vpack.c.bf16 %v1457, %v1456
    %v1460 = vsel %vm313, %v82, 0
    %v1463 = vsel %vm320, %v1458, 0
    %1465 = vmatpush.bf16.msra.mxu0 0
    %1466 = vmatpush.bf16.msra.mxu0 0
    %1467 = vmatpush.bf16.msra.mxu0 0
    %1468 = vmatpush.bf16.msra.mxu0 0
    %1469 = vmatpush.bf16.msra.mxu0 0
    %1470 = vmatpush.bf16.msra.mxu0 0
    %1471 = vmatpush.bf16.msra.mxu0 0
    %1472 = vmatpush.bf16.msra.mxu0 %v1463
    %1473 = vmatmul.bf16.gmra.mxu0 %v1460
    %v1474 = vpop.f32.mrf.mxu0
    %v1475 = vadd.f32 0.0, %v1474
    %v1476 = vpop.f32.mrf.mxu0
    %1477 = vdwg.mxu0
    %v1478 = vmax.f32 %v1475, 0.0
    %v1479 = vld [vmem:[%s9 + $0xe8] sm:$0xff]
    %v1480 = vld [vmem:[%s9 + $0xf0] sm:$0xff]
    %v1481 = vld [vmem:[%s9 + $0xf8] sm:$0xff]
    %v1482 = vld [vmem:[%s9 + $0x100] sm:$0xff]
    %v1483 = vld [vmem:[%s9 + $0x108] sm:$0xff]
    %v1484 = vld [vmem:[%s9 + $0x110] sm:$0xff]
    %v1485 = vld [vmem:[%s9 + $0x118] sm:$0xff]
    %v1486 = vld [vmem:[%s9 + $0x120] sm:$0xff]
    %v1487 = vld [vmem:[%s9 + $0x128] sm:$0x1]
    %v1488 = vld [vmem:[#allocation5 + $0x1e0] sm:$0xff]
    %v1489 = vld [vmem:[#allocation5 + $0x1e8] sm:$0xff]
    %v1490 = vld [vmem:[#allocation5 + $0x1f0] sm:$0xff]
    %v1491 = vld [vmem:[#allocation5 + $0x1f8] sm:$0xff]
    %v1492 = vld [vmem:[#allocation5 + $0x200] sm:$0xff]
    %v1493 = vld [vmem:[#allocation5 + $0x208] sm:$0xff]
    %v1494 = vld [vmem:[#allocation5 + $0x210] sm:$0xff]
    %v1495 = vld [vmem:[#allocation5 + $0x218] sm:$0xff]
    %v1496 = vld [vmem:[#allocation5 + $0x220] sm:$0xff]
    %v1497 = vld [vmem:[#allocation5 + $0x228] sm:$0xff]
    %v1498 = vld [vmem:[#allocation5 + $0x230] sm:$0xff]
    %v1499 = vld [vmem:[#allocation5 + $0x238] sm:$0xff]
    %v1500 = vld [vmem:[#allocation5 + $0x240] sm:$0xff]
    %v1501 = vld [vmem:[#allocation5 + $0x248] sm:$0xff]
    %v1502 = vld [vmem:[#allocation5 + $0x250] sm:$0xff]
    %v1503 = vld [vmem:[#allocation5 + $0x258] sm:$0xff]
    %v1504 = vld [vmem:[#allocation5 + $0x260] sm:$0xff]
    %v1505 = vld [vmem:[#allocation5 + $0x268] sm:$0xff]
    %v1506 = vld [vmem:[#allocation5 + $0x270] sm:$0xff]
    %v1507 = vld [vmem:[#allocation5 + $0x278] sm:$0xff]
    %v1508 = vld [vmem:[#allocation5 + $0x280] sm:$0xff]
    %v1509 = vld [vmem:[#allocation5 + $0x288] sm:$0xff]
    %v1510 = vld [vmem:[#allocation5 + $0x290] sm:$0xff]
    %v1511 = vld [vmem:[#allocation5 + $0x298] sm:$0xff]
    %s1512 = scalar_lea.vmem [#allocation5], 672
    %v1513 = vld [vmem:[%s1512] ss:$8 sm:$0x7]
    %s1514 = scalar_lea.vmem [#allocation5], 696
    %v1515 = vld [vmem:[%s1514] ss:$8 sm:$0x7]
    %v1516 = vpack.c.bf16 %v1480, %v1479
    %v1517 = vpack.c.bf16 %v1482, %v1481
    %v1518 = vsel %vm127, %v1458, 0
    %1520 = vmatpush.bf16.msra.mxu0 0
    %1521 = vmatpush.bf16.msra.mxu0 0
    %1522 = vmatpush.bf16.msra.mxu0 0
    %1523 = vmatpush.bf16.msra.mxu0 0
    %1524 = vmatpush.bf16.msra.mxu0 0
    %1525 = vmatpush.bf16.msra.mxu0 0
    %1526 = vmatpush.bf16.msra.mxu0 %v1517
    %1527 = vmatpush.bf16.msra.mxu0 %v1516
    %1528 = vmatmul.bf16.gmra.mxu0 %v1518
    %v1529 = vpop.f32.mrf.mxu0
    %v1530 = vadd.f32 0.0, %v1529
    %v1531 = vpop.f32.mrf.mxu0
    %v1532 = vadd.f32 0.0, %v1531
    %1533 = vdwg.mxu0
    %v1534 = vpack.c.bf16 %v1532, %v1530
    %v1535 = vpack.c.bf16 %v1484, %v1483
    %v1536 = vpack.c.bf16 %v1486, %v1485
    %v1538 = vsel %vm127, %v1534, 0
    %1540 = vmatpush.bf16.msra.mxu0 0
    %1541 = vmatpush.bf16.msra.mxu0 0
    %1542 = vmatpush.bf16.msra.mxu0 0
    %1543 = vmatpush.bf16.msra.mxu0 0
    %1544 = vmatpush.bf16.msra.mxu0 0
    %1545 = vmatpush.bf16.msra.mxu0 0
    %1546 = vmatpush.bf16.msra.mxu0 %v1536
    %1547 = vmatpush.bf16.msra.mxu0 %v1535
    %1548 = vmatmul.bf16.gmra.mxu0 %v1538
    %v1549 = vpop.f32.mrf.mxu0
    %v1550 = vadd.f32 0.0, %v1549
    %v1551 = vpop.f32.mrf.mxu0
    %v1552 = vadd.f32 0.0, %v1551
    %1553 = vdwg.mxu0
    %v1554 = vpack.c.bf16 %v1478, %v1478
    %v1556 = vsel %vm127, %v1554, 0
    %1558 = vmatpush.bf16.msra.mxu0 0
    %1559 = vmatpush.bf16.msra.mxu0 0
    %1560 = vmatpush.bf16.msra.mxu0 0
    %1561 = vmatpush.bf16.msra.mxu0 0
    %1562 = vmatpush.bf16.msra.mxu0 0
    %1563 = vmatpush.bf16.msra.mxu0 0
    %1564 = vmatpush.bf16.msra.mxu0 %v1517
    %1565 = vmatpush.bf16.msra.mxu0 %v1516
    %1566 = vmatmul.bf16.gmra.mxu0 %v1556
    %v1567 = vpop.f32.mrf.mxu0
    %v1568 = vadd.f32 0.0, %v1567
    %v1569 = vpop.f32.mrf.mxu0
    %1570 = vdwg.mxu0
    %v1571 = vpack.c.bf16 %v1568, %v1568
    %v1573 = vsel %vm127, %v1571, 0
    %1575 = vmatpush.bf16.msra.mxu0 0
    %1576 = vmatpush.bf16.msra.mxu0 0
    %1577 = vmatpush.bf16.msra.mxu0 0
    %1578 = vmatpush.bf16.msra.mxu0 0
    %1579 = vmatpush.bf16.msra.mxu0 0
    %1580 = vmatpush.bf16.msra.mxu0 0
    %1581 = vmatpush.bf16.msra.mxu0 %v1536
    %1582 = vmatpush.bf16.msra.mxu0 %v1535
    %1583 = vmatmul.bf16.gmra.mxu0 %v1573
    %v1584 = vpop.f32.mrf.mxu0
    %v1585 = vadd.f32 0.0, %v1584
    %v1586 = vpop.f32.mrf.mxu0
    %1587 = vdwg.mxu0
    %v1588 = vpack.c.bf16 %v1585, %v1585
    %v1591 = vunpack.c.l.b16 %v80
    %v1592 = vunpack.c.l.b16 %v81
    %v1593 = vpack.c.b16 %v1592, %v1591
    %1595 = vrot.lane.b32.xlu0 %v1588, 127
    %v1596 = vpop.permute.xlu0 %1595
    %vm1597 = vcmask 15360
    %v1599 = vsel %vm1597, %v1593, 0
    %vm1601 = vcmask 1040384
    %v1603 = vsel %vm1601, %v1596, 0
    %1605 = vmatpush.bf16.msra.mxu0 0
    %1606 = vmatpush.bf16.msra.mxu0 0
    %1607 = vmatpush.bf16.msra.mxu0 0
    %1608 = vmatpush.bf16.msra.mxu0 0
    %1609 = vmatpush.bf16.msra.mxu0 0
    %1610 = vmatpush.bf16.msra.mxu0 0
    %1611 = vmatpush.bf16.msra.mxu0 0
    %1612 = vmatpush.bf16.msra.mxu0 %v1603
    %1613 = vmatmul.bf16.gmra.mxu0 %v1599
    %v1614 = vpop.f32.mrf.mxu0
    %v1615 = vadd.f32 0.0, %v1614
    %v1616 = vpop.f32.mrf.mxu0
    %v1617 = vadd.f32 0.0, %v1616
    %1618 = vdwg.mxu0
    %v1619 = vadd.f32 %v1550, %v1615
    %v1620 = vadd.f32 %v1552, %v1617
    %vm1621 = vcmp.gt.f32.partialorder %v1619, 0.0
    %vm1622 = vcmp.gt.f32.partialorder %v1620, 0.0
    %v1623 = vmul.f32 %v1619, 0.01
    %v1624 = vmul.f32 %v1620, 0.01
    %v1625 = vsel %vm1621, %v1619, %v1623
    %v1626 = vsel %vm1622, %v1620, %v1624
    %1627 = vxpose.xlu0.b32.start [1/16] %v1625, 128
    %1628 = vxpose.xlu0.b32.cont [2/16] %v1626, 128
    %1629 = vxpose.xlu0.b32.cont [3/16] 0.0, 128
    %1630 = vxpose.xlu0.b32.cont [4/16] 0.0, 128
    %1631 = vxpose.xlu0.b32.cont [5/16] 0.0, 128
    %1632 = vxpose.xlu0.b32.cont [6/16] 0.0, 128
    %1633 = vxpose.xlu0.b32.cont [7/16] 0.0, 128
    %1634 = vxpose.xlu0.b32.cont [8/16] 0.0, 128
    %1635 = vxpose.xlu0.b32.cont [9/16] 0.0, 128
    %1636 = vxpose.xlu0.b32.cont [10/16] 0.0, 128
    %1637 = vxpose.xlu0.b32.cont [11/16] 0.0, 128
    %1638 = vxpose.xlu0.b32.cont [12/16] 0.0, 128
    %1639 = vxpose.xlu0.b32.cont [13/16] 0.0, 128
    %1640 = vxpose.xlu0.b32.cont [14/16] 0.0, 128
    %1641 = vxpose.xlu0.b32.cont [15/16] 0.0, 128
    %1642 = vxpose.xlu0.b32.end [16/16] 0.0, 128
    %v1643 = vpop.trf.xlu0
    %v1644 = vpop.trf.xlu0
    %v1645 = vpop.trf.xlu0
    %v1646 = vpop.trf.xlu0
    %v1647 = vpop.trf.xlu0
    %v1648 = vpop.trf.xlu0
    %v1649 = vpop.trf.xlu0
    %v1650 = vpop.trf.xlu0
    %v1651 = vpop.trf.xlu0
    %v1652 = vpop.trf.xlu0
    %v1653 = vpop.trf.xlu0
    %v1654 = vpop.trf.xlu0
    %v1655 = vpop.trf.xlu0
    %v1656 = vpop.trf.xlu0
    %v1657 = vpop.trf.xlu0
    %v1658 = vpop.trf.xlu0
    %v1659 = vunpack.c.l.bf16 %v82
    %vm1660 = vcmp.gt.f32.partialorder %v1659, 0.5
    %v1661 = vperm.slane %v1643, 0
    %v1662 = vsel %vm1660, %v1661, -1e+30
    %vm1663 = vcmask 74752
    %v1664 = vsel %vm1663, %v1662, -inf
    %1665 = vmax.xlane.f32.xlu0 %v1664
    %v1666 = vpop.xlane.xlu0 %1665
    %v1667 = vpack.c.bf16 %v1666, %v1666
    %v1669 = vsel %vm1601, %v1667, 0
    %1671 = vmatpush.bf16.msra.mxu0 0
    %1672 = vmatpush.bf16.msra.mxu0 0
    %1673 = vmatpush.bf16.msra.mxu0 0
    %1674 = vmatpush.bf16.msra.mxu0 0
    %1675 = vmatpush.bf16.msra.mxu0 0
    %1676 = vmatpush.bf16.msra.mxu0 0
    %1677 = vmatpush.bf16.msra.mxu0 0
    %1678 = vmatpush.bf16.msra.mxu0 %v1669
    %1679 = vmatmul.bf16.gmra.mxu0 %v1599
    %v1680 = vpop.f32.mrf.mxu0
    %v1681 = vadd.f32 0.0, %v1680
    %v1682 = vpop.f32.mrf.mxu0
    %v1683 = vadd.f32 0.0, %v1682
    %1684 = vdwg.mxu0
    %v1685 = vsub.f32 %v1625, %v1681
    %v1686 = vsub.f32 %v1626, %v1683
    %v1687 = vmul.f32 %v1685, 1.442695
    %v1688 = vpow.pop %v1687
    %v1689 = vmul.f32 %v1686, 1.442695
    %v1690 = vpow.pop %v1689
    %1692 = vset.pattern.permute.xlu0 0
    %1693 = vperm.xlu0 %1692, %v1688
    %v1694 = vpop.permute.xlu0 %1693
    %1697 = vset.pattern.permute.xlu0 0
    %1698 = vperm.xlu0 %1697, %v1690
    %v1699 = vpop.permute.xlu0 %1698
    %v1701 = vmul.f32 %v1530, %v1694
    %v1702 = vmul.f32 %v1532, %v1699
    %1703 = vrot.lane.b32.xlu0 %v1688, 32
    %v1704 = vpop.permute.xlu0 %1703
    %1705 = vrot.lane.b32.xlu0 %v1690, 32
    %v1706 = vpop.permute.xlu0 %1705
    %v1709 = vsel %vm127, %v1701, %v1704
    %v1710 = vsel %vm127, %v1702, %v1706
    %v1711 = vpack.c.bf16 %v1710, %v1709
    %v1713 = vsel %vm320, %v1711, 0
    %1715 = vmatpush.bf16.msra.mxu0 0
    %1716 = vmatpush.bf16.msra.mxu0 0
    %1717 = vmatpush.bf16.msra.mxu0 0
    %1718 = vmatpush.bf16.msra.mxu0 0
    %1719 = vmatpush.bf16.msra.mxu0 0
    %1720 = vmatpush.bf16.msra.mxu0 0
    %1721 = vmatpush.bf16.msra.mxu0 0
    %1722 = vmatpush.bf16.msra.mxu0 %v1713
    %1723 = vmatmul.bf16.gmra.mxu0 %v1460
    %v1724 = vpop.f32.mrf.mxu0
    %v1725 = vadd.f32 0.0, %v1724
    %v1726 = vpop.f32.mrf.mxu0
    %1727 = vdwg.mxu0
    %v1728 = vadd.f32 %v1725, 1e-16
    %v1729 = vrcp.pop %v1728
    %1731 = vset.pattern.permute.xlu0 32
    %1732 = vperm.xlu0 %1731, %v1729
    %v1733 = vpop.permute.xlu0 %1732
    %v1735 = vmul.f32 %v1725, %v1733
    %v1736 = vperm.slane %v1487, 0
    %v1737 = vadd.f32 %v1735, %v1736
    %vm1738 = vcmp.gt.f32.partialorder %v1737, 0.0
    %v1739 = vmul.f32 %v1737, 1.442695
    %v1740 = vpow.pop %v1739
    %v1741 = vsub.f32 %v1740, 1.0
    %v1742 = vsel %vm1738, %v1737, %v1741
    %v1743 = vpack.c.bf16 %v1742, %v1742
    %v1744 = vpack.c.bf16 %v1491, %v1488
    %v1745 = vpack.c.bf16 %v1492, %v1489
    %v1746 = vpack.c.bf16 %v1493, %v1490
    %v1747 = vpack.c.bf16 %v1497, %v1494
    %v1748 = vpack.c.bf16 %v1498, %v1495
    %v1749 = vpack.c.bf16 %v1499, %v1496
    %v1751 = vperm.slane %v1513, 0
    %v1752 = vperm.slane %v1513, 1
    %v1753 = vperm.slane %v1513, 2
    %v1758 = vsel %vm127, %v1743, 0
    %1760 = vmatpush.bf16.msra.mxu0 0
    %1761 = vmatpush.bf16.msra.mxu0 0
    %1762 = vmatpush.bf16.msra.mxu0 0
    %1763 = vmatpush.bf16.msra.mxu0 0
    %1764 = vmatpush.bf16.msra.mxu0 0
    %1765 = vmatpush.bf16.msra.mxu0 0
    %1766 = vmatpush.bf16.msra.mxu0 %v1747
    %1767 = vmatpush.bf16.msra.mxu0 %v1744
    %1768 = vmatmul.bf16.gmra.mxu0 %v1758
    %v1769 = vpop.f32.mrf.mxu0
    %v1770 = vadd.f32 %v1751, %v1769
    %v1771 = vpop.f32.mrf.mxu0
    %1772 = vdwg.mxu0
    %1773 = vmatpush.bf16.msra.mxu0 0
    %1774 = vmatpush.bf16.msra.mxu0 0
    %1775 = vmatpush.bf16.msra.mxu0 0
    %1776 = vmatpush.bf16.msra.mxu0 0
    %1777 = vmatpush.bf16.msra.mxu0 0
    %1778 = vmatpush.bf16.msra.mxu0 0
    %1779 = vmatpush.bf16.msra.mxu0 %v1748
    %1780 = vmatpush.bf16.msra.mxu0 %v1745
    %1781 = vmatmul.bf16.gmra.mxu0 %v1758
    %v1782 = vpop.f32.mrf.mxu0
    %v1783 = vadd.f32 %v1752, %v1782
    %v1784 = vpop.f32.mrf.mxu0
    %1785 = vdwg.mxu0
    %1786 = vmatpush.bf16.msra.mxu0 0
    %1787 = vmatpush.bf16.msra.mxu0 0
    %1788 = vmatpush.bf16.msra.mxu0 0
    %1789 = vmatpush.bf16.msra.mxu0 0
    %1790 = vmatpush.bf16.msra.mxu0 0
    %1791 = vmatpush.bf16.msra.mxu0 0
    %1792 = vmatpush.bf16.msra.mxu0 %v1749
    %1793 = vmatpush.bf16.msra.mxu0 %v1746
    %1794 = vmatmul.bf16.gmra.mxu0 %v1758
    %v1795 = vpop.f32.mrf.mxu0
    %v1796 = vadd.f32 %v1753, %v1795
    %v1797 = vpop.f32.mrf.mxu0
    %1798 = vdwg.mxu0
    %v1799 = vpack.c.bf16 %v1503, %v1500
    %v1800 = vpack.c.bf16 %v1504, %v1501
    %v1801 = vpack.c.bf16 %v1505, %v1502
    %v1802 = vpack.c.bf16 %v1509, %v1506
    %v1803 = vpack.c.bf16 %v1510, %v1507
    %v1804 = vpack.c.bf16 %v1511, %v1508
    %v1806 = vperm.slane %v1515, 0
    %v1807 = vperm.slane %v1515, 1
    %v1808 = vperm.slane %v1515, 2
    %1812 = vmatpush.bf16.msra.mxu0 0
    %1813 = vmatpush.bf16.msra.mxu0 0
    %1814 = vmatpush.bf16.msra.mxu0 0
    %1815 = vmatpush.bf16.msra.mxu0 0
    %1816 = vmatpush.bf16.msra.mxu0 0
    %1817 = vmatpush.bf16.msra.mxu0 0
    %1818 = vmatpush.bf16.msra.mxu0 %v1802
    %1819 = vmatpush.bf16.msra.mxu0 %v1799
    %1820 = vmatmul.bf16.gmra.mxu0 %v1556
    %v1821 = vpop.f32.mrf.mxu0
    %v1822 = vadd.f32 %v1806, %v1821
    %v1823 = vpop.f32.mrf.mxu0
    %1824 = vdwg.mxu0
    %1825 = vmatpush.bf16.msra.mxu0 0
    %1826 = vmatpush.bf16.msra.mxu0 0
    %1827 = vmatpush.bf16.msra.mxu0 0
    %1828 = vmatpush.bf16.msra.mxu0 0
    %1829 = vmatpush.bf16.msra.mxu0 0
    %1830 = vmatpush.bf16.msra.mxu0 0
    %1831 = vmatpush.bf16.msra.mxu0 %v1803
    %1832 = vmatpush.bf16.msra.mxu0 %v1800
    %1833 = vmatmul.bf16.gmra.mxu0 %v1556
    %v1834 = vpop.f32.mrf.mxu0
    %v1835 = vadd.f32 %v1807, %v1834
    %v1836 = vpop.f32.mrf.mxu0
    %1837 = vdwg.mxu0
    %1838 = vmatpush.bf16.msra.mxu0 0
    %1839 = vmatpush.bf16.msra.mxu0 0
    %1840 = vmatpush.bf16.msra.mxu0 0
    %1841 = vmatpush.bf16.msra.mxu0 0
    %1842 = vmatpush.bf16.msra.mxu0 0
    %1843 = vmatpush.bf16.msra.mxu0 0
    %1844 = vmatpush.bf16.msra.mxu0 %v1804
    %1845 = vmatpush.bf16.msra.mxu0 %v1801
    %1846 = vmatmul.bf16.gmra.mxu0 %v1556
    %v1847 = vpop.f32.mrf.mxu0
    %v1848 = vadd.f32 %v1808, %v1847
    %v1849 = vpop.f32.mrf.mxu0
    %1850 = vdwg.mxu0
    %v1851 = vadd.f32 %v1770, %v1822
    %v1852 = vsub.f32 0.0, %v1851
    %v1853 = vmul.f32 %v1852, 1.442695
    %v1854 = vpow.pop %v1853
    %v1855 = vadd.f32 %v1854, 1.0
    %v1856 = vrcp.pop %v1855
    %v1857 = vmul.f32 %v1855, %v1856
    %v1858 = vsub.f32 1.0, %v1857
    %v1859 = vmul.f32 %v1856, %v1858
    %v1860 = vadd.f32 %v1856, %v1859
    %vm1861 = vweird.f32 %v1855
    %vm1862 = vweird.f32 %v1856
    %vm1863 = vmor %vm1861, %vm1862
    %v1864 = vsel %vm1863, %v1856, %v1860
    %v1865 = vand.u32 2147483647, %v1855
    %vm1866 = vcmp.eq.f32.partialorder %v1865, 8.507059e+37
    %v1867 = vand.u32 %v1855, 2147483648
    %v1868 = vor.u32 1.1754944e-38, %v1867
    %v1869 = vsel %vm1866, %v1868, %v1864
    %v1870 = vmul.f32 1.0, %v1869
    %v1871 = vadd.f32 %v1783, %v1835
    %v1872 = vsub.f32 0.0, %v1871
    %v1873 = vmul.f32 %v1872, 1.442695
    %v1874 = vpow.pop %v1873
    %v1875 = vadd.f32 %v1874, 1.0
    %v1876 = vrcp.pop %v1875
    %v1877 = vmul.f32 %v1875, %v1876
    %v1878 = vsub.f32 1.0, %v1877
    %v1879 = vmul.f32 %v1876, %v1878
    %v1880 = vadd.f32 %v1876, %v1879
    %vm1881 = vweird.f32 %v1875
    %vm1882 = vweird.f32 %v1876
    %vm1883 = vmor %vm1881, %vm1882
    %v1884 = vsel %vm1883, %v1876, %v1880
    %v1885 = vand.u32 2147483647, %v1875
    %vm1886 = vcmp.eq.f32.partialorder %v1885, 8.507059e+37
    %v1887 = vand.u32 %v1875, 2147483648
    %v1888 = vor.u32 1.1754944e-38, %v1887
    %v1889 = vsel %vm1886, %v1888, %v1884
    %v1890 = vmul.f32 1.0, %v1889
    %v1891 = vmul.f32 %v1870, %v1848
    %v1892 = vadd.f32 %v1796, %v1891
    %v1893 = vtanh.pop %v1892
    %v1894 = vsub.f32 1.0, %v1890
    %v1895 = vmul.f32 %v1894, %v1893
    %v1896 = vmul.f32 %v1890, %v1478
    %v1897 = vadd.f32 %v1895, %v1896
    %v1898 = vmax.f32 %v1897, 0.0
    %v1899 = vpack.c.bf16 %v1898, %v1898
    %v1901 = vsel %vm127, %v1899, 0
    %1903 = vmatpush.bf16.msra.mxu0 0
    %1904 = vmatpush.bf16.msra.mxu0 0
    %1905 = vmatpush.bf16.msra.mxu0 0
    %1906 = vmatpush.bf16.msra.mxu0 0
    %1907 = vmatpush.bf16.msra.mxu0 0
    %1908 = vmatpush.bf16.msra.mxu0 0
    %1909 = vmatpush.bf16.msra.mxu0 %v1517
    %1910 = vmatpush.bf16.msra.mxu0 %v1516
    %1911 = vmatmul.bf16.gmra.mxu0 %v1901
    %v1912 = vpop.f32.mrf.mxu0
    %v1913 = vadd.f32 0.0, %v1912
    %v1914 = vpop.f32.mrf.mxu0
    %1915 = vdwg.mxu0
    %v1916 = vpack.c.bf16 %v1913, %v1913
    %v1918 = vsel %vm127, %v1916, 0
    %1920 = vmatpush.bf16.msra.mxu0 0
    %1921 = vmatpush.bf16.msra.mxu0 0
    %1922 = vmatpush.bf16.msra.mxu0 0
    %1923 = vmatpush.bf16.msra.mxu0 0
    %1924 = vmatpush.bf16.msra.mxu0 0
    %1925 = vmatpush.bf16.msra.mxu0 0
    %1926 = vmatpush.bf16.msra.mxu0 %v1536
    %1927 = vmatpush.bf16.msra.mxu0 %v1535
    %1928 = vmatmul.bf16.gmra.mxu0 %v1918
    %v1929 = vpop.f32.mrf.mxu0
    %v1930 = vadd.f32 0.0, %v1929
    %v1931 = vpop.f32.mrf.mxu0
    %1932 = vdwg.mxu0
    %v1933 = vpack.c.bf16 %v1930, %v1930
    %1935 = vrot.lane.b32.xlu0 %v1933, 127
    %v1936 = vpop.permute.xlu0 %1935
    %v1938 = vsel %vm1601, %v1936, 0
    %1940 = vmatpush.bf16.msra.mxu0 0
    %1941 = vmatpush.bf16.msra.mxu0 0
    %1942 = vmatpush.bf16.msra.mxu0 0
    %1943 = vmatpush.bf16.msra.mxu0 0
    %1944 = vmatpush.bf16.msra.mxu0 0
    %1945 = vmatpush.bf16.msra.mxu0 0
    %1946 = vmatpush.bf16.msra.mxu0 0
    %1947 = vmatpush.bf16.msra.mxu0 %v1938
    %1948 = vmatmul.bf16.gmra.mxu0 %v1599
    %v1949 = vpop.f32.mrf.mxu0
    %v1950 = vadd.f32 0.0, %v1949
    %v1951 = vpop.f32.mrf.mxu0
    %v1952 = vadd.f32 0.0, %v1951
    %1953 = vdwg.mxu0
    %v1954 = vadd.f32 %v1550, %v1950
    %v1955 = vadd.f32 %v1552, %v1952
    %vm1956 = vcmp.gt.f32.partialorder %v1954, 0.0
    %vm1957 = vcmp.gt.f32.partialorder %v1955, 0.0
    %v1958 = vmul.f32 %v1954, 0.01
    %v1959 = vmul.f32 %v1955, 0.01
    %v1960 = vsel %vm1956, %v1954, %v1958
    %v1961 = vsel %vm1957, %v1955, %v1959
    %1962 = vxpose.xlu0.b32.start [1/16] %v1960, 128
    %1963 = vxpose.xlu0.b32.cont [2/16] %v1961, 128
    %1964 = vxpose.xlu0.b32.cont [3/16] 0.0, 128
    %1965 = vxpose.xlu0.b32.cont [4/16] 0.0, 128
    %1966 = vxpose.xlu0.b32.cont [5/16] 0.0, 128
    %1967 = vxpose.xlu0.b32.cont [6/16] 0.0, 128
    %1968 = vxpose.xlu0.b32.cont [7/16] 0.0, 128
    %1969 = vxpose.xlu0.b32.cont [8/16] 0.0, 128
    %1970 = vxpose.xlu0.b32.cont [9/16] 0.0, 128
    %1971 = vxpose.xlu0.b32.cont [10/16] 0.0, 128
    %1972 = vxpose.xlu0.b32.cont [11/16] 0.0, 128
    %1973 = vxpose.xlu0.b32.cont [12/16] 0.0, 128
    %1974 = vxpose.xlu0.b32.cont [13/16] 0.0, 128
    %1975 = vxpose.xlu0.b32.cont [14/16] 0.0, 128
    %1976 = vxpose.xlu0.b32.cont [15/16] 0.0, 128
    %1977 = vxpose.xlu0.b32.end [16/16] 0.0, 128
    %v1978 = vpop.trf.xlu0
    %v1979 = vpop.trf.xlu0
    %v1980 = vpop.trf.xlu0
    %v1981 = vpop.trf.xlu0
    %v1982 = vpop.trf.xlu0
    %v1983 = vpop.trf.xlu0
    %v1984 = vpop.trf.xlu0
    %v1985 = vpop.trf.xlu0
    %v1986 = vpop.trf.xlu0
    %v1987 = vpop.trf.xlu0
    %v1988 = vpop.trf.xlu0
    %v1989 = vpop.trf.xlu0
    %v1990 = vpop.trf.xlu0
    %v1991 = vpop.trf.xlu0
    %v1992 = vpop.trf.xlu0
    %v1993 = vpop.trf.xlu0
    %v1994 = vperm.slane %v1978, 0
    %v1995 = vsel %vm1660, %v1994, -1e+30
    %v1996 = vsel %vm1663, %v1995, -inf
    %1997 = vmax.xlane.f32.xlu0 %v1996
    %v1998 = vpop.xlane.xlu0 %1997
    %v1999 = vpack.c.bf16 %v1998, %v1998
    %v2001 = vsel %vm1601, %v1999, 0
    %2003 = vmatpush.bf16.msra.mxu0 0
    %2004 = vmatpush.bf16.msra.mxu0 0
    %2005 = vmatpush.bf16.msra.mxu0 0
    %2006 = vmatpush.bf16.msra.mxu0 0
    %2007 = vmatpush.bf16.msra.mxu0 0
    %2008 = vmatpush.bf16.msra.mxu0 0
    %2009 = vmatpush.bf16.msra.mxu0 0
    %2010 = vmatpush.bf16.msra.mxu0 %v2001
    %2011 = vmatmul.bf16.gmra.mxu0 %v1599
    %v2012 = vpop.f32.mrf.mxu0
    %v2013 = vadd.f32 0.0, %v2012
    %v2014 = vpop.f32.mrf.mxu0
    %v2015 = vadd.f32 0.0, %v2014
    %2016 = vdwg.mxu0
    %v2017 = vsub.f32 %v1960, %v2013
    %v2018 = vsub.f32 %v1961, %v2015
    %v2019 = vmul.f32 %v2017, 1.442695
    %v2020 = vpow.pop %v2019
    %v2021 = vmul.f32 %v2018, 1.442695
    %v2022 = vpow.pop %v2021
    %2024 = vset.pattern.permute.xlu0 0
    %2025 = vperm.xlu0 %2024, %v2020
    %v2026 = vpop.permute.xlu0 %2025
    %2029 = vset.pattern.permute.xlu0 0
    %2030 = vperm.xlu0 %2029, %v2022
    %v2031 = vpop.permute.xlu0 %2030
    %v2033 = vmul.f32 %v1530, %v2026
    %v2034 = vmul.f32 %v1532, %v2031
    %2035 = vrot.lane.b32.xlu0 %v2020, 32
    %v2036 = vpop.permute.xlu0 %2035
    %2037 = vrot.lane.b32.xlu0 %v2022, 32
    %v2038 = vpop.permute.xlu0 %2037
    %v2041 = vsel %vm127, %v2033, %v2036
    %v2042 = vsel %vm127, %v2034, %v2038
    %v2043 = vpack.c.bf16 %v2042, %v2041
    %v2045 = vsel %vm320, %v2043, 0
    %2047 = vmatpush.bf16.msra.mxu0 0
    %2048 = vmatpush.bf16.msra.mxu0 0
    %2049 = vmatpush.bf16.msra.mxu0 0
    %2050 = vmatpush.bf16.msra.mxu0 0
    %2051 = vmatpush.bf16.msra.mxu0 0
    %2052 = vmatpush.bf16.msra.mxu0 0
    %2053 = vmatpush.bf16.msra.mxu0 0
    %2054 = vmatpush.bf16.msra.mxu0 %v2045
    %2055 = vmatmul.bf16.gmra.mxu0 %v1460
    %v2056 = vpop.f32.mrf.mxu0
    %v2057 = vadd.f32 0.0, %v2056
    %v2058 = vpop.f32.mrf.mxu0
    %2059 = vdwg.mxu0
    %v2060 = vadd.f32 %v2057, 1e-16
    %v2061 = vrcp.pop %v2060
    %2063 = vset.pattern.permute.xlu0 32
    %2064 = vperm.xlu0 %2063, %v2061
    %v2065 = vpop.permute.xlu0 %2064
    %v2067 = vmul.f32 %v2057, %v2065
    %v2068 = vadd.f32 %v2067, %v1736
    %vm2069 = vcmp.gt.f32.partialorder %v2068, 0.0
    %v2070 = vmul.f32 %v2068, 1.442695
    %v2071 = vpow.pop %v2070
    %v2072 = vsub.f32 %v2071, 1.0
    %v2073 = vsel %vm2069, %v2068, %v2072
    %v2074 = vpack.c.bf16 %v2073, %v2073
    %v2076 = vsel %vm127, %v2074, 0
    %2078 = vmatpush.bf16.msra.mxu0 0
    %2079 = vmatpush.bf16.msra.mxu0 0
    %2080 = vmatpush.bf16.msra.mxu0 0
    %2081 = vmatpush.bf16.msra.mxu0 0
    %2082 = vmatpush.bf16.msra.mxu0 0
    %2083 = vmatpush.bf16.msra.mxu0 0
    %2084 = vmatpush.bf16.msra.mxu0 %v1747
    %2085 = vmatpush.bf16.msra.mxu0 %v1744
    %2086 = vmatmul.bf16.gmra.mxu0 %v2076
    %v2087 = vpop.f32.mrf.mxu0
    %v2088 = vadd.f32 %v1751, %v2087
    %v2089 = vpop.f32.mrf.mxu0
    %2090 = vdwg.mxu0
    %2091 = vmatpush.bf16.msra.mxu0 0
    %2092 = vmatpush.bf16.msra.mxu0 0
    %2093 = vmatpush.bf16.msra.mxu0 0
    %2094 = vmatpush.bf16.msra.mxu0 0
    %2095 = vmatpush.bf16.msra.mxu0 0
    %2096 = vmatpush.bf16.msra.mxu0 0
    %2097 = vmatpush.bf16.msra.mxu0 %v1748
    %2098 = vmatpush.bf16.msra.mxu0 %v1745
    %2099 = vmatmul.bf16.gmra.mxu0 %v2076
    %v2100 = vpop.f32.mrf.mxu0
    %v2101 = vadd.f32 %v1752, %v2100
    %v2102 = vpop.f32.mrf.mxu0
    %2103 = vdwg.mxu0
    %2104 = vmatpush.bf16.msra.mxu0 0
    %2105 = vmatpush.bf16.msra.mxu0 0
    %2106 = vmatpush.bf16.msra.mxu0 0
    %2107 = vmatpush.bf16.msra.mxu0 0
    %2108 = vmatpush.bf16.msra.mxu0 0
    %2109 = vmatpush.bf16.msra.mxu0 0
    %2110 = vmatpush.bf16.msra.mxu0 %v1749
    %2111 = vmatpush.bf16.msra.mxu0 %v1746
    %2112 = vmatmul.bf16.gmra.mxu0 %v2076
    %v2113 = vpop.f32.mrf.mxu0
    %v2114 = vadd.f32 %v1753, %v2113
    %v2115 = vpop.f32.mrf.mxu0
    %2116 = vdwg.mxu0
    %2117 = vmatpush.bf16.msra.mxu0 0
    %2118 = vmatpush.bf16.msra.mxu0 0
    %2119 = vmatpush.bf16.msra.mxu0 0
    %2120 = vmatpush.bf16.msra.mxu0 0
    %2121 = vmatpush.bf16.msra.mxu0 0
    %2122 = vmatpush.bf16.msra.mxu0 0
    %2123 = vmatpush.bf16.msra.mxu0 %v1802
    %2124 = vmatpush.bf16.msra.mxu0 %v1799
    %2125 = vmatmul.bf16.gmra.mxu0 %v1901
    %v2126 = vpop.f32.mrf.mxu0
    %v2127 = vadd.f32 %v1806, %v2126
    %v2128 = vpop.f32.mrf.mxu0
    %2129 = vdwg.mxu0
    %2130 = vmatpush.bf16.msra.mxu0 0
    %2131 = vmatpush.bf16.msra.mxu0 0
    %2132 = vmatpush.bf16.msra.mxu0 0
    %2133 = vmatpush.bf16.msra.mxu0 0
    %2134 = vmatpush.bf16.msra.mxu0 0
    %2135 = vmatpush.bf16.msra.mxu0 0
    %2136 = vmatpush.bf16.msra.mxu0 %v1803
    %2137 = vmatpush.bf16.msra.mxu0 %v1800
    %2138 = vmatmul.bf16.gmra.mxu0 %v1901
    %v2139 = vpop.f32.mrf.mxu0
    %v2140 = vadd.f32 %v1807, %v2139
    %v2141 = vpop.f32.mrf.mxu0
    %2142 = vdwg.mxu0
    %2143 = vmatpush.bf16.msra.mxu0 0
    %2144 = vmatpush.bf16.msra.mxu0 0
    %2145 = vmatpush.bf16.msra.mxu0 0
    %2146 = vmatpush.bf16.msra.mxu0 0
    %2147 = vmatpush.bf16.msra.mxu0 0
    %2148 = vmatpush.bf16.msra.mxu0 0
    %2149 = vmatpush.bf16.msra.mxu0 %v1804
    %2150 = vmatpush.bf16.msra.mxu0 %v1801
    %2151 = vmatmul.bf16.gmra.mxu0 %v1901
    %v2152 = vpop.f32.mrf.mxu0
    %v2153 = vadd.f32 %v1808, %v2152
    %v2154 = vpop.f32.mrf.mxu0
    %2155 = vdwg.mxu0
    %v2156 = vadd.f32 %v2088, %v2127
    %v2157 = vsub.f32 0.0, %v2156
    %v2158 = vmul.f32 %v2157, 1.442695
    %v2159 = vpow.pop %v2158
    %v2160 = vadd.f32 %v2159, 1.0
    %v2161 = vrcp.pop %v2160
    %v2162 = vmul.f32 %v2160, %v2161
    %v2163 = vsub.f32 1.0, %v2162
    %v2164 = vmul.f32 %v2161, %v2163
    %v2165 = vadd.f32 %v2161, %v2164
    %vm2166 = vweird.f32 %v2160
    %vm2167 = vweird.f32 %v2161
    %vm2168 = vmor %vm2166, %vm2167
    %v2169 = vsel %vm2168, %v2161, %v2165
    %v2170 = vand.u32 2147483647, %v2160
    %vm2171 = vcmp.eq.f32.partialorder %v2170, 8.507059e+37
    %v2172 = vand.u32 %v2160, 2147483648
    %v2173 = vor.u32 1.1754944e-38, %v2172
    %v2174 = vsel %vm2171, %v2173, %v2169
    %v2175 = vmul.f32 1.0, %v2174
    %v2176 = vadd.f32 %v2101, %v2140
    %v2177 = vsub.f32 0.0, %v2176
    %v2178 = vmul.f32 %v2177, 1.442695
    %v2179 = vpow.pop %v2178
    %v2180 = vadd.f32 %v2179, 1.0
    %v2181 = vrcp.pop %v2180
    %v2182 = vmul.f32 %v2180, %v2181
    %v2183 = vsub.f32 1.0, %v2182
    %v2184 = vmul.f32 %v2181, %v2183
    %v2185 = vadd.f32 %v2181, %v2184
    %vm2186 = vweird.f32 %v2180
    %vm2187 = vweird.f32 %v2181
    %vm2188 = vmor %vm2186, %vm2187
    %v2189 = vsel %vm2188, %v2181, %v2185
    %v2190 = vand.u32 2147483647, %v2180
    %vm2191 = vcmp.eq.f32.partialorder %v2190, 8.507059e+37
    %v2192 = vand.u32 %v2180, 2147483648
    %v2193 = vor.u32 1.1754944e-38, %v2192
    %v2194 = vsel %vm2191, %v2193, %v2189
    %v2195 = vmul.f32 1.0, %v2194
    %v2196 = vmul.f32 %v2175, %v2153
    %v2197 = vadd.f32 %v2114, %v2196
    %v2198 = vtanh.pop %v2197
    %v2199 = vsub.f32 1.0, %v2195
    %v2200 = vmul.f32 %v2199, %v2198
    %v2201 = vmul.f32 %v2195, %v1898
    %v2202 = vadd.f32 %v2200, %v2201
    %v2203 = vmax.f32 %v2202, 0.0
    %v2204 = vld [vmem:[%s9 + $0x130] sm:$0xff]
    %v2205 = vld [vmem:[%s9 + $0x138] sm:$0xff]
    %v2206 = vld [vmem:[%s9 + $0x140] sm:$0xff]
    %v2207 = vld [vmem:[%s9 + $0x148] sm:$0xff]
    %v2208 = vpack.c.bf16 %v2203, %v2203
    %v2209 = vpack.c.bf16 %v2205, %v2204
    %v2210 = vpack.c.bf16 %v2207, %v2206
    %v2211 = vld [vmem:[%s9 + $0x150] sm:$0x1]
    %v2212 = vperm.slane %v2211, 0
    %v2214 = vsel %vm127, %v2208, 0
    %2216 = vmatpush.bf16.msra.mxu0 0
    %2217 = vmatpush.bf16.msra.mxu0 0
    %2218 = vmatpush.bf16.msra.mxu0 0
    %2219 = vmatpush.bf16.msra.mxu0 0
    %2220 = vmatpush.bf16.msra.mxu0 0
    %2221 = vmatpush.bf16.msra.mxu0 0
    %2222 = vmatpush.bf16.msra.mxu0 %v2210
    %2223 = vmatpush.bf16.msra.mxu0 %v2209
    %2224 = vmatmul.bf16.gmra.mxu0 %v2214
    %v2225 = vpop.f32.mrf.mxu0
    %v2226 = vadd.f32 %v2212, %v2225
    %v2227 = vpop.f32.mrf.mxu0
    %2228 = vdwg.mxu0
    %v2229 = vld [vmem:[%s9 + $0x158] sm:$0xf]
    %v2230 = vpack.c.bf16 %v268, %v268
    %v2231 = vpack.c.bf16 %v2229, %v2229
    %v2232 = vld [vmem:[%s9 + $0x160] sm:$0xf]
    %v2233 = vpack.c.bf16 %v2226, %v2226
    %v2234 = vpack.c.bf16 %v2232, %v2232
    %vm2235 = vcmask 31744
    %v2237 = vsel %vm2235, %v2233, 0
    %v2240 = vsel %vm660, %v2234, 0
    %2242 = vmatpush.bf16.msra.mxu0 0
    %2243 = vmatpush.bf16.msra.mxu0 0
    %2244 = vmatpush.bf16.msra.mxu0 0
    %2245 = vmatpush.bf16.msra.mxu0 0
    %2246 = vmatpush.bf16.msra.mxu0 0
    %2247 = vmatpush.bf16.msra.mxu0 0
    %2248 = vmatpush.bf16.msra.mxu0 0
    %2249 = vmatpush.bf16.msra.mxu0 %v2240
    %2250 = vmatmul.bf16.gmra.mxu0 %v2237
    %v2251 = vpop.f32.mrf.mxu0
    %v2252 = vadd.f32 0.0, %v2251
    %v2253 = vpop.f32.mrf.mxu0
    %2254 = vdwg.mxu0
    %v2256 = vsel %vm2235, %v2230, 0
    %v2259 = vsel %vm660, %v2231, 0
    %2261 = vmatpush.bf16.msra.mxu0 0
    %2262 = vmatpush.bf16.msra.mxu0 0
    %2263 = vmatpush.bf16.msra.mxu0 0
    %2264 = vmatpush.bf16.msra.mxu0 0
    %2265 = vmatpush.bf16.msra.mxu0 0
    %2266 = vmatpush.bf16.msra.mxu0 0
    %2267 = vmatpush.bf16.msra.mxu0 0
    %2268 = vmatpush.bf16.msra.mxu0 %v2259
    %2269 = vmatmul.bf16.gmra.mxu0 %v2256
    %v2270 = vpop.f32.mrf.mxu0
    %v2271 = vadd.f32 %v2252, %v2270
    %v2272 = vpop.f32.mrf.mxu0
    %2273 = vdwg.mxu0
    %v2274 = vld [vmem:[%s9 + $0x168] sm:$0x1]
    %v2275 = vperm.slane %v2274, 0
    %v2276 = vadd.f32 %v2271, %v2275
    %vm2277 = vcmask 25600
    %2278 = vst.msk [vmem:[#allocation7] sm:$0x3] %vm2277, %v2276
    // Predicated region
    $region54: #{tpu_custom_call.1} parent=1 // pred_check
      _
    $region55: #{tpu_custom_call.1} parent=1 // pred_check_branch
      %2280 = sbr.rel (0) target = $region57
    $region56: #{tpu_custom_call.1} parent=1 // pred_region
      %2282 = vsyncadd [#allocation4], 0
      %s2284 = sshll.u32 [#allocation7], 4
      %s2285 = int_to_ptr.vmem [resolvable:$true] %s2284
      %s2286 = sshll.u32 %s11, 4
      %s2287 = int_to_ptr.hbm [resolvable:$true] %s2286
      %2289 = dma.vmem_to_hbm [thread:$0]  %s2285, 32, %s2287, [#allocation4]
    $region57: #{tpu_custom_call.1} parent=1 // pred_fallthru
      _
    // Predicated region
    $region58: #{tpu_custom_call.1} parent=1 // pred_check
      _
    $region59: #{tpu_custom_call.1} parent=1 // pred_check_branch
      %2291 = sbr.rel (0) target = $region61
    $region60: #{tpu_custom_call.1} parent=1 // pred_region
      %2293 = dma.done [#allocation4], 32
    $region61: #{tpu_custom_call.1} parent=1 // pred_fallthru
      _
    %2294 = vsyncpa [#allocation3], 1
    %2295 = vsyncpa [#allocation6], 1
    %2296 = vsyncpa [#allocation4], 1

</llo_original>
